<compile_context>
chip_gen: v5e
topology: v5e:2x2
jax: 0.10.0
libtpu: 0.0.40
codegen_flags: <defaults>
</compile_context>

<pallas_src>
import functools

import jax
import jax.numpy as jnp
from jax import lax
from jax.experimental import pallas as pl
from jax.experimental.pallas import tpu as pltpu

_EPS = 1e-5


# ------------------------------ fused kernel --------------------------------

def _gcb_fused_kernel(h, w, bp,
                      x_ref, s_ref, s4_ref,
                      sc0_ref, sh0_ref, w0r_ref,
                      spsc_ref, spsh_ref, wbig_ref,
                      csc1_ref, csh1_ref, csc2_ref, csh2_ref,
                      wc1_ref, wc2_ref,
                      ssc_ref, ssh_ref, ws_ref,
                      o_ref, zp_ref):
    # x_ref  : (1, HW, Cin)   bf16   input rows (used by scale0 AND shortcut)
    # s_ref  : (1, HW, 3bp)   bf16   upsampled scale1..3 branches, concatenated
    # s4_ref : (1, 1, bp)     f32    scale4 branch (spatially constant)
    # zp_ref : (H+2, W+2,4bp) bf16   VMEM scratch: halo-padded grouped-conv input
    # o_ref  : (1, HW, out)   f32
    hw = h * w
    c4 = 4 * bp

    xf = x_ref[0].astype(jnp.float32)                            # (HW, Cin)

    # ---- scale0: BN -> ReLU -> 1x1 with 4x-replicated weight => xb4 --------
    y0 = jnp.maximum(xf * sc0_ref[...] + sh0_ref[...], 0.0)
    xb4 = jnp.dot(y0.astype(jnp.bfloat16), w0r_ref[...],
                  preferred_element_type=jnp.float32)            # (HW, 4bp) f32

    # ---- add upsampled branches (scale4 is a per-batch constant), then
    # ---- scale_process BN -> ReLU => grouped-conv input z ------------------
    s4b = jnp.broadcast_to(s4_ref[0], (hw, bp))                  # (HW, bp)
    s_full = jnp.concatenate(
        [s_ref[0].astype(jnp.float32), s4b], axis=-1)            # (HW, 4bp)
    z = jnp.maximum((s_full + xb4) * spsc_ref[...] + spsh_ref[...], 0.0)
    zb = z.astype(jnp.bfloat16)

    # ---- grouped 3x3 conv: in-VMEM halo + bf16 im2col slab + 1 matmul ------
    zp_ref[...] = jnp.zeros_like(zp_ref)                         # keep halo zero
    zp_ref[pl.ds(1, h), pl.ds(1, w), :] = zb.reshape(h, w, c4)
    zp = zp_ref[...]                                             # (H+2, W+2, 4bp)
    taps = [zp[ky:ky + h, kx:kx + w, :].reshape(hw, c4)
            for ky in range(3) for kx in range(3)]
    slab = jnp.concatenate(taps, axis=-1)                        # (HW, 9*4bp) bf16
    scale_out = jnp.dot(slab, wbig_ref[...],
                        preferred_element_type=jnp.float32)      # (HW, 4bp) f32

    # ---- compression: BN -> ReLU -> 1x1 over cat([x_, scale_out]) (split) --
    y1 = jnp.maximum(xb4[:, :bp] * csc1_ref[...] + csh1_ref[...], 0.0)
    y2 = jnp.maximum(scale_out * csc2_ref[...] + csh2_ref[...], 0.0)
    comp = (jnp.dot(y1.astype(jnp.bfloat16), wc1_ref[...],
                    preferred_element_type=jnp.float32) +
            jnp.dot(y2.astype(jnp.bfloat16), wc2_ref[...],
                    preferred_element_type=jnp.float32))         # (HW, out)

    # ---- shortcut: BN -> ReLU -> 1x1 on x, fused final add -----------------
    ys = jnp.maximum(xf * ssc_ref[...] + ssh_ref[...], 0.0)
    short = jnp.dot(ys.astype(jnp.bfloat16), ws_ref[...],
                    preferred_element_type=jnp.float32)          # (HW, out)

    o_ref[0] = (comp + short).astype(o_ref.dtype)


# ----------------------------- Pallas wrapper --------------------------------

def gcb_fused(x_rows, s_cat, s4,
              sc0, sh0, w0rep, spsc, spsh, wbig,
              csc1, csh1, csc2, csh2, wc1, wc2, ssc, ssh, ws,
              *, h, w, bp, outplanes):
    n, hw, _ = x_rows.shape
    c4 = 4 * bp
    kernel = functools.partial(_gcb_fused_kernel, h, w, bp)

    def batch_block(shape):
        nd = len(shape)
        return pl.BlockSpec((1,) + tuple(shape[1:]),
                            lambda i, _nd=nd: (i,) + (0,) * (_nd - 1))

    def bcast_block(arr):
        nd = arr.ndim
        return pl.BlockSpec(arr.shape, lambda i, _nd=nd: (0,) * _nd)

    return pl.pallas_call(
        kernel,
        out_shape=jax.ShapeDtypeStruct((n, hw, outplanes), jnp.float32),
        grid=(n,),
        in_specs=[
            batch_block(x_rows.shape),
            batch_block(s_cat.shape),
            batch_block(s4.shape),
            bcast_block(sc0), bcast_block(sh0), bcast_block(w0rep),
            bcast_block(spsc), bcast_block(spsh), bcast_block(wbig),
            bcast_block(csc1), bcast_block(csh1),
            bcast_block(csc2), bcast_block(csh2),
            bcast_block(wc1), bcast_block(wc2),
            bcast_block(ssc), bcast_block(ssh), bcast_block(ws),
        ],
        out_specs=pl.BlockSpec((1, hw, outplanes), lambda i: (i, 0, 0)),
        scratch_shapes=[pltpu.VMEM((h + 2, w + 2, c4), jnp.bfloat16)],
        compiler_params=pltpu.CompilerParams(
            dimension_semantics=("parallel",),
            vmem_limit_bytes=48 * 1024 * 1024),
    )(x_rows, s_cat, s4, sc0, sh0, w0rep, spsc, spsh, wbig,
      csc1, csh1, csc2, csh2, wc1, wc2, ssc, ssh, ws)


# -------------------------------- JAX glue -----------------------------------

def avg_pool_nhwc(x, k, s, p):
    # PyTorch AvgPool2d default: count_include_pad=True -> divide by k*k always.
    summed = lax.reduce_window(
        x, jnp.array(0.0, x.dtype), lax.add,
        window_dimensions=(1, k, k, 1),
        window_strides=(1, s, s, 1),
        padding=((0, 0), (p, p), (p, p), (0, 0)))
    return summed / float(k * k)


def upsample_bilinear_nhwc(x, out_h, out_w):
    # F.interpolate(mode='bilinear', align_corners=False) semantics.
    n, h, w, c = x.shape
    if h == out_h and w == out_w:
        return x

    def src_coords(out_size, in_size):
        idx = (jnp.arange(out_size, dtype=jnp.float32) + 0.5) * (
            in_size / out_size) - 0.5
        idx = jnp.clip(idx, 0.0, in_size - 1)
        i0 = jnp.floor(idx).astype(jnp.int32)
        i1 = jnp.minimum(i0 + 1, in_size - 1)
        frac = idx - i0.astype(jnp.float32)
        return i0, i1, frac

    h0, h1, fh = src_coords(out_h, h)
    w0, w1, fw = src_coords(out_w, w)
    xh0 = x[:, h0]
    xh1 = x[:, h1]
    x00 = xh0[:, :, w0]
    x01 = xh0[:, :, w1]
    x10 = xh1[:, :, w0]
    x11 = xh1[:, :, w1]
    fh = fh[None, :, None, None]
    fw = fw[None, None, :, None]
    return (x00 * (1.0 - fh) * (1.0 - fw) + x01 * (1.0 - fh) * fw +
            x10 * fh * (1.0 - fw) + x11 * fh * fw)


# ------------------------------ parameters -----------------------------------

def _bn_params(key, c):
    k1, k2, k3, k4 = jax.random.split(key, 4)
    gamma = 1.0 + 0.1 * jax.random.normal(k1, (c,), jnp.float32)
    beta = 0.1 * jax.random.normal(k2, (c,), jnp.float32)
    mean = 0.1 * jax.random.normal(k3, (c,), jnp.float32)
    var = jax.random.uniform(k4, (c,), jnp.float32, 0.5, 1.5)
    scale = gamma / jnp.sqrt(var + _EPS)
    shift = beta - mean * scale
    return scale.reshape(1, c), shift.reshape(1, c)


def init_params(key, inplanes, branch_planes, outplanes):
    bp = branch_planes
    keys = jax.random.split(key, 16)
    params = {}
    # scale0..scale4: BN(inplanes) + 1x1 conv (inplanes -> bp), weight (Cin, Cout)
    for i in range(5):
        params[f"scale{i}_bn"] = _bn_params(keys[2 * i], inplanes)
        w = 0.1 * jax.random.normal(keys[2 * i + 1], (inplanes, bp), jnp.float32)
        if i == 0:
            # 4x-replicated so relu(bn(x)) @ w0rep yields x_ in every group.
            params["scale0_wrep"] = jnp.concatenate([w] * 4, axis=1).astype(
                jnp.bfloat16)
        else:
            params[f"scale{i}_w"] = w

    # scale_process: BN(4bp) + grouped 3x3 conv (4bp -> 4bp, groups=4) expressed
    # as ONE block-diagonal (9*4bp, 4bp) matmul weight.  Rows ordered
    # (tap, group, in_ch); cols (group, out_ch); zeros off the group blocks.
    params["scale_process_bn"] = _bn_params(keys[10], 4 * bp)
    w_g = 0.1 * jax.random.normal(keys[11], (3, 3, 4, bp, bp), jnp.float32)
    w_taps = w_g.reshape(9, 4, bp, bp)                           # (t, g, i, o)
    bd = jnp.einsum("tgio,gh->tgiho", w_taps, jnp.eye(4, dtype=jnp.float32))
    params["scale_process_wbig"] = bd.reshape(9 * 4 * bp, 4 * bp).astype(
        jnp.bfloat16)

    # compression: BN(5bp) + 1x1 conv (5bp -> outplanes); BN/weight split into
    # the x_ slab (bp rows) and the scale_out slab (4bp rows) so the kernel
    # never materializes the concatenation.
    c_sc, c_sh = _bn_params(keys[12], 5 * bp)
    params["compression_bn1"] = (c_sc[:, :bp], c_sh[:, :bp])
    params["compression_bn2"] = (c_sc[:, bp:], c_sh[:, bp:])
    w_comp = 0.1 * jax.random.normal(keys[13], (5 * bp, outplanes), jnp.float32)
    params["compression_w1"] = w_comp[:bp].astype(jnp.bfloat16)
    params["compression_w2"] = w_comp[bp:].astype(jnp.bfloat16)

    # shortcut: BN(inplanes) + 1x1 conv (inplanes -> outplanes)
    params["shortcut_bn"] = _bn_params(keys[14], inplanes)
    params["shortcut_w"] = (0.1 * jax.random.normal(
        keys[15], (inplanes, outplanes), jnp.float32)).astype(jnp.bfloat16)
    return params


# -------------------------------- forward ------------------------------------

@functools.partial(jax.jit, static_argnums=(2, 3, 4))
def gcb_forward(x_nchw, params, inplanes, branch_planes, outplanes):
    n, ci, h, w = x_nchw.shape
    bp = branch_planes
    hw = h * w
    x = jnp.transpose(x_nchw, (0, 2, 3, 1)).astype(jnp.float32)      # NHWC f32

    # ---- pooled branches scale1..3: tiny -> plain jnp/XLA -------------------
    def branch(feat, name):
        sc, sh = params[name + "_bn"]
        y = jnp.maximum(
            feat * sc.reshape(1, 1, 1, -1) + sh.reshape(1, 1, 1, -1), 0.0)
        return jnp.einsum("nhwc,cd->nhwd", y, params[name + "_w"])

    s1 = upsample_bilinear_nhwc(branch(avg_pool_nhwc(x, 5, 2, 2), "scale1"), h, w)
    s2 = upsample_bilinear_nhwc(branch(avg_pool_nhwc(x, 9, 4, 4), "scale2"), h, w)
    s3 = upsample_bilinear_nhwc(branch(avg_pool_nhwc(x, 17, 8, 8), "scale3"), h, w)
    s_cat = jnp.concatenate([s1, s2, s3], axis=-1).reshape(
        n, hw, 3 * bp).astype(jnp.bfloat16)

    # ---- scale4 (global pool) is spatially constant -> per-batch (N,1,bp) ---
    sc4, sh4 = params["scale4_bn"]
    p4 = jnp.mean(x, axis=(1, 2))                                    # (N, Cin)
    s4 = jnp.dot(jnp.maximum(p4 * sc4 + sh4, 0.0),
                 params["scale4_w"]).reshape(n, 1, bp)               # (N,1,bp)

    # x fed to the kernel once, as bf16 rows (it is re-upcast in-kernel).
    x_rows = x.astype(jnp.bfloat16).reshape(n, hw, ci)

    sc0, sh0 = params["scale0_bn"]
    spsc, spsh = params["scale_process_bn"]
    csc1, csh1 = params["compression_bn1"]
    csc2, csh2 = params["compression_bn2"]
    ssc, ssh = params["shortcut_bn"]

    out = gcb_fused(
        x_rows, s_cat, s4,
        sc0, sh0, params["scale0_wrep"],
        spsc, spsh, params["scale_process_wbig"],
        csc1, csh1, csc2, csh2,
        params["compression_w1"], params["compression_w2"],
        ssc, ssh, params["shortcut_w"],
        h=h, w=w, bp=bp, outplanes=outplanes)

    return jnp.transpose(out.reshape(n, h, w, outplanes), (0, 3, 1, 2))  # NCHW


# --------------------------------- main ---------------------------------------

if __name__ == "__main__":
    N, INPLANES, BRANCH, OUTPLANES, H, W = 2, 16, 8, 16, 16, 16

    key = jax.random.PRNGKey(0)
    kx, kp = jax.random.split(key)
    x = jax.random.normal(kx, (N, INPLANES, H, W), jnp.float32)
    params = init_params(kp, INPLANES, BRANCH, OUTPLANES)

    out = gcb_forward(x, params, INPLANES, BRANCH, OUTPLANES)
    out = jax.block_until_ready(out)
    assert out.shape == (N, OUTPLANES, H, W)
    assert bool(jnp.all(jnp.isfinite(out)))
    print("KERNEL_OK")
</pallas_src>

<mosaic_0001>
module attributes {stable_mosaic.version = 11 : i64} {
  func.func @_gcb_fused_kernel(%arg0: i32, %arg1: memref<1x256x16xbf16, #tpu.memory_space<vmem>>, %arg2: memref<1x256x24xbf16, #tpu.memory_space<vmem>>, %arg3: memref<1x1x8xf32, #tpu.memory_space<vmem>>, %arg4: memref<1x16xf32, #tpu.memory_space<vmem>>, %arg5: memref<1x16xf32, #tpu.memory_space<vmem>>, %arg6: memref<16x32xbf16, #tpu.memory_space<vmem>>, %arg7: memref<1x32xf32, #tpu.memory_space<vmem>>, %arg8: memref<1x32xf32, #tpu.memory_space<vmem>>, %arg9: memref<288x32xbf16, #tpu.memory_space<vmem>>, %arg10: memref<1x8xf32, #tpu.memory_space<vmem>>, %arg11: memref<1x8xf32, #tpu.memory_space<vmem>>, %arg12: memref<1x32xf32, #tpu.memory_space<vmem>>, %arg13: memref<1x32xf32, #tpu.memory_space<vmem>>, %arg14: memref<8x16xbf16, #tpu.memory_space<vmem>>, %arg15: memref<32x16xbf16, #tpu.memory_space<vmem>>, %arg16: memref<1x16xf32, #tpu.memory_space<vmem>>, %arg17: memref<1x16xf32, #tpu.memory_space<vmem>>, %arg18: memref<16x16xbf16, #tpu.memory_space<vmem>>, %arg19: memref<1x256x16xf32, #tpu.memory_space<vmem>>, %arg20: memref<18x18x32xbf16, #tpu.memory_space<vmem>>) attributes {dimension_semantics = [#tpu.dimension_semantics<parallel>], iteration_bounds = array<i64: 2>, scalar_prefetch = 0 : i64, scratch_operands = 1 : i64, tpu.core_type = #tpu.core_type<tc>, window_params = [{transform_indices = @transform_0, window_bounds = array<i64: 1, 256, 16>}, {transform_indices = @transform_1, window_bounds = array<i64: 1, 256, 24>}, {transform_indices = @transform_2, window_bounds = array<i64: 1, 1, 8>}, {pipeline_mode = #tpu.pipeline_mode<synchronous>, transform_indices = @transform_3, window_bounds = array<i64: 1, 16>}, {pipeline_mode = #tpu.pipeline_mode<synchronous>, transform_indices = @transform_4, window_bounds = array<i64: 1, 16>}, {pipeline_mode = #tpu.pipeline_mode<synchronous>, transform_indices = @transform_5, window_bounds = array<i64: 16, 32>}, {pipeline_mode = #tpu.pipeline_mode<synchronous>, transform_indices = @transform_6, window_bounds = array<i64: 1, 32>}, {pipeline_mode = #tpu.pipeline_mode<synchronous>, transform_indices = @transform_7, window_bounds = array<i64: 1, 32>}, {pipeline_mode = #tpu.pipeline_mode<synchronous>, transform_indices = @transform_8, window_bounds = array<i64: 288, 32>}, {pipeline_mode = #tpu.pipeline_mode<synchronous>, transform_indices = @transform_9, window_bounds = array<i64: 1, 8>}, {pipeline_mode = #tpu.pipeline_mode<synchronous>, transform_indices = @transform_10, window_bounds = array<i64: 1, 8>}, {pipeline_mode = #tpu.pipeline_mode<synchronous>, transform_indices = @transform_11, window_bounds = array<i64: 1, 32>}, {pipeline_mode = #tpu.pipeline_mode<synchronous>, transform_indices = @transform_12, window_bounds = array<i64: 1, 32>}, {pipeline_mode = #tpu.pipeline_mode<synchronous>, transform_indices = @transform_13, window_bounds = array<i64: 8, 16>}, {pipeline_mode = #tpu.pipeline_mode<synchronous>, transform_indices = @transform_14, window_bounds = array<i64: 32, 16>}, {pipeline_mode = #tpu.pipeline_mode<synchronous>, transform_indices = @transform_15, window_bounds = array<i64: 1, 16>}, {pipeline_mode = #tpu.pipeline_mode<synchronous>, transform_indices = @transform_16, window_bounds = array<i64: 1, 16>}, {pipeline_mode = #tpu.pipeline_mode<synchronous>, transform_indices = @transform_17, window_bounds = array<i64: 16, 16>}, {transform_indices = @transform_18, window_bounds = array<i64: 1, 256, 16>}]} {
    %c0 = arith.constant 0 : index
    %c0_0 = arith.constant 0 : index
    %c0_1 = arith.constant 0 : index
    %0 = vector.load %arg1[%c0, %c0_0, %c0_1] : memref<1x256x16xbf16, #tpu.memory_space<vmem>>, vector<1x256x16xbf16>
    %1 = vector.shape_cast %0 : vector<1x256x16xbf16> to vector<256x16xbf16>
    %2 = arith.extf %1 : vector<256x16xbf16> to vector<256x16xf32>
    %c0_2 = arith.constant 0 : index
    %c0_3 = arith.constant 0 : index
    %3 = vector.load %arg4[%c0_2, %c0_3] : memref<1x16xf32, #tpu.memory_space<vmem>>, vector<1x16xf32>
    %4 = vector.broadcast %3 : vector<1x16xf32> to vector<256x16xf32>
    %5 = arith.mulf %2, %4 : vector<256x16xf32>
    %c0_4 = arith.constant 0 : index
    %c0_5 = arith.constant 0 : index
    %6 = vector.load %arg5[%c0_4, %c0_5] : memref<1x16xf32, #tpu.memory_space<vmem>>, vector<1x16xf32>
    %7 = vector.broadcast %6 : vector<1x16xf32> to vector<256x16xf32>
    %8 = arith.addf %5, %7 : vector<256x16xf32>
    %cst = arith.constant 0.000000e+00 : f32
    %9 = vector.broadcast %cst : f32 to vector<256x16xf32>
    %10 = arith.maximumf %8, %9 : vector<256x16xf32>
    %11 = arith.truncf %10 : vector<256x16xf32> to vector<256x16xbf16>
    %c0_6 = arith.constant 0 : index
    %c0_7 = arith.constant 0 : index
    %12 = vector.load %arg6[%c0_6, %c0_7] : memref<16x32xbf16, #tpu.memory_space<vmem>>, vector<16x32xbf16>
    %cst_8 = arith.constant dense<0.000000e+00> : vector<256x32xf32>
    %13 = tpu.matmul %11, %12, %cst_8 {dimension_numbers = #tpu.dot_dimension_numbers<[1], [0], [0], [1], [0, 0, 1, 1], [], []>} : vector<256x16xbf16>, vector<16x32xbf16>, vector<256x32xf32> -> vector<256x32xf32>
    %c0_9 = arith.constant 0 : index
    %c0_10 = arith.constant 0 : index
    %c0_11 = arith.constant 0 : index
    %14 = vector.load %arg3[%c0_9, %c0_10, %c0_11] : memref<1x1x8xf32, #tpu.memory_space<vmem>>, vector<1x1x8xf32>
    %15 = vector.shape_cast %14 : vector<1x1x8xf32> to vector<1x8xf32>
    %16 = vector.shape_cast %15 : vector<1x8xf32> to vector<1x8xf32>
    %17 = vector.broadcast %16 : vector<1x8xf32> to vector<256x8xf32>
    %c0_12 = arith.constant 0 : index
    %c0_13 = arith.constant 0 : index
    %c0_14 = arith.constant 0 : index
    %18 = vector.load %arg2[%c0_12, %c0_13, %c0_14] : memref<1x256x24xbf16, #tpu.memory_space<vmem>>, vector<1x256x24xbf16>
    %19 = vector.shape_cast %18 : vector<1x256x24xbf16> to vector<256x24xbf16>
    %20 = arith.extf %19 : vector<256x24xbf16> to vector<256x24xf32>
    %21 = tpu.concatenate %20, %17 in 1 : vector<256x24xf32>, vector<256x8xf32> -> vector<256x32xf32>
    %22 = arith.addf %21, %13 : vector<256x32xf32>
    %c0_15 = arith.constant 0 : index
    %c0_16 = arith.constant 0 : index
    %23 = vector.load %arg7[%c0_15, %c0_16] : memref<1x32xf32, #tpu.memory_space<vmem>>, vector<1x32xf32>
    %24 = vector.broadcast %23 : vector<1x32xf32> to vector<256x32xf32>
    %25 = arith.mulf %22, %24 : vector<256x32xf32>
    %c0_17 = arith.constant 0 : index
    %c0_18 = arith.constant 0 : index
    %26 = vector.load %arg8[%c0_17, %c0_18] : memref<1x32xf32, #tpu.memory_space<vmem>>, vector<1x32xf32>
    %27 = vector.broadcast %26 : vector<1x32xf32> to vector<256x32xf32>
    %28 = arith.addf %25, %27 : vector<256x32xf32>
    %cst_19 = arith.constant 0.000000e+00 : f32
    %29 = vector.broadcast %cst_19 : f32 to vector<256x32xf32>
    %30 = arith.maximumf %28, %29 : vector<256x32xf32>
    %31 = arith.truncf %30 : vector<256x32xf32> to vector<256x32xbf16>
    %cst_20 = arith.constant 0.000000e+00 : bf16
    %32 = vector.broadcast %cst_20 : bf16 to vector<18x18x32xbf16>
    %c0_21 = arith.constant 0 : index
    %c0_22 = arith.constant 0 : index
    %c0_23 = arith.constant 0 : index
    %33 = vector.load %arg20[%c0_21, %c0_22, %c0_23] : memref<18x18x32xbf16, #tpu.memory_space<vmem>>, vector<18x18x32xbf16>
    tpu.vector_store %arg20[%c0_21, %c0_22, %c0_23], %32 {strides = array<i32>} : memref<18x18x32xbf16, #tpu.memory_space<vmem>>, vector<18x18x32xbf16>,
    %34 = vector.shape_cast %31 : vector<256x32xbf16> to vector<16x16x32xbf16>
    %c1 = arith.constant 1 : index
    %c1_24 = arith.constant 1 : index
    %c0_25 = arith.constant 0 : index
    %35 = vector.load %arg20[%c1, %c1_24, %c0_25] : memref<18x18x32xbf16, #tpu.memory_space<vmem>>, vector<16x16x32xbf16>
    tpu.vector_store %arg20[%c1, %c1_24, %c0_25], %34 {strides = array<i32>} : memref<18x18x32xbf16, #tpu.memory_space<vmem>>, vector<16x16x32xbf16>,
    %c0_26 = arith.constant 0 : index
    %c0_27 = arith.constant 0 : index
    %c0_28 = arith.constant 0 : index
    %36 = vector.load %arg20[%c0_26, %c0_27, %c0_28] : memref<18x18x32xbf16, #tpu.memory_space<vmem>>, vector<18x18x32xbf16>
    %37 = vector.extract_strided_slice %36 {offsets = [0, 0, 0], sizes = [16, 16, 32], strides = [1, 1, 1]} : vector<18x18x32xbf16> to vector<16x16x32xbf16>
    %38 = vector.shape_cast %37 : vector<16x16x32xbf16> to vector<256x32xbf16>
    %39 = vector.extract_strided_slice %36 {offsets = [0, 1, 0], sizes = [16, 16, 32], strides = [1, 1, 1]} : vector<18x18x32xbf16> to vector<16x16x32xbf16>
    %40 = vector.shape_cast %39 : vector<16x16x32xbf16> to vector<256x32xbf16>
    %41 = vector.extract_strided_slice %36 {offsets = [0, 2, 0], sizes = [16, 16, 32], strides = [1, 1, 1]} : vector<18x18x32xbf16> to vector<16x16x32xbf16>
    %42 = vector.shape_cast %41 : vector<16x16x32xbf16> to vector<256x32xbf16>
    %43 = vector.extract_strided_slice %36 {offsets = [1, 0, 0], sizes = [16, 16, 32], strides = [1, 1, 1]} : vector<18x18x32xbf16> to vector<16x16x32xbf16>
    %44 = vector.shape_cast %43 : vector<16x16x32xbf16> to vector<256x32xbf16>
    %45 = vector.extract_strided_slice %36 {offsets = [1, 1, 0], sizes = [16, 16, 32], strides = [1, 1, 1]} : vector<18x18x32xbf16> to vector<16x16x32xbf16>
    %46 = vector.shape_cast %45 : vector<16x16x32xbf16> to vector<256x32xbf16>
    %47 = vector.extract_strided_slice %36 {offsets = [1, 2, 0], sizes = [16, 16, 32], strides = [1, 1, 1]} : vector<18x18x32xbf16> to vector<16x16x32xbf16>
    %48 = vector.shape_cast %47 : vector<16x16x32xbf16> to vector<256x32xbf16>
    %49 = vector.extract_strided_slice %36 {offsets = [2, 0, 0], sizes = [16, 16, 32], strides = [1, 1, 1]} : vector<18x18x32xbf16> to vector<16x16x32xbf16>
    %50 = vector.shape_cast %49 : vector<16x16x32xbf16> to vector<256x32xbf16>
    %51 = vector.extract_strided_slice %36 {offsets = [2, 1, 0], sizes = [16, 16, 32], strides = [1, 1, 1]} : vector<18x18x32xbf16> to vector<16x16x32xbf16>
    %52 = vector.shape_cast %51 : vector<16x16x32xbf16> to vector<256x32xbf16>
    %53 = vector.extract_strided_slice %36 {offsets = [2, 2, 0], sizes = [16, 16, 32], strides = [1, 1, 1]} : vector<18x18x32xbf16> to vector<16x16x32xbf16>
    %54 = vector.shape_cast %53 : vector<16x16x32xbf16> to vector<256x32xbf16>
    %55 = tpu.concatenate %38, %40, %42, %44, %46, %48, %50, %52, %54 in 1 : vector<256x32xbf16>, vector<256x32xbf16>, vector<256x32xbf16>, vector<256x32xbf16>, vector<256x32xbf16>, vector<256x32xbf16>, vector<256x32xbf16>, vector<256x32xbf16>, vector<256x32xbf16> -> vector<256x288xbf16>
    %c0_29 = arith.constant 0 : index
    %c0_30 = arith.constant 0 : index
    %56 = vector.load %arg9[%c0_29, %c0_30] : memref<288x32xbf16, #tpu.memory_space<vmem>>, vector<288x32xbf16>
    %cst_31 = arith.constant dense<0.000000e+00> : vector<256x32xf32>
    %57 = tpu.matmul %55, %56, %cst_31 {dimension_numbers = #tpu.dot_dimension_numbers<[1], [0], [0], [1], [0, 0, 1, 1], [], []>} : vector<256x288xbf16>, vector<288x32xbf16>, vector<256x32xf32> -> vector<256x32xf32>
    %58 = vector.extract_strided_slice %13 {offsets = [0, 0], sizes = [256, 8], strides = [1, 1]} : vector<256x32xf32> to vector<256x8xf32>
    %c0_32 = arith.constant 0 : index
    %c0_33 = arith.constant 0 : index
    %59 = vector.load %arg10[%c0_32, %c0_33] : memref<1x8xf32, #tpu.memory_space<vmem>>, vector<1x8xf32>
    %60 = vector.broadcast %59 : vector<1x8xf32> to vector<256x8xf32>
    %61 = arith.mulf %58, %60 : vector<256x8xf32>
    %c0_34 = arith.constant 0 : index
    %c0_35 = arith.constant 0 : index
    %62 = vector.load %arg11[%c0_34, %c0_35] : memref<1x8xf32, #tpu.memory_space<vmem>>, vector<1x8xf32>
    %63 = vector.broadcast %62 : vector<1x8xf32> to vector<256x8xf32>
    %64 = arith.addf %61, %63 : vector<256x8xf32>
    %cst_36 = arith.constant 0.000000e+00 : f32
    %65 = vector.broadcast %cst_36 : f32 to vector<256x8xf32>
    %66 = arith.maximumf %64, %65 : vector<256x8xf32>
    %c0_37 = arith.constant 0 : index
    %c0_38 = arith.constant 0 : index
    %67 = vector.load %arg12[%c0_37, %c0_38] : memref<1x32xf32, #tpu.memory_space<vmem>>, vector<1x32xf32>
    %68 = vector.broadcast %67 : vector<1x32xf32> to vector<256x32xf32>
    %69 = arith.mulf %57, %68 : vector<256x32xf32>
    %c0_39 = arith.constant 0 : index
    %c0_40 = arith.constant 0 : index
    %70 = vector.load %arg13[%c0_39, %c0_40] : memref<1x32xf32, #tpu.memory_space<vmem>>, vector<1x32xf32>
    %71 = vector.broadcast %70 : vector<1x32xf32> to vector<256x32xf32>
    %72 = arith.addf %69, %71 : vector<256x32xf32>
    %cst_41 = arith.constant 0.000000e+00 : f32
    %73 = vector.broadcast %cst_41 : f32 to vector<256x32xf32>
    %74 = arith.maximumf %72, %73 : vector<256x32xf32>
    %75 = arith.truncf %66 : vector<256x8xf32> to vector<256x8xbf16>
    %c0_42 = arith.constant 0 : index
    %c0_43 = arith.constant 0 : index
    %76 = vector.load %arg14[%c0_42, %c0_43] : memref<8x16xbf16, #tpu.memory_space<vmem>>, vector<8x16xbf16>
    %cst_44 = arith.constant dense<0.000000e+00> : vector<256x16xf32>
    %77 = tpu.matmul %75, %76, %cst_44 {dimension_numbers = #tpu.dot_dimension_numbers<[1], [0], [0], [1], [0, 0, 1, 1], [], []>} : vector<256x8xbf16>, vector<8x16xbf16>, vector<256x16xf32> -> vector<256x16xf32>
    %78 = arith.truncf %74 : vector<256x32xf32> to vector<256x32xbf16>
    %c0_45 = arith.constant 0 : index
    %c0_46 = arith.constant 0 : index
    %79 = vector.load %arg15[%c0_45, %c0_46] : memref<32x16xbf16, #tpu.memory_space<vmem>>, vector<32x16xbf16>
    %cst_47 = arith.constant dense<0.000000e+00> : vector<256x16xf32>
    %80 = tpu.matmul %78, %79, %cst_47 {dimension_numbers = #tpu.dot_dimension_numbers<[1], [0], [0], [1], [0, 0, 1, 1], [], []>} : vector<256x32xbf16>, vector<32x16xbf16>, vector<256x16xf32> -> vector<256x16xf32>
    %81 = arith.addf %77, %80 : vector<256x16xf32>
    %c0_48 = arith.constant 0 : index
    %c0_49 = arith.constant 0 : index
    %82 = vector.load %arg16[%c0_48, %c0_49] : memref<1x16xf32, #tpu.memory_space<vmem>>, vector<1x16xf32>
    %83 = vector.broadcast %82 : vector<1x16xf32> to vector<256x16xf32>
    %84 = arith.mulf %2, %83 : vector<256x16xf32>
    %c0_50 = arith.constant 0 : index
    %c0_51 = arith.constant 0 : index
    %85 = vector.load %arg17[%c0_50, %c0_51] : memref<1x16xf32, #tpu.memory_space<vmem>>, vector<1x16xf32>
    %86 = vector.broadcast %85 : vector<1x16xf32> to vector<256x16xf32>
    %87 = arith.addf %84, %86 : vector<256x16xf32>
    %cst_52 = arith.constant 0.000000e+00 : f32
    %88 = vector.broadcast %cst_52 : f32 to vector<256x16xf32>
    %89 = arith.maximumf %87, %88 : vector<256x16xf32>
    %90 = arith.truncf %89 : vector<256x16xf32> to vector<256x16xbf16>
    %c0_53 = arith.constant 0 : index
    %c0_54 = arith.constant 0 : index
    %91 = vector.load %arg18[%c0_53, %c0_54] : memref<16x16xbf16, #tpu.memory_space<vmem>>, vector<16x16xbf16>
    %cst_55 = arith.constant dense<0.000000e+00> : vector<256x16xf32>
    %92 = tpu.matmul %90, %91, %cst_55 {dimension_numbers = #tpu.dot_dimension_numbers<[1], [0], [0], [1], [0, 0, 1, 1], [], []>} : vector<256x16xbf16>, vector<16x16xbf16>, vector<256x16xf32> -> vector<256x16xf32>
    %93 = arith.addf %81, %92 : vector<256x16xf32>
    %c0_56 = arith.constant 0 : index
    %c0_57 = arith.constant 0 : index
    %c0_58 = arith.constant 0 : index
    %94 = vector.load %arg19[%c0_56, %c0_57, %c0_58] : memref<1x256x16xf32, #tpu.memory_space<vmem>>, vector<1x256x16xf32>
    %95 = vector.shape_cast %94 : vector<1x256x16xf32> to vector<256x16xf32>
    %96 = vector.shape_cast %93 : vector<256x16xf32> to vector<1x256x16xf32>
    tpu.vector_store %arg19[%c0_56, %c0_57, %c0_58], %96 {strides = array<i32>} : memref<1x256x16xf32, #tpu.memory_space<vmem>>, vector<1x256x16xf32>,
    return
  }
  func.func @transform_0(%arg0: i32) -> (i32, i32, i32) {
    %c0_i32 = arith.constant 0 : i32
    %c0_i32_0 = arith.constant 0 : i32
    %c0_i32_1 = arith.constant 0 : i32
    return %arg0, %c0_i32, %c0_i32_0 : i32, i32, i32
  }
  func.func @transform_1(%arg0: i32) -> (i32, i32, i32) {
    %c0_i32 = arith.constant 0 : i32
    %c0_i32_0 = arith.constant 0 : i32
    %c0_i32_1 = arith.constant 0 : i32
    return %arg0, %c0_i32, %c0_i32_0 : i32, i32, i32
  }
  func.func @transform_2(%arg0: i32) -> (i32, i32, i32) {
    %c0_i32 = arith.constant 0 : i32
    %c0_i32_0 = arith.constant 0 : i32
    %c0_i32_1 = arith.constant 0 : i32
    return %arg0, %c0_i32, %c0_i32_0 : i32, i32, i32
  }
  func.func @transform_3(%arg0: i32) -> (i32, i32) {
    %c0_i32 = arith.constant 0 : i32
    %c0_i32_0 = arith.constant 0 : i32
    %c0_i32_1 = arith.constant 0 : i32
    return %c0_i32, %c0_i32_0 : i32, i32
  }
  func.func @transform_4(%arg0: i32) -> (i32, i32) {
    %c0_i32 = arith.constant 0 : i32
    %c0_i32_0 = arith.constant 0 : i32
    %c0_i32_1 = arith.constant 0 : i32
    return %c0_i32, %c0_i32_0 : i32, i32
  }
  func.func @transform_5(%arg0: i32) -> (i32, i32) {
    %c0_i32 = arith.constant 0 : i32
    %c0_i32_0 = arith.constant 0 : i32
    %c0_i32_1 = arith.constant 0 : i32
    return %c0_i32, %c0_i32_0 : i32, i32
  }
  func.func @transform_6(%arg0: i32) -> (i32, i32) {
    %c0_i32 = arith.constant 0 : i32
    %c0_i32_0 = arith.constant 0 : i32
    %c0_i32_1 = arith.constant 0 : i32
    return %c0_i32, %c0_i32_0 : i32, i32
  }
  func.func @transform_7(%arg0: i32) -> (i32, i32) {
    %c0_i32 = arith.constant 0 : i32
    %c0_i32_0 = arith.constant 0 : i32
    %c0_i32_1 = arith.constant 0 : i32
    return %c0_i32, %c0_i32_0 : i32, i32
  }
  func.func @transform_8(%arg0: i32) -> (i32, i32) {
    %c0_i32 = arith.constant 0 : i32
    %c0_i32_0 = arith.constant 0 : i32
    %c0_i32_1 = arith.constant 0 : i32
    return %c0_i32, %c0_i32_0 : i32, i32
  }
  func.func @transform_9(%arg0: i32) -> (i32, i32) {
    %c0_i32 = arith.constant 0 : i32
    %c0_i32_0 = arith.constant 0 : i32
    %c0_i32_1 = arith.constant 0 : i32
    return %c0_i32, %c0_i32_0 : i32, i32
  }
  func.func @transform_10(%arg0: i32) -> (i32, i32) {
    %c0_i32 = arith.constant 0 : i32
    %c0_i32_0 = arith.constant 0 : i32
    %c0_i32_1 = arith.constant 0 : i32
    return %c0_i32, %c0_i32_0 : i32, i32
  }
  func.func @transform_11(%arg0: i32) -> (i32, i32) {
    %c0_i32 = arith.constant 0 : i32
    %c0_i32_0 = arith.constant 0 : i32
    %c0_i32_1 = arith.constant 0 : i32
    return %c0_i32, %c0_i32_0 : i32, i32
  }
  func.func @transform_12(%arg0: i32) -> (i32, i32) {
    %c0_i32 = arith.constant 0 : i32
    %c0_i32_0 = arith.constant 0 : i32
    %c0_i32_1 = arith.constant 0 : i32
    return %c0_i32, %c0_i32_0 : i32, i32
  }
  func.func @transform_13(%arg0: i32) -> (i32, i32) {
    %c0_i32 = arith.constant 0 : i32
    %c0_i32_0 = arith.constant 0 : i32
    %c0_i32_1 = arith.constant 0 : i32
    return %c0_i32, %c0_i32_0 : i32, i32
  }
  func.func @transform_14(%arg0: i32) -> (i32, i32) {
    %c0_i32 = arith.constant 0 : i32
    %c0_i32_0 = arith.constant 0 : i32
    %c0_i32_1 = arith.constant 0 : i32
    return %c0_i32, %c0_i32_0 : i32, i32
  }
  func.func @transform_15(%arg0: i32) -> (i32, i32) {
    %c0_i32 = arith.constant 0 : i32
    %c0_i32_0 = arith.constant 0 : i32
    %c0_i32_1 = arith.constant 0 : i32
    return %c0_i32, %c0_i32_0 : i32, i32
  }
  func.func @transform_16(%arg0: i32) -> (i32, i32) {
    %c0_i32 = arith.constant 0 : i32
    %c0_i32_0 = arith.constant 0 : i32
    %c0_i32_1 = arith.constant 0 : i32
    return %c0_i32, %c0_i32_0 : i32, i32
  }
  func.func @transform_17(%arg0: i32) -> (i32, i32) {
    %c0_i32 = arith.constant 0 : i32
    %c0_i32_0 = arith.constant 0 : i32
    %c0_i32_1 = arith.constant 0 : i32
    return %c0_i32, %c0_i32_0 : i32, i32
  }
  func.func @transform_18(%arg0: i32) -> (i32, i32, i32) {
    %c0_i32 = arith.constant 0 : i32
    %c0_i32_0 = arith.constant 0 : i32
    %c0_i32_1 = arith.constant 0 : i32
    return %arg0, %c0_i32, %c0_i32_0 : i32, i32, i32
  }
}

</mosaic_0001>

<llo_original>
// kernel: gcb_forward.1
$region0: #{gcb_forward.1}
  #allocation0 [shape = 'u32[]', space=smem, size = 0x4, offset = 0x4, fixed_abs, tag = 'smem constant byte address 0x4 - core index']
  #allocation1 [shape = 'u32[72,128]{1,0:T(1,128)}', space=vmem, size = 0x9000, scoped, tag = 'internal scratch']
  #allocation2 [shape = 'bf16[18,18,32]{2,1,0:T(8,128)(2,1)}', space=vmem, size = 0x1b000, scoped, tag = 'scratch operand']
  %s0 = inlined_call_operand.vmem [shape: bf16[2,256,16], index: 0, kind: input, shape index: {}]
  %s1 = inlined_call_operand.vmem [shape: bf16[2,256,24], index: 1, kind: input, shape index: {}]
  %s2 = inlined_call_operand.vmem [shape: f32[2,1,8], index: 2, kind: input, shape index: {}]
  %s3 = inlined_call_operand.vmem [shape: f32[1,16], index: 3, kind: input, shape index: {}]
  %s4 = inlined_call_operand.vmem [shape: f32[1,16], index: 4, kind: input, shape index: {}]
  %s5 = inlined_call_operand.vmem [shape: bf16[16,32], index: 5, kind: input, shape index: {}]
  %s6 = inlined_call_operand.vmem [shape: f32[1,32], index: 6, kind: input, shape index: {}]
  %s7 = inlined_call_operand.vmem [shape: f32[1,32], index: 7, kind: input, shape index: {}]
  %s8 = inlined_call_operand.vmem [shape: bf16[288,32], index: 8, kind: input, shape index: {}]
  %s9 = inlined_call_operand.vmem [shape: f32[1,8], index: 9, kind: input, shape index: {}]
  %s10 = inlined_call_operand.vmem [shape: f32[1,8], index: 10, kind: input, shape index: {}]
  %s11 = inlined_call_operand.vmem [shape: f32[1,32], index: 11, kind: input, shape index: {}]
  %s12 = inlined_call_operand.vmem [shape: f32[1,32], index: 12, kind: input, shape index: {}]
  %s13 = inlined_call_operand.vmem [shape: bf16[8,16], index: 13, kind: input, shape index: {}]
  %s14 = inlined_call_operand.vmem [shape: bf16[32,16], index: 14, kind: input, shape index: {}]
  %s15 = inlined_call_operand.vmem [shape: f32[1,16], index: 15, kind: input, shape index: {}]
  %s16 = inlined_call_operand.vmem [shape: f32[1,16], index: 16, kind: input, shape index: {}]
  %s17 = inlined_call_operand.vmem [shape: bf16[16,16], index: 17, kind: input, shape index: {}]
  %s18 = inlined_call_operand.vmem [shape: f32[2,256,16], index: 18, kind: output, shape index: {}]
  %s19 = sld [smem:[#allocation0]]
  $region105: #{gcb_forward.1} parent=0
    _
  %s21 = ssub.s32 1, %s19
  %s22 = scalar_select 0, %s21, %s19
  loop: start=0, step=1, limit=4
  $region2: #{gcb_forward.1} parent=0 // loop_pre_header
    _
  $region3: #{gcb_forward.1} parent=0 // loop_header
    %s24 = sphi 0, %s28
    %p25 = scmp.ge.s32.totalorder %s24, 4
    %s34 = sphi 0, %s36
    %s37 = sphi 0, %s34
    %s38 = sphi 0, %s37
    %s54 = sphi 0, %s38
    %s60 = sphi 0, %s62
    %s63 = sphi 0, %s60
    %s64 = sphi 0, %s63
    %s80 = sphi 0, %s64
    %s86 = sphi 0, %s88
    %s89 = sphi 0, %s86
    %s90 = sphi 0, %s89
    %s106 = sphi 0, %s90
    %s110 = sphi 0, %s110
    %s112 = sphi 0, %s110
    %s113 = sphi 0, %s112
    %s127 = sphi 0, %s113
    %s131 = sphi 0, %s131
    %s133 = sphi 0, %s131
    %s134 = sphi 0, %s133
    %s148 = sphi 0, %s134
    %s152 = sphi 0, %s152
    %s154 = sphi 0, %s152
    %s155 = sphi 0, %s154
    %s169 = sphi 0, %s155
    %s173 = sphi 0, %s173
    %s175 = sphi 0, %s173
    %s176 = sphi 0, %s175
    %s190 = sphi 0, %s176
    %s194 = sphi 0, %s194
    %s196 = sphi 0, %s194
    %s197 = sphi 0, %s196
    %s211 = sphi 0, %s197
    %s215 = sphi 0, %s215
    %s217 = sphi 0, %s215
    %s218 = sphi 0, %s217
    %s232 = sphi 0, %s218
    %s236 = sphi 0, %s236
    %s238 = sphi 0, %s236
    %s239 = sphi 0, %s238
    %s253 = sphi 0, %s239
    %s257 = sphi 0, %s257
    %s259 = sphi 0, %s257
    %s260 = sphi 0, %s259
    %s274 = sphi 0, %s260
    %s278 = sphi 0, %s278
    %s280 = sphi 0, %s278
    %s281 = sphi 0, %s280
    %s295 = sphi 0, %s281
    %s299 = sphi 0, %s299
    %s301 = sphi 0, %s299
    %s302 = sphi 0, %s301
    %s316 = sphi 0, %s302
    %s320 = sphi 0, %s320
    %s322 = sphi 0, %s320
    %s323 = sphi 0, %s322
    %s337 = sphi 0, %s323
    %s341 = sphi 0, %s341
    %s343 = sphi 0, %s341
    %s344 = sphi 0, %s343
    %s358 = sphi 0, %s344
    %s362 = sphi 0, %s362
    %s364 = sphi 0, %s362
    %s365 = sphi 0, %s364
    %s379 = sphi 0, %s365
    %s383 = sphi 0, %s383
    %s385 = sphi 0, %s383
    %s386 = sphi 0, %s385
    %s400 = sphi 0, %s386
    %s404 = sphi 0, %s404
    %s406 = sphi 0, %s404
    %s407 = sphi 0, %s406
    %s421 = sphi 0, %s407
    %s427 = sphi 0, %s429
    %s430 = sphi 0, %s427
    %s431 = sphi 0, %s430
    %s447 = sphi 0, %s431
  $region4: #{gcb_forward.1} parent=0 // loop_header_branch
    %27 = sbr.rel (%p25) target = $region8
  $region5: #{gcb_forward.1} parent=0 // loop_body
    %s29 = ssub.s32 %s24, 1
    %s30 = ssub.s32 %s24, 2
    %s31 = sadd.s32 %s24, 1
    %s32 = ssub.s32 %s24, %s31
    %p33 = scmp.eq.s32.totalorder %s32, 0
    %s35 = sadd.s32 %s34, 1
    %s36 = scalar_select %p33, %s34, %s35
    %p39 = pneg %p33
    %p40 = scmp.eq.s32.totalorder %s24, 1
    %p41 = por %p39, %p40
    %p42 = scmp.ne.s32.totalorder %s34, %s37
    %p43 = scmp.eq.s32.totalorder %s24, 0
    %p44 = por %p42, %p43
    %p45 = scmp.ne.s32.totalorder %s34, %s37
    %p46 = scmp.eq.s32.totalorder %s29, 1
    %p47 = por %p45, %p46
    %p48 = scmp.ne.s32.totalorder %s37, %s38
    %p49 = scmp.eq.s32.totalorder %s29, 0
    %p50 = por %p48, %p49
    %p51 = scmp.ne.s32.totalorder %s37, %s38
    %p52 = scmp.eq.s32.totalorder %s30, 1
    %p53 = por %p51, %p52
    %p55 = scmp.ne.s32.totalorder %s38, %s54
    %p56 = scmp.eq.s32.totalorder %s30, 0
    %p57 = por %p55, %p56
    %s58 = ssub.s32 %s24, %s31
    %p59 = scmp.eq.s32.totalorder %s58, 0
    %s61 = sadd.s32 %s60, 1
    %s62 = scalar_select %p59, %s60, %s61
    %p65 = pneg %p59
    %p66 = scmp.eq.s32.totalorder %s24, 1
    %p67 = por %p65, %p66
    %p68 = scmp.ne.s32.totalorder %s60, %s63
    %p69 = scmp.eq.s32.totalorder %s24, 0
    %p70 = por %p68, %p69
    %p71 = scmp.ne.s32.totalorder %s60, %s63
    %p72 = scmp.eq.s32.totalorder %s29, 1
    %p73 = por %p71, %p72
    %p74 = scmp.ne.s32.totalorder %s63, %s64
    %p75 = scmp.eq.s32.totalorder %s29, 0
    %p76 = por %p74, %p75
    %p77 = scmp.ne.s32.totalorder %s63, %s64
    %p78 = scmp.eq.s32.totalorder %s30, 1
    %p79 = por %p77, %p78
    %p81 = scmp.ne.s32.totalorder %s64, %s80
    %p82 = scmp.eq.s32.totalorder %s30, 0
    %p83 = por %p81, %p82
    %s84 = ssub.s32 %s24, %s31
    %p85 = scmp.eq.s32.totalorder %s84, 0
    %s87 = sadd.s32 %s86, 1
    %s88 = scalar_select %p85, %s86, %s87
    %p91 = pneg %p85
    %p92 = scmp.eq.s32.totalorder %s24, 1
    %p93 = por %p91, %p92
    %p94 = scmp.ne.s32.totalorder %s86, %s89
    %p95 = scmp.eq.s32.totalorder %s24, 0
    %p96 = por %p94, %p95
    %p97 = scmp.ne.s32.totalorder %s86, %s89
    %p98 = scmp.eq.s32.totalorder %s29, 1
    %p99 = por %p97, %p98
    %p100 = scmp.ne.s32.totalorder %s89, %s90
    %p101 = scmp.eq.s32.totalorder %s29, 0
    %p102 = por %p100, %p101
    %p103 = scmp.ne.s32.totalorder %s89, %s90
    %p104 = scmp.eq.s32.totalorder %s30, 1
    %p105 = por %p103, %p104
    %p107 = scmp.ne.s32.totalorder %s90, %s106
    %p108 = scmp.eq.s32.totalorder %s30, 0
    %p109 = por %p107, %p108
    %s111 = sadd.s32 %s110, 1
    %p114 = scmp.eq.s32.totalorder %s24, 1
    %p115 = scmp.ne.s32.totalorder %s110, %s112
    %p116 = scmp.eq.s32.totalorder %s24, 0
    %p117 = por %p115, %p116
    %p118 = scmp.ne.s32.totalorder %s110, %s112
    %p119 = scmp.eq.s32.totalorder %s29, 1
    %p120 = por %p118, %p119
    %p121 = scmp.ne.s32.totalorder %s112, %s113
    %p122 = scmp.eq.s32.totalorder %s29, 0
    %p123 = por %p121, %p122
    %p124 = scmp.ne.s32.totalorder %s112, %s113
    %p125 = scmp.eq.s32.totalorder %s30, 1
    %p126 = por %p124, %p125
    %p128 = scmp.ne.s32.totalorder %s113, %s127
    %p129 = scmp.eq.s32.totalorder %s30, 0
    %p130 = por %p128, %p129
    %s132 = sadd.s32 %s131, 1
    %p135 = scmp.eq.s32.totalorder %s24, 1
    %p136 = scmp.ne.s32.totalorder %s131, %s133
    %p137 = scmp.eq.s32.totalorder %s24, 0
    %p138 = por %p136, %p137
    %p139 = scmp.ne.s32.totalorder %s131, %s133
    %p140 = scmp.eq.s32.totalorder %s29, 1
    %p141 = por %p139, %p140
    %p142 = scmp.ne.s32.totalorder %s133, %s134
    %p143 = scmp.eq.s32.totalorder %s29, 0
    %p144 = por %p142, %p143
    %p145 = scmp.ne.s32.totalorder %s133, %s134
    %p146 = scmp.eq.s32.totalorder %s30, 1
    %p147 = por %p145, %p146
    %p149 = scmp.ne.s32.totalorder %s134, %s148
    %p150 = scmp.eq.s32.totalorder %s30, 0
    %p151 = por %p149, %p150
    %s153 = sadd.s32 %s152, 1
    %p156 = scmp.eq.s32.totalorder %s24, 1
    %p157 = scmp.ne.s32.totalorder %s152, %s154
    %p158 = scmp.eq.s32.totalorder %s24, 0
    %p159 = por %p157, %p158
    %p160 = scmp.ne.s32.totalorder %s152, %s154
    %p161 = scmp.eq.s32.totalorder %s29, 1
    %p162 = por %p160, %p161
    %p163 = scmp.ne.s32.totalorder %s154, %s155
    %p164 = scmp.eq.s32.totalorder %s29, 0
    %p165 = por %p163, %p164
    %p166 = scmp.ne.s32.totalorder %s154, %s155
    %p167 = scmp.eq.s32.totalorder %s30, 1
    %p168 = por %p166, %p167
    %p170 = scmp.ne.s32.totalorder %s155, %s169
    %p171 = scmp.eq.s32.totalorder %s30, 0
    %p172 = por %p170, %p171
    %s174 = sadd.s32 %s173, 1
    %p177 = scmp.eq.s32.totalorder %s24, 1
    %p178 = scmp.ne.s32.totalorder %s173, %s175
    %p179 = scmp.eq.s32.totalorder %s24, 0
    %p180 = por %p178, %p179
    %p181 = scmp.ne.s32.totalorder %s173, %s175
    %p182 = scmp.eq.s32.totalorder %s29, 1
    %p183 = por %p181, %p182
    %p184 = scmp.ne.s32.totalorder %s175, %s176
    %p185 = scmp.eq.s32.totalorder %s29, 0
    %p186 = por %p184, %p185
    %p187 = scmp.ne.s32.totalorder %s175, %s176
    %p188 = scmp.eq.s32.totalorder %s30, 1
    %p189 = por %p187, %p188
    %p191 = scmp.ne.s32.totalorder %s176, %s190
    %p192 = scmp.eq.s32.totalorder %s30, 0
    %p193 = por %p191, %p192
    %s195 = sadd.s32 %s194, 1
    %p198 = scmp.eq.s32.totalorder %s24, 1
    %p199 = scmp.ne.s32.totalorder %s194, %s196
    %p200 = scmp.eq.s32.totalorder %s24, 0
    %p201 = por %p199, %p200
    %p202 = scmp.ne.s32.totalorder %s194, %s196
    %p203 = scmp.eq.s32.totalorder %s29, 1
    %p204 = por %p202, %p203
    %p205 = scmp.ne.s32.totalorder %s196, %s197
    %p206 = scmp.eq.s32.totalorder %s29, 0
    %p207 = por %p205, %p206
    %p208 = scmp.ne.s32.totalorder %s196, %s197
    %p209 = scmp.eq.s32.totalorder %s30, 1
    %p210 = por %p208, %p209
    %p212 = scmp.ne.s32.totalorder %s197, %s211
    %p213 = scmp.eq.s32.totalorder %s30, 0
    %p214 = por %p212, %p213
    %s216 = sadd.s32 %s215, 1
    %p219 = scmp.eq.s32.totalorder %s24, 1
    %p220 = scmp.ne.s32.totalorder %s215, %s217
    %p221 = scmp.eq.s32.totalorder %s24, 0
    %p222 = por %p220, %p221
    %p223 = scmp.ne.s32.totalorder %s215, %s217
    %p224 = scmp.eq.s32.totalorder %s29, 1
    %p225 = por %p223, %p224
    %p226 = scmp.ne.s32.totalorder %s217, %s218
    %p227 = scmp.eq.s32.totalorder %s29, 0
    %p228 = por %p226, %p227
    %p229 = scmp.ne.s32.totalorder %s217, %s218
    %p230 = scmp.eq.s32.totalorder %s30, 1
    %p231 = por %p229, %p230
    %p233 = scmp.ne.s32.totalorder %s218, %s232
    %p234 = scmp.eq.s32.totalorder %s30, 0
    %p235 = por %p233, %p234
    %s237 = sadd.s32 %s236, 1
    %p240 = scmp.eq.s32.totalorder %s24, 1
    %p241 = scmp.ne.s32.totalorder %s236, %s238
    %p242 = scmp.eq.s32.totalorder %s24, 0
    %p243 = por %p241, %p242
    %p244 = scmp.ne.s32.totalorder %s236, %s238
    %p245 = scmp.eq.s32.totalorder %s29, 1
    %p246 = por %p244, %p245
    %p247 = scmp.ne.s32.totalorder %s238, %s239
    %p248 = scmp.eq.s32.totalorder %s29, 0
    %p249 = por %p247, %p248
    %p250 = scmp.ne.s32.totalorder %s238, %s239
    %p251 = scmp.eq.s32.totalorder %s30, 1
    %p252 = por %p250, %p251
    %p254 = scmp.ne.s32.totalorder %s239, %s253
    %p255 = scmp.eq.s32.totalorder %s30, 0
    %p256 = por %p254, %p255
    %s258 = sadd.s32 %s257, 1
    %p261 = scmp.eq.s32.totalorder %s24, 1
    %p262 = scmp.ne.s32.totalorder %s257, %s259
    %p263 = scmp.eq.s32.totalorder %s24, 0
    %p264 = por %p262, %p263
    %p265 = scmp.ne.s32.totalorder %s257, %s259
    %p266 = scmp.eq.s32.totalorder %s29, 1
    %p267 = por %p265, %p266
    %p268 = scmp.ne.s32.totalorder %s259, %s260
    %p269 = scmp.eq.s32.totalorder %s29, 0
    %p270 = por %p268, %p269
    %p271 = scmp.ne.s32.totalorder %s259, %s260
    %p272 = scmp.eq.s32.totalorder %s30, 1
    %p273 = por %p271, %p272
    %p275 = scmp.ne.s32.totalorder %s260, %s274
    %p276 = scmp.eq.s32.totalorder %s30, 0
    %p277 = por %p275, %p276
    %s279 = sadd.s32 %s278, 1
    %p282 = scmp.eq.s32.totalorder %s24, 1
    %p283 = scmp.ne.s32.totalorder %s278, %s280
    %p284 = scmp.eq.s32.totalorder %s24, 0
    %p285 = por %p283, %p284
    %p286 = scmp.ne.s32.totalorder %s278, %s280
    %p287 = scmp.eq.s32.totalorder %s29, 1
    %p288 = por %p286, %p287
    %p289 = scmp.ne.s32.totalorder %s280, %s281
    %p290 = scmp.eq.s32.totalorder %s29, 0
    %p291 = por %p289, %p290
    %p292 = scmp.ne.s32.totalorder %s280, %s281
    %p293 = scmp.eq.s32.totalorder %s30, 1
    %p294 = por %p292, %p293
    %p296 = scmp.ne.s32.totalorder %s281, %s295
    %p297 = scmp.eq.s32.totalorder %s30, 0
    %p298 = por %p296, %p297
    %s300 = sadd.s32 %s299, 1
    %p303 = scmp.eq.s32.totalorder %s24, 1
    %p304 = scmp.ne.s32.totalorder %s299, %s301
    %p305 = scmp.eq.s32.totalorder %s24, 0
    %p306 = por %p304, %p305
    %p307 = scmp.ne.s32.totalorder %s299, %s301
    %p308 = scmp.eq.s32.totalorder %s29, 1
    %p309 = por %p307, %p308
    %p310 = scmp.ne.s32.totalorder %s301, %s302
    %p311 = scmp.eq.s32.totalorder %s29, 0
    %p312 = por %p310, %p311
    %p313 = scmp.ne.s32.totalorder %s301, %s302
    %p314 = scmp.eq.s32.totalorder %s30, 1
    %p315 = por %p313, %p314
    %p317 = scmp.ne.s32.totalorder %s302, %s316
    %p318 = scmp.eq.s32.totalorder %s30, 0
    %p319 = por %p317, %p318
    %s321 = sadd.s32 %s320, 1
    %p324 = scmp.eq.s32.totalorder %s24, 1
    %p325 = scmp.ne.s32.totalorder %s320, %s322
    %p326 = scmp.eq.s32.totalorder %s24, 0
    %p327 = por %p325, %p326
    %p328 = scmp.ne.s32.totalorder %s320, %s322
    %p329 = scmp.eq.s32.totalorder %s29, 1
    %p330 = por %p328, %p329
    %p331 = scmp.ne.s32.totalorder %s322, %s323
    %p332 = scmp.eq.s32.totalorder %s29, 0
    %p333 = por %p331, %p332
    %p334 = scmp.ne.s32.totalorder %s322, %s323
    %p335 = scmp.eq.s32.totalorder %s30, 1
    %p336 = por %p334, %p335
    %p338 = scmp.ne.s32.totalorder %s323, %s337
    %p339 = scmp.eq.s32.totalorder %s30, 0
    %p340 = por %p338, %p339
    %s342 = sadd.s32 %s341, 1
    %p345 = scmp.eq.s32.totalorder %s24, 1
    %p346 = scmp.ne.s32.totalorder %s341, %s343
    %p347 = scmp.eq.s32.totalorder %s24, 0
    %p348 = por %p346, %p347
    %p349 = scmp.ne.s32.totalorder %s341, %s343
    %p350 = scmp.eq.s32.totalorder %s29, 1
    %p351 = por %p349, %p350
    %p352 = scmp.ne.s32.totalorder %s343, %s344
    %p353 = scmp.eq.s32.totalorder %s29, 0
    %p354 = por %p352, %p353
    %p355 = scmp.ne.s32.totalorder %s343, %s344
    %p356 = scmp.eq.s32.totalorder %s30, 1
    %p357 = por %p355, %p356
    %p359 = scmp.ne.s32.totalorder %s344, %s358
    %p360 = scmp.eq.s32.totalorder %s30, 0
    %p361 = por %p359, %p360
    %s363 = sadd.s32 %s362, 1
    %p366 = scmp.eq.s32.totalorder %s24, 1
    %p367 = scmp.ne.s32.totalorder %s362, %s364
    %p368 = scmp.eq.s32.totalorder %s24, 0
    %p369 = por %p367, %p368
    %p370 = scmp.ne.s32.totalorder %s362, %s364
    %p371 = scmp.eq.s32.totalorder %s29, 1
    %p372 = por %p370, %p371
    %p373 = scmp.ne.s32.totalorder %s364, %s365
    %p374 = scmp.eq.s32.totalorder %s29, 0
    %p375 = por %p373, %p374
    %p376 = scmp.ne.s32.totalorder %s364, %s365
    %p377 = scmp.eq.s32.totalorder %s30, 1
    %p378 = por %p376, %p377
    %p380 = scmp.ne.s32.totalorder %s365, %s379
    %p381 = scmp.eq.s32.totalorder %s30, 0
    %p382 = por %p380, %p381
    %s384 = sadd.s32 %s383, 1
    %p387 = scmp.eq.s32.totalorder %s24, 1
    %p388 = scmp.ne.s32.totalorder %s383, %s385
    %p389 = scmp.eq.s32.totalorder %s24, 0
    %p390 = por %p388, %p389
    %p391 = scmp.ne.s32.totalorder %s383, %s385
    %p392 = scmp.eq.s32.totalorder %s29, 1
    %p393 = por %p391, %p392
    %p394 = scmp.ne.s32.totalorder %s385, %s386
    %p395 = scmp.eq.s32.totalorder %s29, 0
    %p396 = por %p394, %p395
    %p397 = scmp.ne.s32.totalorder %s385, %s386
    %p398 = scmp.eq.s32.totalorder %s30, 1
    %p399 = por %p397, %p398
    %p401 = scmp.ne.s32.totalorder %s386, %s400
    %p402 = scmp.eq.s32.totalorder %s30, 0
    %p403 = por %p401, %p402
    %s405 = sadd.s32 %s404, 1
    %p408 = scmp.eq.s32.totalorder %s24, 1
    %p409 = scmp.ne.s32.totalorder %s404, %s406
    %p410 = scmp.eq.s32.totalorder %s24, 0
    %p411 = por %p409, %p410
    %p412 = scmp.ne.s32.totalorder %s404, %s406
    %p413 = scmp.eq.s32.totalorder %s29, 1
    %p414 = por %p412, %p413
    %p415 = scmp.ne.s32.totalorder %s406, %s407
    %p416 = scmp.eq.s32.totalorder %s29, 0
    %p417 = por %p415, %p416
    %p418 = scmp.ne.s32.totalorder %s406, %s407
    %p419 = scmp.eq.s32.totalorder %s30, 1
    %p420 = por %p418, %p419
    %p422 = scmp.ne.s32.totalorder %s407, %s421
    %p423 = scmp.eq.s32.totalorder %s30, 0
    %p424 = por %p422, %p423
    %s425 = ssub.s32 %s24, %s31
    %p426 = scmp.eq.s32.totalorder %s425, 0
    %s428 = sadd.s32 %s427, 1
    %s429 = scalar_select %p426, %s427, %s428
    %p432 = pneg %p426
    %p433 = scmp.eq.s32.totalorder %s24, 1
    %p434 = por %p432, %p433
    %p435 = scmp.ne.s32.totalorder %s427, %s430
    %p436 = scmp.eq.s32.totalorder %s24, 0
    %p437 = por %p435, %p436
    %p438 = scmp.ne.s32.totalorder %s427, %s430
    %p439 = scmp.eq.s32.totalorder %s29, 1
    %p440 = por %p438, %p439
    %p441 = scmp.ne.s32.totalorder %s430, %s431
    %p442 = scmp.eq.s32.totalorder %s29, 0
    %p443 = por %p441, %p442
    %p444 = scmp.ne.s32.totalorder %s430, %s431
    %p445 = scmp.eq.s32.totalorder %s30, 1
    %p446 = por %p444, %p445
    %p448 = scmp.ne.s32.totalorder %s431, %s447
    %p449 = scmp.eq.s32.totalorder %s30, 0
    %p450 = por %p448, %p449
    %p451 = scmp.le.s32.totalorder 1, %s24
    %p452 = scmp.lt.s32.totalorder %s24, 3
    %p453 = pnand %p451, %p452
    %p454 = pneg %p453
    // Predicated region
    $region9: #{gcb_forward.1} parent=5 // pred_check
      _
    $region10: #{gcb_forward.1} parent=5 // pred_check_branch
      %456 = sbr.rel (%p453) target = $region12
    $region11: #{gcb_forward.1} parent=5 // pred_region
      %s457 = ssub.s32 %s24, 1
      // Predicated region
      $region13: #{gcb_forward.1} parent=11 // pred_check
        %p458 = pneg %p123
      $region14: #{gcb_forward.1} parent=11 // pred_check_branch
        %460 = sbr.rel (%p458) target = $region16
      $region15: #{gcb_forward.1} parent=11 // pred_region
        _
      $region16: #{gcb_forward.1} parent=11 // pred_fallthru
        _
      // Predicated region
      $region17: #{gcb_forward.1} parent=11 // pred_check
        %p461 = pneg %p144
      $region18: #{gcb_forward.1} parent=11 // pred_check_branch
        %463 = sbr.rel (%p461) target = $region20
      $region19: #{gcb_forward.1} parent=11 // pred_region
        _
      $region20: #{gcb_forward.1} parent=11 // pred_fallthru
        _
      // Predicated region
      $region21: #{gcb_forward.1} parent=11 // pred_check
        %p464 = pneg %p165
      $region22: #{gcb_forward.1} parent=11 // pred_check_branch
        %466 = sbr.rel (%p464) target = $region24
      $region23: #{gcb_forward.1} parent=11 // pred_region
        _
      $region24: #{gcb_forward.1} parent=11 // pred_fallthru
        _
      // Predicated region
      $region25: #{gcb_forward.1} parent=11 // pred_check
        %p467 = pneg %p186
      $region26: #{gcb_forward.1} parent=11 // pred_check_branch
        %469 = sbr.rel (%p467) target = $region28
      $region27: #{gcb_forward.1} parent=11 // pred_region
        _
      $region28: #{gcb_forward.1} parent=11 // pred_fallthru
        _
      // Predicated region
      $region29: #{gcb_forward.1} parent=11 // pred_check
        %p470 = pneg %p207
      $region30: #{gcb_forward.1} parent=11 // pred_check_branch
        %472 = sbr.rel (%p470) target = $region32
      $region31: #{gcb_forward.1} parent=11 // pred_region
        _
      $region32: #{gcb_forward.1} parent=11 // pred_fallthru
        _
      // Predicated region
      $region33: #{gcb_forward.1} parent=11 // pred_check
        %p473 = pneg %p228
      $region34: #{gcb_forward.1} parent=11 // pred_check_branch
        %475 = sbr.rel (%p473) target = $region36
      $region35: #{gcb_forward.1} parent=11 // pred_region
        _
      $region36: #{gcb_forward.1} parent=11 // pred_fallthru
        _
      // Predicated region
      $region37: #{gcb_forward.1} parent=11 // pred_check
        %p476 = pneg %p249
      $region38: #{gcb_forward.1} parent=11 // pred_check_branch
        %478 = sbr.rel (%p476) target = $region40
      $region39: #{gcb_forward.1} parent=11 // pred_region
        _
      $region40: #{gcb_forward.1} parent=11 // pred_fallthru
        _
      // Predicated region
      $region41: #{gcb_forward.1} parent=11 // pred_check
        %p479 = pneg %p270
      $region42: #{gcb_forward.1} parent=11 // pred_check_branch
        %481 = sbr.rel (%p479) target = $region44
      $region43: #{gcb_forward.1} parent=11 // pred_region
        _
      $region44: #{gcb_forward.1} parent=11 // pred_fallthru
        _
      // Predicated region
      $region45: #{gcb_forward.1} parent=11 // pred_check
        %p482 = pneg %p291
      $region46: #{gcb_forward.1} parent=11 // pred_check_branch
        %484 = sbr.rel (%p482) target = $region48
      $region47: #{gcb_forward.1} parent=11 // pred_region
        _
      $region48: #{gcb_forward.1} parent=11 // pred_fallthru
        _
      // Predicated region
      $region49: #{gcb_forward.1} parent=11 // pred_check
        %p485 = pneg %p312
      $region50: #{gcb_forward.1} parent=11 // pred_check_branch
        %487 = sbr.rel (%p485) target = $region52
      $region51: #{gcb_forward.1} parent=11 // pred_region
        _
      $region52: #{gcb_forward.1} parent=11 // pred_fallthru
        _
      // Predicated region
      $region53: #{gcb_forward.1} parent=11 // pred_check
        %p488 = pneg %p333
      $region54: #{gcb_forward.1} parent=11 // pred_check_branch
        %490 = sbr.rel (%p488) target = $region56
      $region55: #{gcb_forward.1} parent=11 // pred_region
        _
      $region56: #{gcb_forward.1} parent=11 // pred_fallthru
        _
      // Predicated region
      $region57: #{gcb_forward.1} parent=11 // pred_check
        %p491 = pneg %p354
      $region58: #{gcb_forward.1} parent=11 // pred_check_branch
        %493 = sbr.rel (%p491) target = $region60
      $region59: #{gcb_forward.1} parent=11 // pred_region
        _
      $region60: #{gcb_forward.1} parent=11 // pred_fallthru
        _
      // Predicated region
      $region61: #{gcb_forward.1} parent=11 // pred_check
        %p494 = pneg %p375
      $region62: #{gcb_forward.1} parent=11 // pred_check_branch
        %496 = sbr.rel (%p494) target = $region64
      $region63: #{gcb_forward.1} parent=11 // pred_region
        _
      $region64: #{gcb_forward.1} parent=11 // pred_fallthru
        _
      // Predicated region
      $region65: #{gcb_forward.1} parent=11 // pred_check
        %p497 = pneg %p396
      $region66: #{gcb_forward.1} parent=11 // pred_check_branch
        %499 = sbr.rel (%p497) target = $region68
      $region67: #{gcb_forward.1} parent=11 // pred_region
        _
      $region68: #{gcb_forward.1} parent=11 // pred_fallthru
        _
      // Predicated region
      $region69: #{gcb_forward.1} parent=11 // pred_check
        %p500 = pneg %p417
      $region70: #{gcb_forward.1} parent=11 // pred_check_branch
        %502 = sbr.rel (%p500) target = $region72
      $region71: #{gcb_forward.1} parent=11 // pred_region
        _
      $region72: #{gcb_forward.1} parent=11 // pred_fallthru
        _
    $region12: #{gcb_forward.1} parent=5 // pred_fallthru
      _
    %p503 = scmp.lt.s32.totalorder %s24, 2
    // Predicated region
    $region73: #{gcb_forward.1} parent=5 // pred_check
      %p504 = pneg %p503
    $region74: #{gcb_forward.1} parent=5 // pred_check_branch
      %506 = sbr.rel (%p504) target = $region76
    $region75: #{gcb_forward.1} parent=5 // pred_region
      // Predicated region
      $region77: #{gcb_forward.1} parent=75 // pred_check
        %p507 = pneg %p44
      $region78: #{gcb_forward.1} parent=75 // pred_check_branch
        %509 = sbr.rel (%p507) target = $region80
      $region79: #{gcb_forward.1} parent=75 // pred_region
        %p510 = scmp.lt.s32.totalorder %s24, 1
        %s511 = scalar_select %p510, %s24, 1
        %s512 = smul.addr %s511, 32
        %s513 = smul.addr %s512, 4
        %s514 = scalar_lea.vmem %s0, %s513
      $region80: #{gcb_forward.1} parent=75 // pred_fallthru
        _
      // Predicated region
      $region81: #{gcb_forward.1} parent=75 // pred_check
        %p515 = pneg %p70
      $region82: #{gcb_forward.1} parent=75 // pred_check_branch
        %517 = sbr.rel (%p515) target = $region84
      $region83: #{gcb_forward.1} parent=75 // pred_region
        %p518 = scmp.lt.s32.totalorder %s24, 1
        %s519 = scalar_select %p518, %s24, 1
        %s520 = smul.addr %s519, 32
        %s521 = smul.addr %s520, 4
        %s522 = scalar_lea.vmem %s1, %s521
      $region84: #{gcb_forward.1} parent=75 // pred_fallthru
        _
      // Predicated region
      $region85: #{gcb_forward.1} parent=75 // pred_check
        %p523 = pneg %p96
      $region86: #{gcb_forward.1} parent=75 // pred_check_branch
        %525 = sbr.rel (%p523) target = $region88
      $region87: #{gcb_forward.1} parent=75 // pred_region
        %p526 = scmp.lt.s32.totalorder %s24, 1
        %s527 = scalar_select %p526, %s24, 1
        %s528 = scalar_lea.vmem %s2, %s527
      $region88: #{gcb_forward.1} parent=75 // pred_fallthru
        _
    $region76: #{gcb_forward.1} parent=5 // pred_fallthru
      _
    %p529 = scmp.le.s32.totalorder 1, %s24
    %p530 = scmp.lt.s32.totalorder %s24, 3
    %p531 = pnand %p529, %p530
    %p532 = pneg %p531
    // Predicated region
    $region89: #{gcb_forward.1} parent=5 // pred_check
      _
    $region90: #{gcb_forward.1} parent=5 // pred_check_branch
      %534 = sbr.rel (%p531) target = $region92
    $region91: #{gcb_forward.1} parent=5 // pred_region
      %s535 = ssub.s32 %s24, 1
      %p536 = scmp.lt.s32.totalorder %s29, 1
      %s537 = scalar_select %p536, %s29, 1
      %s538 = smul.addr %s537, 32
      %s539 = smul.addr %s538, 4
      %s540 = scalar_lea.vmem %s0, %s539
      %p541 = pneg %p50
      %p542 = pneg %p47
      %p543 = scmp.lt.s32.totalorder %s29, 1
      %s544 = scalar_select %p543, %s29, 1
      %s545 = smul.addr %s544, 32
      %s546 = smul.addr %s545, 4
      %s547 = scalar_lea.vmem %s1, %s546
      %p548 = pneg %p76
      %p549 = pneg %p73
      %p550 = scmp.lt.s32.totalorder %s29, 1
      %s551 = scalar_select %p550, %s29, 1
      %s552 = scalar_lea.vmem %s2, %s551
      %p553 = pneg %p102
      %p554 = pneg %p99
      %p555 = pneg %p123
      %p556 = pneg %p120
      %p557 = pneg %p144
      %p558 = pneg %p141
      %p559 = pneg %p165
      %p560 = pneg %p162
      %p561 = pneg %p186
      %p562 = pneg %p183
      %p563 = pneg %p207
      %p564 = pneg %p204
      %p565 = pneg %p228
      %p566 = pneg %p225
      %p567 = pneg %p249
      %p568 = pneg %p246
      %p569 = pneg %p270
      %p570 = pneg %p267
      %p571 = pneg %p291
      %p572 = pneg %p288
      %p573 = pneg %p312
      %p574 = pneg %p309
      %p575 = pneg %p333
      %p576 = pneg %p330
      %p577 = pneg %p354
      %p578 = pneg %p351
      %p579 = pneg %p375
      %p580 = pneg %p372
      %p581 = pneg %p396
      %p582 = pneg %p393
      %p583 = pneg %p417
      %p584 = pneg %p414
      %p585 = pneg %p443
      %p586 = pneg %p440
      %p587 = scmp.lt.s32.totalorder %s29, 1
      %s588 = scalar_select %p587, %s29, 1
      %s589 = smul.addr %s588, 32
      %s590 = smul.addr %s589, 8
      %s591 = scalar_lea.vmem %s18, %s590
      %p592 = scmp.lt.s32.totalorder %s29, 1
      %s593 = scalar_select %p592, %s29, 1
      %s594 = smul.addr %s593, 32
      %s595 = smul.addr %s594, 4
      %s596 = scalar_lea.vmem %s0, %s595
      %p597 = scmp.lt.s32.totalorder %s29, 1
      %s598 = scalar_select %p597, %s29, 1
      %s599 = smul.addr %s598, 32
      %s600 = smul.addr %s599, 4
      %s601 = scalar_lea.vmem %s1, %s600
      %p602 = scmp.lt.s32.totalorder %s29, 1
      %s603 = scalar_select %p602, %s29, 1
      %s604 = scalar_lea.vmem %s2, %s603
      %p605 = scmp.lt.s32.totalorder %s29, 1
      %s606 = scalar_select %p605, %s29, 1
      %s607 = smul.addr %s606, 32
      %s608 = smul.addr %s607, 8
      %s609 = scalar_lea.vmem %s18, %s608
      %v611 = vld [vmem:[%s596] sm:$0xf]
      %v612 = vld [vmem:[%s596 + $0x4] sm:$0xf]
      %v613 = vld [vmem:[%s596 + $0x8] sm:$0xf]
      %v614 = vld [vmem:[%s596 + $0xc] sm:$0xf]
      %v615 = vld [vmem:[%s596 + $0x10] sm:$0xf]
      %v616 = vld [vmem:[%s596 + $0x14] sm:$0xf]
      %v617 = vld [vmem:[%s596 + $0x18] sm:$0xf]
      %v618 = vld [vmem:[%s596 + $0x1c] sm:$0xf]
      %v619 = vld [vmem:[%s596 + $0x20] sm:$0xf]
      %v620 = vld [vmem:[%s596 + $0x24] sm:$0xf]
      %v621 = vld [vmem:[%s596 + $0x28] sm:$0xf]
      %v622 = vld [vmem:[%s596 + $0x2c] sm:$0xf]
      %v623 = vld [vmem:[%s596 + $0x30] sm:$0xf]
      %v624 = vld [vmem:[%s596 + $0x34] sm:$0xf]
      %v625 = vld [vmem:[%s596 + $0x38] sm:$0xf]
      %v626 = vld [vmem:[%s596 + $0x3c] sm:$0xf]
      %v627 = vld [vmem:[%s596 + $0x40] sm:$0xf]
      %v628 = vld [vmem:[%s596 + $0x44] sm:$0xf]
      %v629 = vld [vmem:[%s596 + $0x48] sm:$0xf]
      %v630 = vld [vmem:[%s596 + $0x4c] sm:$0xf]
      %v631 = vld [vmem:[%s596 + $0x50] sm:$0xf]
      %v632 = vld [vmem:[%s596 + $0x54] sm:$0xf]
      %v633 = vld [vmem:[%s596 + $0x58] sm:$0xf]
      %v634 = vld [vmem:[%s596 + $0x5c] sm:$0xf]
      %v635 = vld [vmem:[%s596 + $0x60] sm:$0xf]
      %v636 = vld [vmem:[%s596 + $0x64] sm:$0xf]
      %v637 = vld [vmem:[%s596 + $0x68] sm:$0xf]
      %v638 = vld [vmem:[%s596 + $0x6c] sm:$0xf]
      %v639 = vld [vmem:[%s596 + $0x70] sm:$0xf]
      %v640 = vld [vmem:[%s596 + $0x74] sm:$0xf]
      %v641 = vld [vmem:[%s596 + $0x78] sm:$0xf]
      %v642 = vld [vmem:[%s596 + $0x7c] sm:$0xf]
      %v643 = vunpack.c.l.bf16 %v611
      %v644 = vunpack.c.l.bf16 %v612
      %v645 = vunpack.c.l.bf16 %v613
      %v646 = vunpack.c.l.bf16 %v614
      %v647 = vunpack.c.l.bf16 %v615
      %v648 = vunpack.c.l.bf16 %v616
      %v649 = vunpack.c.l.bf16 %v617
      %v650 = vunpack.c.l.bf16 %v618
      %v651 = vunpack.c.l.bf16 %v619
      %v652 = vunpack.c.l.bf16 %v620
      %v653 = vunpack.c.l.bf16 %v621
      %v654 = vunpack.c.l.bf16 %v622
      %v655 = vunpack.c.l.bf16 %v623
      %v656 = vunpack.c.l.bf16 %v624
      %v657 = vunpack.c.l.bf16 %v625
      %v658 = vunpack.c.l.bf16 %v626
      %v659 = vunpack.c.l.bf16 %v627
      %v660 = vunpack.c.l.bf16 %v628
      %v661 = vunpack.c.l.bf16 %v629
      %v662 = vunpack.c.l.bf16 %v630
      %v663 = vunpack.c.l.bf16 %v631
      %v664 = vunpack.c.l.bf16 %v632
      %v665 = vunpack.c.l.bf16 %v633
      %v666 = vunpack.c.l.bf16 %v634
      %v667 = vunpack.c.l.bf16 %v635
      %v668 = vunpack.c.l.bf16 %v636
      %v669 = vunpack.c.l.bf16 %v637
      %v670 = vunpack.c.l.bf16 %v638
      %v671 = vunpack.c.l.bf16 %v639
      %v672 = vunpack.c.l.bf16 %v640
      %v673 = vunpack.c.l.bf16 %v641
      %v674 = vunpack.c.l.bf16 %v642
      %v675 = vld [vmem:[%s3] sm:$0x1]
      %v677 = vperm.slane %v675, 0
      %v679 = vmul.f32 %v643, %v677
      %v680 = vmul.f32 %v644, %v677
      %v681 = vmul.f32 %v645, %v677
      %v682 = vmul.f32 %v646, %v677
      %v683 = vmul.f32 %v647, %v677
      %v684 = vmul.f32 %v648, %v677
      %v685 = vmul.f32 %v649, %v677
      %v686 = vmul.f32 %v650, %v677
      %v687 = vmul.f32 %v651, %v677
      %v688 = vmul.f32 %v652, %v677
      %v689 = vmul.f32 %v653, %v677
      %v690 = vmul.f32 %v654, %v677
      %v691 = vmul.f32 %v655, %v677
      %v692 = vmul.f32 %v656, %v677
      %v693 = vmul.f32 %v657, %v677
      %v694 = vmul.f32 %v658, %v677
      %v695 = vmul.f32 %v659, %v677
      %v696 = vmul.f32 %v660, %v677
      %v697 = vmul.f32 %v661, %v677
      %v698 = vmul.f32 %v662, %v677
      %v699 = vmul.f32 %v663, %v677
      %v700 = vmul.f32 %v664, %v677
      %v701 = vmul.f32 %v665, %v677
      %v702 = vmul.f32 %v666, %v677
      %v703 = vmul.f32 %v667, %v677
      %v704 = vmul.f32 %v668, %v677
      %v705 = vmul.f32 %v669, %v677
      %v706 = vmul.f32 %v670, %v677
      %v707 = vmul.f32 %v671, %v677
      %v708 = vmul.f32 %v672, %v677
      %v709 = vmul.f32 %v673, %v677
      %v710 = vmul.f32 %v674, %v677
      %v711 = vld [vmem:[%s4] sm:$0x1]
      %v713 = vperm.slane %v711, 0
      %v715 = vadd.f32 %v679, %v713
      %v716 = vadd.f32 %v680, %v713
      %v717 = vadd.f32 %v681, %v713
      %v718 = vadd.f32 %v682, %v713
      %v719 = vadd.f32 %v683, %v713
      %v720 = vadd.f32 %v684, %v713
      %v721 = vadd.f32 %v685, %v713
      %v722 = vadd.f32 %v686, %v713
      %v723 = vadd.f32 %v687, %v713
      %v724 = vadd.f32 %v688, %v713
      %v725 = vadd.f32 %v689, %v713
      %v726 = vadd.f32 %v690, %v713
      %v727 = vadd.f32 %v691, %v713
      %v728 = vadd.f32 %v692, %v713
      %v729 = vadd.f32 %v693, %v713
      %v730 = vadd.f32 %v694, %v713
      %v731 = vadd.f32 %v695, %v713
      %v732 = vadd.f32 %v696, %v713
      %v733 = vadd.f32 %v697, %v713
      %v734 = vadd.f32 %v698, %v713
      %v735 = vadd.f32 %v699, %v713
      %v736 = vadd.f32 %v700, %v713
      %v737 = vadd.f32 %v701, %v713
      %v738 = vadd.f32 %v702, %v713
      %v739 = vadd.f32 %v703, %v713
      %v740 = vadd.f32 %v704, %v713
      %v741 = vadd.f32 %v705, %v713
      %v742 = vadd.f32 %v706, %v713
      %v743 = vadd.f32 %v707, %v713
      %v744 = vadd.f32 %v708, %v713
      %v745 = vadd.f32 %v709, %v713
      %v746 = vadd.f32 %v710, %v713
      %v747 = vmax.f32 %v715, 0.0
      %v748 = vmax.f32 %v716, 0.0
      %v749 = vmax.f32 %v717, 0.0
      %v750 = vmax.f32 %v718, 0.0
      %v751 = vmax.f32 %v719, 0.0
      %v752 = vmax.f32 %v720, 0.0
      %v753 = vmax.f32 %v721, 0.0
      %v754 = vmax.f32 %v722, 0.0
      %v755 = vmax.f32 %v723, 0.0
      %v756 = vmax.f32 %v724, 0.0
      %v757 = vmax.f32 %v725, 0.0
      %v758 = vmax.f32 %v726, 0.0
      %v759 = vmax.f32 %v727, 0.0
      %v760 = vmax.f32 %v728, 0.0
      %v761 = vmax.f32 %v729, 0.0
      %v762 = vmax.f32 %v730, 0.0
      %v763 = vmax.f32 %v731, 0.0
      %v764 = vmax.f32 %v732, 0.0
      %v765 = vmax.f32 %v733, 0.0
      %v766 = vmax.f32 %v734, 0.0
      %v767 = vmax.f32 %v735, 0.0
      %v768 = vmax.f32 %v736, 0.0
      %v769 = vmax.f32 %v737, 0.0
      %v770 = vmax.f32 %v738, 0.0
      %v771 = vmax.f32 %v739, 0.0
      %v772 = vmax.f32 %v740, 0.0
      %v773 = vmax.f32 %v741, 0.0
      %v774 = vmax.f32 %v742, 0.0
      %v775 = vmax.f32 %v743, 0.0
      %v776 = vmax.f32 %v744, 0.0
      %v777 = vmax.f32 %v745, 0.0
      %v778 = vmax.f32 %v746, 0.0
      %v779 = vpack.c.bf16 %v748, %v747
      %v780 = vpack.c.bf16 %v750, %v749
      %v781 = vpack.c.bf16 %v752, %v751
      %v782 = vpack.c.bf16 %v754, %v753
      %v783 = vpack.c.bf16 %v756, %v755
      %v784 = vpack.c.bf16 %v758, %v757
      %v785 = vpack.c.bf16 %v760, %v759
      %v786 = vpack.c.bf16 %v762, %v761
      %v787 = vpack.c.bf16 %v764, %v763
      %v788 = vpack.c.bf16 %v766, %v765
      %v789 = vpack.c.bf16 %v768, %v767
      %v790 = vpack.c.bf16 %v770, %v769
      %v791 = vpack.c.bf16 %v772, %v771
      %v792 = vpack.c.bf16 %v774, %v773
      %v793 = vpack.c.bf16 %v776, %v775
      %v794 = vpack.c.bf16 %v778, %v777
      %v795 = vld [vmem:[%s5] sm:$0xf]
      %v796 = vld [vmem:[%s5 + $0x4] sm:$0xf]
      %v799 = vunpack.c.l.b16 %v795
      %v800 = vunpack.c.l.b16 %v796
      %v801 = vpack.c.b16 %v800, %v799
      %vm803 = vcmask 130048
      %v805 = vsel %vm803, %v779, 0
      %v808 = vsel %vm803, %v780, 0
      %v811 = vsel %vm803, %v781, 0
      %v814 = vsel %vm803, %v782, 0
      %v817 = vsel %vm803, %v783, 0
      %v820 = vsel %vm803, %v784, 0
      %v823 = vsel %vm803, %v785, 0
      %v826 = vsel %vm803, %v786, 0
      %v829 = vsel %vm803, %v787, 0
      %v832 = vsel %vm803, %v788, 0
      %v835 = vsel %vm803, %v789, 0
      %v838 = vsel %vm803, %v790, 0
      %v841 = vsel %vm803, %v791, 0
      %v844 = vsel %vm803, %v792, 0
      %v847 = vsel %vm803, %v793, 0
      %v850 = vsel %vm803, %v794, 0
      %852 = vmatpush.bf16.msra.mxu0 0
      %853 = vmatpush.bf16.msra.mxu0 0
      %854 = vmatpush.bf16.msra.mxu0 0
      %855 = vmatpush.bf16.msra.mxu0 0
      %856 = vmatpush.bf16.msra.mxu0 0
      %857 = vmatpush.bf16.msra.mxu0 0
      %858 = vmatpush.bf16.msra.mxu0 0
      %859 = vmatpush.bf16.msra.mxu0 %v801
      %860 = vmatmul.bf16.gmra.mxu0 %v805
      %v861 = vpop.f32.mrf.mxu0
      %v862 = vadd.f32 0.0, %v861
      %v863 = vpop.f32.mrf.mxu0
      %v864 = vadd.f32 0.0, %v863
      %865 = vmatmul.bf16.gmra.mxu0 %v808
      %v866 = vpop.f32.mrf.mxu0
      %v867 = vadd.f32 0.0, %v866
      %v868 = vpop.f32.mrf.mxu0
      %v869 = vadd.f32 0.0, %v868
      %870 = vmatmul.bf16.gmra.mxu0 %v811
      %v871 = vpop.f32.mrf.mxu0
      %v872 = vadd.f32 0.0, %v871
      %v873 = vpop.f32.mrf.mxu0
      %v874 = vadd.f32 0.0, %v873
      %875 = vmatmul.bf16.gmra.mxu0 %v814
      %v876 = vpop.f32.mrf.mxu0
      %v877 = vadd.f32 0.0, %v876
      %v878 = vpop.f32.mrf.mxu0
      %v879 = vadd.f32 0.0, %v878
      %880 = vmatmul.bf16.gmra.mxu0 %v817
      %v881 = vpop.f32.mrf.mxu0
      %v882 = vadd.f32 0.0, %v881
      %v883 = vpop.f32.mrf.mxu0
      %v884 = vadd.f32 0.0, %v883
      %885 = vmatmul.bf16.gmra.mxu0 %v820
      %v886 = vpop.f32.mrf.mxu0
      %v887 = vadd.f32 0.0, %v886
      %v888 = vpop.f32.mrf.mxu0
      %v889 = vadd.f32 0.0, %v888
      %890 = vmatmul.bf16.gmra.mxu0 %v823
      %v891 = vpop.f32.mrf.mxu0
      %v892 = vadd.f32 0.0, %v891
      %v893 = vpop.f32.mrf.mxu0
      %v894 = vadd.f32 0.0, %v893
      %895 = vmatmul.bf16.gmra.mxu0 %v826
      %v896 = vpop.f32.mrf.mxu0
      %v897 = vadd.f32 0.0, %v896
      %v898 = vpop.f32.mrf.mxu0
      %v899 = vadd.f32 0.0, %v898
      %900 = vmatmul.bf16.gmra.mxu0 %v829
      %v901 = vpop.f32.mrf.mxu0
      %v902 = vadd.f32 0.0, %v901
      %v903 = vpop.f32.mrf.mxu0
      %v904 = vadd.f32 0.0, %v903
      %905 = vmatmul.bf16.gmra.mxu0 %v832
      %v906 = vpop.f32.mrf.mxu0
      %v907 = vadd.f32 0.0, %v906
      %v908 = vpop.f32.mrf.mxu0
      %v909 = vadd.f32 0.0, %v908
      %910 = vmatmul.bf16.gmra.mxu0 %v835
      %v911 = vpop.f32.mrf.mxu0
      %v912 = vadd.f32 0.0, %v911
      %v913 = vpop.f32.mrf.mxu0
      %v914 = vadd.f32 0.0, %v913
      %915 = vmatmul.bf16.gmra.mxu0 %v838
      %v916 = vpop.f32.mrf.mxu0
      %v917 = vadd.f32 0.0, %v916
      %v918 = vpop.f32.mrf.mxu0
      %v919 = vadd.f32 0.0, %v918
      %920 = vmatmul.bf16.gmra.mxu0 %v841
      %v921 = vpop.f32.mrf.mxu0
      %v922 = vadd.f32 0.0, %v921
      %v923 = vpop.f32.mrf.mxu0
      %v924 = vadd.f32 0.0, %v923
      %925 = vmatmul.bf16.gmra.mxu0 %v844
      %v926 = vpop.f32.mrf.mxu0
      %v927 = vadd.f32 0.0, %v926
      %v928 = vpop.f32.mrf.mxu0
      %v929 = vadd.f32 0.0, %v928
      %930 = vmatmul.bf16.gmra.mxu0 %v847
      %v931 = vpop.f32.mrf.mxu0
      %v932 = vadd.f32 0.0, %v931
      %v933 = vpop.f32.mrf.mxu0
      %v934 = vadd.f32 0.0, %v933
      %935 = vmatmul.bf16.gmra.mxu0 %v850
      %v936 = vpop.f32.mrf.mxu0
      %v937 = vadd.f32 0.0, %v936
      %v938 = vpop.f32.mrf.mxu0
      %v939 = vadd.f32 0.0, %v938
      %940 = vdwg.mxu0
      %v941 = vld [vmem:[%s604] sm:$0x1]
      %v943 = vperm.slane %v941, 0
      %v944 = vld [vmem:[%s601] sm:$0xf]
      %v945 = vld [vmem:[%s601 + $0x4] sm:$0xf]
      %v946 = vld [vmem:[%s601 + $0x8] sm:$0xf]
      %v947 = vld [vmem:[%s601 + $0xc] sm:$0xf]
      %v948 = vld [vmem:[%s601 + $0x10] sm:$0xf]
      %v949 = vld [vmem:[%s601 + $0x14] sm:$0xf]
      %v950 = vld [vmem:[%s601 + $0x18] sm:$0xf]
      %v951 = vld [vmem:[%s601 + $0x1c] sm:$0xf]
      %v952 = vld [vmem:[%s601 + $0x20] sm:$0xf]
      %v953 = vld [vmem:[%s601 + $0x24] sm:$0xf]
      %v954 = vld [vmem:[%s601 + $0x28] sm:$0xf]
      %v955 = vld [vmem:[%s601 + $0x2c] sm:$0xf]
      %v956 = vld [vmem:[%s601 + $0x30] sm:$0xf]
      %v957 = vld [vmem:[%s601 + $0x34] sm:$0xf]
      %v958 = vld [vmem:[%s601 + $0x38] sm:$0xf]
      %v959 = vld [vmem:[%s601 + $0x3c] sm:$0xf]
      %v960 = vld [vmem:[%s601 + $0x40] sm:$0xf]
      %v961 = vld [vmem:[%s601 + $0x44] sm:$0xf]
      %v962 = vld [vmem:[%s601 + $0x48] sm:$0xf]
      %v963 = vld [vmem:[%s601 + $0x4c] sm:$0xf]
      %v964 = vld [vmem:[%s601 + $0x50] sm:$0xf]
      %v965 = vld [vmem:[%s601 + $0x54] sm:$0xf]
      %v966 = vld [vmem:[%s601 + $0x58] sm:$0xf]
      %v967 = vld [vmem:[%s601 + $0x5c] sm:$0xf]
      %v968 = vld [vmem:[%s601 + $0x60] sm:$0xf]
      %v969 = vld [vmem:[%s601 + $0x64] sm:$0xf]
      %v970 = vld [vmem:[%s601 + $0x68] sm:$0xf]
      %v971 = vld [vmem:[%s601 + $0x6c] sm:$0xf]
      %v972 = vld [vmem:[%s601 + $0x70] sm:$0xf]
      %v973 = vld [vmem:[%s601 + $0x74] sm:$0xf]
      %v974 = vld [vmem:[%s601 + $0x78] sm:$0xf]
      %v975 = vld [vmem:[%s601 + $0x7c] sm:$0xf]
      %v976 = vunpack.c.l.bf16 %v944
      %v977 = vunpack.c.l.bf16 %v945
      %v978 = vunpack.c.l.bf16 %v946
      %v979 = vunpack.c.l.bf16 %v947
      %v980 = vunpack.c.l.bf16 %v948
      %v981 = vunpack.c.l.bf16 %v949
      %v982 = vunpack.c.l.bf16 %v950
      %v983 = vunpack.c.l.bf16 %v951
      %v984 = vunpack.c.l.bf16 %v952
      %v985 = vunpack.c.l.bf16 %v953
      %v986 = vunpack.c.l.bf16 %v954
      %v987 = vunpack.c.l.bf16 %v955
      %v988 = vunpack.c.l.bf16 %v956
      %v989 = vunpack.c.l.bf16 %v957
      %v990 = vunpack.c.l.bf16 %v958
      %v991 = vunpack.c.l.bf16 %v959
      %v992 = vunpack.c.l.bf16 %v960
      %v993 = vunpack.c.l.bf16 %v961
      %v994 = vunpack.c.l.bf16 %v962
      %v995 = vunpack.c.l.bf16 %v963
      %v996 = vunpack.c.l.bf16 %v964
      %v997 = vunpack.c.l.bf16 %v965
      %v998 = vunpack.c.l.bf16 %v966
      %v999 = vunpack.c.l.bf16 %v967
      %v1000 = vunpack.c.l.bf16 %v968
      %v1001 = vunpack.c.l.bf16 %v969
      %v1002 = vunpack.c.l.bf16 %v970
      %v1003 = vunpack.c.l.bf16 %v971
      %v1004 = vunpack.c.l.bf16 %v972
      %v1005 = vunpack.c.l.bf16 %v973
      %v1006 = vunpack.c.l.bf16 %v974
      %v1007 = vunpack.c.l.bf16 %v975
      %1008 = vrot.lane.b32.xlu0 %v943, 24
      %v1009 = vpop.permute.xlu0 %1008
      %vm1011 = vcmask 195584
      %v1012 = vsel %vm1011, %v976, %v1009
      %v1013 = vsel %vm1011, %v977, %v1009
      %v1014 = vsel %vm1011, %v978, %v1009
      %v1015 = vsel %vm1011, %v979, %v1009
      %v1016 = vsel %vm1011, %v980, %v1009
      %v1017 = vsel %vm1011, %v981, %v1009
      %v1018 = vsel %vm1011, %v982, %v1009
      %v1019 = vsel %vm1011, %v983, %v1009
      %v1020 = vsel %vm1011, %v984, %v1009
      %v1021 = vsel %vm1011, %v985, %v1009
      %v1022 = vsel %vm1011, %v986, %v1009
      %v1023 = vsel %vm1011, %v987, %v1009
      %v1024 = vsel %vm1011, %v988, %v1009
      %v1025 = vsel %vm1011, %v989, %v1009
      %v1026 = vsel %vm1011, %v990, %v1009
      %v1027 = vsel %vm1011, %v991, %v1009
      %v1028 = vsel %vm1011, %v992, %v1009
      %v1029 = vsel %vm1011, %v993, %v1009
      %v1030 = vsel %vm1011, %v994, %v1009
      %v1031 = vsel %vm1011, %v995, %v1009
      %v1032 = vsel %vm1011, %v996, %v1009
      %v1033 = vsel %vm1011, %v997, %v1009
      %v1034 = vsel %vm1011, %v998, %v1009
      %v1035 = vsel %vm1011, %v999, %v1009
      %v1036 = vsel %vm1011, %v1000, %v1009
      %v1037 = vsel %vm1011, %v1001, %v1009
      %v1038 = vsel %vm1011, %v1002, %v1009
      %v1039 = vsel %vm1011, %v1003, %v1009
      %v1040 = vsel %vm1011, %v1004, %v1009
      %v1041 = vsel %vm1011, %v1005, %v1009
      %v1042 = vsel %vm1011, %v1006, %v1009
      %v1043 = vsel %vm1011, %v1007, %v1009
      %v1044 = vadd.f32 %v1012, %v862
      %v1045 = vadd.f32 %v1013, %v864
      %v1046 = vadd.f32 %v1014, %v867
      %v1047 = vadd.f32 %v1015, %v869
      %v1048 = vadd.f32 %v1016, %v872
      %v1049 = vadd.f32 %v1017, %v874
      %v1050 = vadd.f32 %v1018, %v877
      %v1051 = vadd.f32 %v1019, %v879
      %v1052 = vadd.f32 %v1020, %v882
      %v1053 = vadd.f32 %v1021, %v884
      %v1054 = vadd.f32 %v1022, %v887
      %v1055 = vadd.f32 %v1023, %v889
      %v1056 = vadd.f32 %v1024, %v892
      %v1057 = vadd.f32 %v1025, %v894
      %v1058 = vadd.f32 %v1026, %v897
      %v1059 = vadd.f32 %v1027, %v899
      %v1060 = vadd.f32 %v1028, %v902
      %v1061 = vadd.f32 %v1029, %v904
      %v1062 = vadd.f32 %v1030, %v907
      %v1063 = vadd.f32 %v1031, %v909
      %v1064 = vadd.f32 %v1032, %v912
      %v1065 = vadd.f32 %v1033, %v914
      %v1066 = vadd.f32 %v1034, %v917
      %v1067 = vadd.f32 %v1035, %v919
      %v1068 = vadd.f32 %v1036, %v922
      %v1069 = vadd.f32 %v1037, %v924
      %v1070 = vadd.f32 %v1038, %v927
      %v1071 = vadd.f32 %v1039, %v929
      %v1072 = vadd.f32 %v1040, %v932
      %v1073 = vadd.f32 %v1041, %v934
      %v1074 = vadd.f32 %v1042, %v937
      %v1075 = vadd.f32 %v1043, %v939
      %v1076 = vld [vmem:[%s6] sm:$0x1]
      %v1078 = vperm.slane %v1076, 0
      %v1080 = vmul.f32 %v1044, %v1078
      %v1081 = vmul.f32 %v1045, %v1078
      %v1082 = vmul.f32 %v1046, %v1078
      %v1083 = vmul.f32 %v1047, %v1078
      %v1084 = vmul.f32 %v1048, %v1078
      %v1085 = vmul.f32 %v1049, %v1078
      %v1086 = vmul.f32 %v1050, %v1078
      %v1087 = vmul.f32 %v1051, %v1078
      %v1088 = vmul.f32 %v1052, %v1078
      %v1089 = vmul.f32 %v1053, %v1078
      %v1090 = vmul.f32 %v1054, %v1078
      %v1091 = vmul.f32 %v1055, %v1078
      %v1092 = vmul.f32 %v1056, %v1078
      %v1093 = vmul.f32 %v1057, %v1078
      %v1094 = vmul.f32 %v1058, %v1078
      %v1095 = vmul.f32 %v1059, %v1078
      %v1096 = vmul.f32 %v1060, %v1078
      %v1097 = vmul.f32 %v1061, %v1078
      %v1098 = vmul.f32 %v1062, %v1078
      %v1099 = vmul.f32 %v1063, %v1078
      %v1100 = vmul.f32 %v1064, %v1078
      %v1101 = vmul.f32 %v1065, %v1078
      %v1102 = vmul.f32 %v1066, %v1078
      %v1103 = vmul.f32 %v1067, %v1078
      %v1104 = vmul.f32 %v1068, %v1078
      %v1105 = vmul.f32 %v1069, %v1078
      %v1106 = vmul.f32 %v1070, %v1078
      %v1107 = vmul.f32 %v1071, %v1078
      %v1108 = vmul.f32 %v1072, %v1078
      %v1109 = vmul.f32 %v1073, %v1078
      %v1110 = vmul.f32 %v1074, %v1078
      %v1111 = vmul.f32 %v1075, %v1078
      %v1112 = vld [vmem:[%s7] sm:$0x1]
      %v1114 = vperm.slane %v1112, 0
      %v1116 = vadd.f32 %v1080, %v1114
      %v1117 = vadd.f32 %v1081, %v1114
      %v1118 = vadd.f32 %v1082, %v1114
      %v1119 = vadd.f32 %v1083, %v1114
      %v1120 = vadd.f32 %v1084, %v1114
      %v1121 = vadd.f32 %v1085, %v1114
      %v1122 = vadd.f32 %v1086, %v1114
      %v1123 = vadd.f32 %v1087, %v1114
      %v1124 = vadd.f32 %v1088, %v1114
      %v1125 = vadd.f32 %v1089, %v1114
      %v1126 = vadd.f32 %v1090, %v1114
      %v1127 = vadd.f32 %v1091, %v1114
      %v1128 = vadd.f32 %v1092, %v1114
      %v1129 = vadd.f32 %v1093, %v1114
      %v1130 = vadd.f32 %v1094, %v1114
      %v1131 = vadd.f32 %v1095, %v1114
      %v1132 = vadd.f32 %v1096, %v1114
      %v1133 = vadd.f32 %v1097, %v1114
      %v1134 = vadd.f32 %v1098, %v1114
      %v1135 = vadd.f32 %v1099, %v1114
      %v1136 = vadd.f32 %v1100, %v1114
      %v1137 = vadd.f32 %v1101, %v1114
      %v1138 = vadd.f32 %v1102, %v1114
      %v1139 = vadd.f32 %v1103, %v1114
      %v1140 = vadd.f32 %v1104, %v1114
      %v1141 = vadd.f32 %v1105, %v1114
      %v1142 = vadd.f32 %v1106, %v1114
      %v1143 = vadd.f32 %v1107, %v1114
      %v1144 = vadd.f32 %v1108, %v1114
      %v1145 = vadd.f32 %v1109, %v1114
      %v1146 = vadd.f32 %v1110, %v1114
      %v1147 = vadd.f32 %v1111, %v1114
      %v1148 = vmax.f32 %v1116, 0.0
      %v1149 = vmax.f32 %v1117, 0.0
      %v1150 = vmax.f32 %v1118, 0.0
      %v1151 = vmax.f32 %v1119, 0.0
      %v1152 = vmax.f32 %v1120, 0.0
      %v1153 = vmax.f32 %v1121, 0.0
      %v1154 = vmax.f32 %v1122, 0.0
      %v1155 = vmax.f32 %v1123, 0.0
      %v1156 = vmax.f32 %v1124, 0.0
      %v1157 = vmax.f32 %v1125, 0.0
      %v1158 = vmax.f32 %v1126, 0.0
      %v1159 = vmax.f32 %v1127, 0.0
      %v1160 = vmax.f32 %v1128, 0.0
      %v1161 = vmax.f32 %v1129, 0.0
      %v1162 = vmax.f32 %v1130, 0.0
      %v1163 = vmax.f32 %v1131, 0.0
      %v1164 = vmax.f32 %v1132, 0.0
      %v1165 = vmax.f32 %v1133, 0.0
      %v1166 = vmax.f32 %v1134, 0.0
      %v1167 = vmax.f32 %v1135, 0.0
      %v1168 = vmax.f32 %v1136, 0.0
      %v1169 = vmax.f32 %v1137, 0.0
      %v1170 = vmax.f32 %v1138, 0.0
      %v1171 = vmax.f32 %v1139, 0.0
      %v1172 = vmax.f32 %v1140, 0.0
      %v1173 = vmax.f32 %v1141, 0.0
      %v1174 = vmax.f32 %v1142, 0.0
      %v1175 = vmax.f32 %v1143, 0.0
      %v1176 = vmax.f32 %v1144, 0.0
      %v1177 = vmax.f32 %v1145, 0.0
      %v1178 = vmax.f32 %v1146, 0.0
      %v1179 = vmax.f32 %v1147, 0.0
      %v1180 = vpack.c.bf16 %v1148, %v1148
      %v1181 = vpack.c.bf16 %v1149, %v1149
      %v1182 = vpack.c.bf16 %v1150, %v1150
      %v1183 = vpack.c.bf16 %v1151, %v1151
      %v1184 = vpack.c.bf16 %v1152, %v1152
      %v1185 = vpack.c.bf16 %v1153, %v1153
      %v1186 = vpack.c.bf16 %v1154, %v1154
      %v1187 = vpack.c.bf16 %v1155, %v1155
      %v1188 = vpack.c.bf16 %v1156, %v1156
      %v1189 = vpack.c.bf16 %v1157, %v1157
      %v1190 = vpack.c.bf16 %v1158, %v1158
      %v1191 = vpack.c.bf16 %v1159, %v1159
      %v1192 = vpack.c.bf16 %v1160, %v1160
      %v1193 = vpack.c.bf16 %v1161, %v1161
      %v1194 = vpack.c.bf16 %v1162, %v1162
      %v1195 = vpack.c.bf16 %v1163, %v1163
      %v1196 = vpack.c.bf16 %v1164, %v1164
      %v1197 = vpack.c.bf16 %v1165, %v1165
      %v1198 = vpack.c.bf16 %v1166, %v1166
      %v1199 = vpack.c.bf16 %v1167, %v1167
      %v1200 = vpack.c.bf16 %v1168, %v1168
      %v1201 = vpack.c.bf16 %v1169, %v1169
      %v1202 = vpack.c.bf16 %v1170, %v1170
      %v1203 = vpack.c.bf16 %v1171, %v1171
      %v1204 = vpack.c.bf16 %v1172, %v1172
      %v1205 = vpack.c.bf16 %v1173, %v1173
      %v1206 = vpack.c.bf16 %v1174, %v1174
      %v1207 = vpack.c.bf16 %v1175, %v1175
      %v1208 = vpack.c.bf16 %v1176, %v1176
      %v1209 = vpack.c.bf16 %v1177, %v1177
      %v1210 = vpack.c.bf16 %v1178, %v1178
      %v1211 = vpack.c.bf16 %v1179, %v1179
      %vm1212 = vcmask 257024
      %1213 = vst.msk [vmem:[#allocation2] sm:$0xf] %vm1212, 0
      %1214 = vst.msk [vmem:[#allocation2 + $0x4] sm:$0xf] %vm1212, 0
      %vm1215 = vcmask 253952
      %1216 = vst.msk [vmem:[#allocation2 + $0x8] sm:$0x1] %vm1215, 0
      %1217 = vst.msk [vmem:[#allocation2 + $0xc] sm:$0xf] %vm1212, 0
      %1218 = vst.msk [vmem:[#allocation2 + $0x10] sm:$0xf] %vm1212, 0
      %1219 = vst.msk [vmem:[#allocation2 + $0x14] sm:$0x1] %vm1215, 0
      %1220 = vst.msk [vmem:[#allocation2 + $0x18] sm:$0xf] %vm1212, 0
      %1221 = vst.msk [vmem:[#allocation2 + $0x1c] sm:$0xf] %vm1212, 0
      %1222 = vst.msk [vmem:[#allocation2 + $0x20] sm:$0x1] %vm1215, 0
      %1223 = vst.msk [vmem:[#allocation2 + $0x24] sm:$0xf] %vm1212, 0
      %1224 = vst.msk [vmem:[#allocation2 + $0x28] sm:$0xf] %vm1212, 0
      %1225 = vst.msk [vmem:[#allocation2 + $0x2c] sm:$0x1] %vm1215, 0
      %1226 = vst.msk [vmem:[#allocation2 + $0x30] sm:$0xf] %vm1212, 0
      %1227 = vst.msk [vmem:[#allocation2 + $0x34] sm:$0xf] %vm1212, 0
      %1228 = vst.msk [vmem:[#allocation2 + $0x38] sm:$0x1] %vm1215, 0
      %1229 = vst.msk [vmem:[#allocation2 + $0x3c] sm:$0xf] %vm1212, 0
      %1230 = vst.msk [vmem:[#allocation2 + $0x40] sm:$0xf] %vm1212, 0
      %1231 = vst.msk [vmem:[#allocation2 + $0x44] sm:$0x1] %vm1215, 0
      %1232 = vst.msk [vmem:[#allocation2 + $0x48] sm:$0xf] %vm1212, 0
      %1233 = vst.msk [vmem:[#allocation2 + $0x4c] sm:$0xf] %vm1212, 0
      %1234 = vst.msk [vmem:[#allocation2 + $0x50] sm:$0x1] %vm1215, 0
      %1235 = vst.msk [vmem:[#allocation2 + $0x54] sm:$0xf] %vm1212, 0
      %1236 = vst.msk [vmem:[#allocation2 + $0x58] sm:$0xf] %vm1212, 0
      %1237 = vst.msk [vmem:[#allocation2 + $0x5c] sm:$0x1] %vm1215, 0
      %1238 = vst.msk [vmem:[#allocation2 + $0x60] sm:$0xf] %vm1212, 0
      %1239 = vst.msk [vmem:[#allocation2 + $0x64] sm:$0xf] %vm1212, 0
      %1240 = vst.msk [vmem:[#allocation2 + $0x68] sm:$0x1] %vm1215, 0
      %1241 = vst.msk [vmem:[#allocation2 + $0x6c] sm:$0xf] %vm1212, 0
      %1242 = vst.msk [vmem:[#allocation2 + $0x70] sm:$0xf] %vm1212, 0
      %1243 = vst.msk [vmem:[#allocation2 + $0x74] sm:$0x1] %vm1215, 0
      %1244 = vst.msk [vmem:[#allocation2 + $0x78] sm:$0xf] %vm1212, 0
      %1245 = vst.msk [vmem:[#allocation2 + $0x7c] sm:$0xf] %vm1212, 0
      %1246 = vst.msk [vmem:[#allocation2 + $0x80] sm:$0x1] %vm1215, 0
      %1247 = vst.msk [vmem:[#allocation2 + $0x84] sm:$0xf] %vm1212, 0
      %1248 = vst.msk [vmem:[#allocation2 + $0x88] sm:$0xf] %vm1212, 0
      %1249 = vst.msk [vmem:[#allocation2 + $0x8c] sm:$0x1] %vm1215, 0
      %1250 = vst.msk [vmem:[#allocation2 + $0x90] sm:$0xf] %vm1212, 0
      %1251 = vst.msk [vmem:[#allocation2 + $0x94] sm:$0xf] %vm1212, 0
      %1252 = vst.msk [vmem:[#allocation2 + $0x98] sm:$0x1] %vm1215, 0
      %1253 = vst.msk [vmem:[#allocation2 + $0x9c] sm:$0xf] %vm1212, 0
      %1254 = vst.msk [vmem:[#allocation2 + $0xa0] sm:$0xf] %vm1212, 0
      %1255 = vst.msk [vmem:[#allocation2 + $0xa4] sm:$0x1] %vm1215, 0
      %1256 = vst.msk [vmem:[#allocation2 + $0xa8] sm:$0xf] %vm1212, 0
      %1257 = vst.msk [vmem:[#allocation2 + $0xac] sm:$0xf] %vm1212, 0
      %1258 = vst.msk [vmem:[#allocation2 + $0xb0] sm:$0x1] %vm1215, 0
      %1259 = vst.msk [vmem:[#allocation2 + $0xb4] sm:$0xf] %vm1212, 0
      %1260 = vst.msk [vmem:[#allocation2 + $0xb8] sm:$0xf] %vm1212, 0
      %1261 = vst.msk [vmem:[#allocation2 + $0xbc] sm:$0x1] %vm1215, 0
      %1262 = vst.msk [vmem:[#allocation2 + $0xc0] sm:$0xf] %vm1212, 0
      %1263 = vst.msk [vmem:[#allocation2 + $0xc4] sm:$0xf] %vm1212, 0
      %1264 = vst.msk [vmem:[#allocation2 + $0xc8] sm:$0x1] %vm1215, 0
      %1265 = vst.msk [vmem:[#allocation2 + $0xcc] sm:$0xf] %vm1212, 0
      %1266 = vst.msk [vmem:[#allocation2 + $0xd0] sm:$0xf] %vm1212, 0
      %1267 = vst.msk [vmem:[#allocation2 + $0xd4] sm:$0x1] %vm1215, 0
      %vm1268 = vsmask.f32 256
      %vm1269 = vsmask.f32 4368
      %vm1270 = vmor %vm1268, %vm1269
      %v1272 = vshrl.u32 %v1180, 16
      %v1274 = vrot.slane %v1272, 7
      %v1275 = vshll.u32 %v1180, 16
      %v1277 = vor.u32 %v1274, %v1275
      %v1278 = vrot.slane %v1274, 4
      %v1280 = vshrl.u32 %v1181, 16
      %v1282 = vrot.slane %v1280, 7
      %v1283 = vshll.u32 %v1181, 16
      %v1285 = vor.u32 %v1282, %v1283
      %v1286 = vsel %vm1270, %v1278, %v1285
      %v1287 = vrot.slane %v1282, 4
      %v1289 = vshrl.u32 %v1182, 16
      %v1291 = vrot.slane %v1289, 7
      %v1292 = vshll.u32 %v1182, 16
      %v1294 = vor.u32 %v1291, %v1292
      %v1295 = vrot.slane %v1291, 4
      %v1297 = vshrl.u32 %v1183, 16
      %v1299 = vrot.slane %v1297, 7
      %v1300 = vshll.u32 %v1183, 16
      %v1302 = vor.u32 %v1299, %v1300
      %v1303 = vsel %vm1270, %v1295, %v1302
      %v1304 = vrot.slane %v1299, 4
      %v1306 = vshrl.u32 %v1184, 16
      %v1308 = vrot.slane %v1306, 7
      %v1309 = vshll.u32 %v1184, 16
      %v1311 = vor.u32 %v1308, %v1309
      %v1312 = vrot.slane %v1308, 4
      %v1314 = vshrl.u32 %v1185, 16
      %v1316 = vrot.slane %v1314, 7
      %v1317 = vshll.u32 %v1185, 16
      %v1319 = vor.u32 %v1316, %v1317
      %v1320 = vsel %vm1270, %v1312, %v1319
      %v1321 = vrot.slane %v1316, 4
      %v1323 = vshrl.u32 %v1186, 16
      %v1325 = vrot.slane %v1323, 7
      %v1326 = vshll.u32 %v1186, 16
      %v1328 = vor.u32 %v1325, %v1326
      %v1329 = vrot.slane %v1325, 4
      %v1331 = vshrl.u32 %v1187, 16
      %v1333 = vrot.slane %v1331, 7
      %v1334 = vshll.u32 %v1187, 16
      %v1336 = vor.u32 %v1333, %v1334
      %v1337 = vsel %vm1270, %v1329, %v1336
      %v1338 = vrot.slane %v1333, 4
      %v1340 = vshrl.u32 %v1188, 16
      %v1342 = vrot.slane %v1340, 7
      %v1343 = vshll.u32 %v1188, 16
      %v1345 = vor.u32 %v1342, %v1343
      %v1346 = vrot.slane %v1342, 4
      %v1348 = vshrl.u32 %v1189, 16
      %v1350 = vrot.slane %v1348, 7
      %v1351 = vshll.u32 %v1189, 16
      %v1353 = vor.u32 %v1350, %v1351
      %v1354 = vsel %vm1270, %v1346, %v1353
      %v1355 = vrot.slane %v1350, 4
      %v1357 = vshrl.u32 %v1190, 16
      %v1359 = vrot.slane %v1357, 7
      %v1360 = vshll.u32 %v1190, 16
      %v1362 = vor.u32 %v1359, %v1360
      %v1363 = vrot.slane %v1359, 4
      %v1365 = vshrl.u32 %v1191, 16
      %v1367 = vrot.slane %v1365, 7
      %v1368 = vshll.u32 %v1191, 16
      %v1370 = vor.u32 %v1367, %v1368
      %v1371 = vsel %vm1270, %v1363, %v1370
      %v1372 = vrot.slane %v1367, 4
      %v1374 = vshrl.u32 %v1192, 16
      %v1376 = vrot.slane %v1374, 7
      %v1377 = vshll.u32 %v1192, 16
      %v1379 = vor.u32 %v1376, %v1377
      %v1380 = vrot.slane %v1376, 4
      %v1382 = vshrl.u32 %v1193, 16
      %v1384 = vrot.slane %v1382, 7
      %v1385 = vshll.u32 %v1193, 16
      %v1387 = vor.u32 %v1384, %v1385
      %v1388 = vsel %vm1270, %v1380, %v1387
      %v1389 = vrot.slane %v1384, 4
      %v1391 = vshrl.u32 %v1194, 16
      %v1393 = vrot.slane %v1391, 7
      %v1394 = vshll.u32 %v1194, 16
      %v1396 = vor.u32 %v1393, %v1394
      %v1397 = vrot.slane %v1393, 4
      %v1399 = vshrl.u32 %v1195, 16
      %v1401 = vrot.slane %v1399, 7
      %v1402 = vshll.u32 %v1195, 16
      %v1404 = vor.u32 %v1401, %v1402
      %v1405 = vsel %vm1270, %v1397, %v1404
      %v1406 = vrot.slane %v1401, 4
      %v1408 = vshrl.u32 %v1196, 16
      %v1410 = vrot.slane %v1408, 7
      %v1411 = vshll.u32 %v1196, 16
      %v1413 = vor.u32 %v1410, %v1411
      %v1414 = vrot.slane %v1410, 4
      %v1416 = vshrl.u32 %v1197, 16
      %v1418 = vrot.slane %v1416, 7
      %v1419 = vshll.u32 %v1197, 16
      %v1421 = vor.u32 %v1418, %v1419
      %v1422 = vsel %vm1270, %v1414, %v1421
      %v1423 = vrot.slane %v1418, 4
      %v1425 = vshrl.u32 %v1198, 16
      %v1427 = vrot.slane %v1425, 7
      %v1428 = vshll.u32 %v1198, 16
      %v1430 = vor.u32 %v1427, %v1428
      %v1431 = vrot.slane %v1427, 4
      %v1433 = vshrl.u32 %v1199, 16
      %v1435 = vrot.slane %v1433, 7
      %v1436 = vshll.u32 %v1199, 16
      %v1438 = vor.u32 %v1435, %v1436
      %v1439 = vsel %vm1270, %v1431, %v1438
      %v1440 = vrot.slane %v1435, 4
      %v1442 = vshrl.u32 %v1200, 16
      %v1444 = vrot.slane %v1442, 7
      %v1445 = vshll.u32 %v1200, 16
      %v1447 = vor.u32 %v1444, %v1445
      %v1448 = vrot.slane %v1444, 4
      %v1450 = vshrl.u32 %v1201, 16
      %v1452 = vrot.slane %v1450, 7
      %v1453 = vshll.u32 %v1201, 16
      %v1455 = vor.u32 %v1452, %v1453
      %v1456 = vsel %vm1270, %v1448, %v1455
      %v1457 = vrot.slane %v1452, 4
      %v1459 = vshrl.u32 %v1202, 16
      %v1461 = vrot.slane %v1459, 7
      %v1462 = vshll.u32 %v1202, 16
      %v1464 = vor.u32 %v1461, %v1462
      %v1465 = vrot.slane %v1461, 4
      %v1467 = vshrl.u32 %v1203, 16
      %v1469 = vrot.slane %v1467, 7
      %v1470 = vshll.u32 %v1203, 16
      %v1472 = vor.u32 %v1469, %v1470
      %v1473 = vsel %vm1270, %v1465, %v1472
      %v1474 = vrot.slane %v1469, 4
      %v1476 = vshrl.u32 %v1204, 16
      %v1478 = vrot.slane %v1476, 7
      %v1479 = vshll.u32 %v1204, 16
      %v1481 = vor.u32 %v1478, %v1479
      %v1482 = vrot.slane %v1478, 4
      %v1484 = vshrl.u32 %v1205, 16
      %v1486 = vrot.slane %v1484, 7
      %v1487 = vshll.u32 %v1205, 16
      %v1489 = vor.u32 %v1486, %v1487
      %v1490 = vsel %vm1270, %v1482, %v1489
      %v1491 = vrot.slane %v1486, 4
      %v1493 = vshrl.u32 %v1206, 16
      %v1495 = vrot.slane %v1493, 7
      %v1496 = vshll.u32 %v1206, 16
      %v1498 = vor.u32 %v1495, %v1496
      %v1499 = vrot.slane %v1495, 4
      %v1501 = vshrl.u32 %v1207, 16
      %v1503 = vrot.slane %v1501, 7
      %v1504 = vshll.u32 %v1207, 16
      %v1506 = vor.u32 %v1503, %v1504
      %v1507 = vsel %vm1270, %v1499, %v1506
      %v1508 = vrot.slane %v1503, 4
      %v1510 = vshrl.u32 %v1208, 16
      %v1512 = vrot.slane %v1510, 7
      %v1513 = vshll.u32 %v1208, 16
      %v1515 = vor.u32 %v1512, %v1513
      %v1516 = vrot.slane %v1512, 4
      %v1518 = vshrl.u32 %v1209, 16
      %v1520 = vrot.slane %v1518, 7
      %v1521 = vshll.u32 %v1209, 16
      %v1523 = vor.u32 %v1520, %v1521
      %v1524 = vsel %vm1270, %v1516, %v1523
      %v1525 = vrot.slane %v1520, 4
      %v1527 = vshrl.u32 %v1210, 16
      %v1529 = vrot.slane %v1527, 7
      %v1530 = vshll.u32 %v1210, 16
      %v1532 = vor.u32 %v1529, %v1530
      %v1533 = vrot.slane %v1529, 4
      %v1535 = vshrl.u32 %v1211, 16
      %v1537 = vrot.slane %v1535, 7
      %v1538 = vshll.u32 %v1211, 16
      %v1540 = vor.u32 %v1537, %v1538
      %v1541 = vsel %vm1270, %v1533, %v1540
      %v1542 = vrot.slane %v1537, 4
      %s1591 = scalar_lea.vmem [#allocation2], 12
      %vm1592 = vcmask 257024
      %vm1593 = vsmask.f32 7938
      %vm1594 = vmand %vm1592, %vm1593
      %v1595 = vld [vmem:[%s1591] sm:$0xf]
      %v1596 = vsel %vm1594, %v1277, %v1595
      %1597 = vst [vmem:[%s1591] sm:$0xf] %v1596
      %1598 = vst.msk [vmem:[%s1591 + $0x4] sm:$0xf] %vm1212, %v1286
      %vm1599 = vcmask 253952
      %vm1600 = vmand %vm1599, %vm1268
      %v1601 = vld [vmem:[%s1591 + $0x8] sm:$0x1]
      %v1602 = vsel %vm1600, %v1287, %v1601
      %1603 = vst [vmem:[%s1591 + $0x8] sm:$0x1] %v1602
      %v1604 = vld [vmem:[%s1591 + $0xc] sm:$0xf]
      %v1605 = vsel %vm1594, %v1294, %v1604
      %1606 = vst [vmem:[%s1591 + $0xc] sm:$0xf] %v1605
      %1607 = vst.msk [vmem:[%s1591 + $0x10] sm:$0xf] %vm1212, %v1303
      %v1608 = vld [vmem:[%s1591 + $0x14] sm:$0x1]
      %v1609 = vsel %vm1600, %v1304, %v1608
      %1610 = vst [vmem:[%s1591 + $0x14] sm:$0x1] %v1609
      %v1611 = vld [vmem:[%s1591 + $0x18] sm:$0xf]
      %v1612 = vsel %vm1594, %v1311, %v1611
      %1613 = vst [vmem:[%s1591 + $0x18] sm:$0xf] %v1612
      %1614 = vst.msk [vmem:[%s1591 + $0x1c] sm:$0xf] %vm1212, %v1320
      %v1615 = vld [vmem:[%s1591 + $0x20] sm:$0x1]
      %v1616 = vsel %vm1600, %v1321, %v1615
      %1617 = vst [vmem:[%s1591 + $0x20] sm:$0x1] %v1616
      %v1618 = vld [vmem:[%s1591 + $0x24] sm:$0xf]
      %v1619 = vsel %vm1594, %v1328, %v1618
      %1620 = vst [vmem:[%s1591 + $0x24] sm:$0xf] %v1619
      %1621 = vst.msk [vmem:[%s1591 + $0x28] sm:$0xf] %vm1212, %v1337
      %v1622 = vld [vmem:[%s1591 + $0x2c] sm:$0x1]
      %v1623 = vsel %vm1600, %v1338, %v1622
      %1624 = vst [vmem:[%s1591 + $0x2c] sm:$0x1] %v1623
      %v1625 = vld [vmem:[%s1591 + $0x30] sm:$0xf]
      %v1626 = vsel %vm1594, %v1345, %v1625
      %1627 = vst [vmem:[%s1591 + $0x30] sm:$0xf] %v1626
      %1628 = vst.msk [vmem:[%s1591 + $0x34] sm:$0xf] %vm1212, %v1354
      %v1629 = vld [vmem:[%s1591 + $0x38] sm:$0x1]
      %v1630 = vsel %vm1600, %v1355, %v1629
      %1631 = vst [vmem:[%s1591 + $0x38] sm:$0x1] %v1630
      %v1632 = vld [vmem:[%s1591 + $0x3c] sm:$0xf]
      %v1633 = vsel %vm1594, %v1362, %v1632
      %1634 = vst [vmem:[%s1591 + $0x3c] sm:$0xf] %v1633
      %1635 = vst.msk [vmem:[%s1591 + $0x40] sm:$0xf] %vm1212, %v1371
      %v1636 = vld [vmem:[%s1591 + $0x44] sm:$0x1]
      %v1637 = vsel %vm1600, %v1372, %v1636
      %1638 = vst [vmem:[%s1591 + $0x44] sm:$0x1] %v1637
      %v1639 = vld [vmem:[%s1591 + $0x48] sm:$0xf]
      %v1640 = vsel %vm1594, %v1379, %v1639
      %1641 = vst [vmem:[%s1591 + $0x48] sm:$0xf] %v1640
      %1642 = vst.msk [vmem:[%s1591 + $0x4c] sm:$0xf] %vm1212, %v1388
      %v1643 = vld [vmem:[%s1591 + $0x50] sm:$0x1]
      %v1644 = vsel %vm1600, %v1389, %v1643
      %1645 = vst [vmem:[%s1591 + $0x50] sm:$0x1] %v1644
      %v1646 = vld [vmem:[%s1591 + $0x54] sm:$0xf]
      %v1647 = vsel %vm1594, %v1396, %v1646
      %1648 = vst [vmem:[%s1591 + $0x54] sm:$0xf] %v1647
      %1649 = vst.msk [vmem:[%s1591 + $0x58] sm:$0xf] %vm1212, %v1405
      %v1650 = vld [vmem:[%s1591 + $0x5c] sm:$0x1]
      %v1651 = vsel %vm1600, %v1406, %v1650
      %1652 = vst [vmem:[%s1591 + $0x5c] sm:$0x1] %v1651
      %v1653 = vld [vmem:[%s1591 + $0x60] sm:$0xf]
      %v1654 = vsel %vm1594, %v1413, %v1653
      %1655 = vst [vmem:[%s1591 + $0x60] sm:$0xf] %v1654
      %1656 = vst.msk [vmem:[%s1591 + $0x64] sm:$0xf] %vm1212, %v1422
      %v1657 = vld [vmem:[%s1591 + $0x68] sm:$0x1]
      %v1658 = vsel %vm1600, %v1423, %v1657
      %1659 = vst [vmem:[%s1591 + $0x68] sm:$0x1] %v1658
      %v1660 = vld [vmem:[%s1591 + $0x6c] sm:$0xf]
      %v1661 = vsel %vm1594, %v1430, %v1660
      %1662 = vst [vmem:[%s1591 + $0x6c] sm:$0xf] %v1661
      %1663 = vst.msk [vmem:[%s1591 + $0x70] sm:$0xf] %vm1212, %v1439
      %v1664 = vld [vmem:[%s1591 + $0x74] sm:$0x1]
      %v1665 = vsel %vm1600, %v1440, %v1664
      %1666 = vst [vmem:[%s1591 + $0x74] sm:$0x1] %v1665
      %v1667 = vld [vmem:[%s1591 + $0x78] sm:$0xf]
      %v1668 = vsel %vm1594, %v1447, %v1667
      %1669 = vst [vmem:[%s1591 + $0x78] sm:$0xf] %v1668
      %1670 = vst.msk [vmem:[%s1591 + $0x7c] sm:$0xf] %vm1212, %v1456
      %v1671 = vld [vmem:[%s1591 + $0x80] sm:$0x1]
      %v1672 = vsel %vm1600, %v1457, %v1671
      %1673 = vst [vmem:[%s1591 + $0x80] sm:$0x1] %v1672
      %v1674 = vld [vmem:[%s1591 + $0x84] sm:$0xf]
      %v1675 = vsel %vm1594, %v1464, %v1674
      %1676 = vst [vmem:[%s1591 + $0x84] sm:$0xf] %v1675
      %1677 = vst.msk [vmem:[%s1591 + $0x88] sm:$0xf] %vm1212, %v1473
      %v1678 = vld [vmem:[%s1591 + $0x8c] sm:$0x1]
      %v1679 = vsel %vm1600, %v1474, %v1678
      %1680 = vst [vmem:[%s1591 + $0x8c] sm:$0x1] %v1679
      %v1681 = vld [vmem:[%s1591 + $0x90] sm:$0xf]
      %v1682 = vsel %vm1594, %v1481, %v1681
      %1683 = vst [vmem:[%s1591 + $0x90] sm:$0xf] %v1682
      %1684 = vst.msk [vmem:[%s1591 + $0x94] sm:$0xf] %vm1212, %v1490
      %v1685 = vld [vmem:[%s1591 + $0x98] sm:$0x1]
      %v1686 = vsel %vm1600, %v1491, %v1685
      %1687 = vst [vmem:[%s1591 + $0x98] sm:$0x1] %v1686
      %v1688 = vld [vmem:[%s1591 + $0x9c] sm:$0xf]
      %v1689 = vsel %vm1594, %v1498, %v1688
      %1690 = vst [vmem:[%s1591 + $0x9c] sm:$0xf] %v1689
      %1691 = vst.msk [vmem:[%s1591 + $0xa0] sm:$0xf] %vm1212, %v1507
      %v1692 = vld [vmem:[%s1591 + $0xa4] sm:$0x1]
      %v1693 = vsel %vm1600, %v1508, %v1692
      %1694 = vst [vmem:[%s1591 + $0xa4] sm:$0x1] %v1693
      %v1695 = vld [vmem:[%s1591 + $0xa8] sm:$0xf]
      %v1696 = vsel %vm1594, %v1515, %v1695
      %1697 = vst [vmem:[%s1591 + $0xa8] sm:$0xf] %v1696
      %1698 = vst.msk [vmem:[%s1591 + $0xac] sm:$0xf] %vm1212, %v1524
      %v1699 = vld [vmem:[%s1591 + $0xb0] sm:$0x1]
      %v1700 = vsel %vm1600, %v1525, %v1699
      %1701 = vst [vmem:[%s1591 + $0xb0] sm:$0x1] %v1700
      %v1702 = vld [vmem:[%s1591 + $0xb4] sm:$0xf]
      %v1703 = vsel %vm1594, %v1532, %v1702
      %1704 = vst [vmem:[%s1591 + $0xb4] sm:$0xf] %v1703
      %1705 = vst.msk [vmem:[%s1591 + $0xb8] sm:$0xf] %vm1212, %v1541
      %v1706 = vld [vmem:[%s1591 + $0xbc] sm:$0x1]
      %v1707 = vsel %vm1600, %v1542, %v1706
      %1708 = vst [vmem:[%s1591 + $0xbc] sm:$0x1] %v1707
      %v1709 = vld [vmem:[#allocation2] sm:$0xf]
      %v1710 = vld [vmem:[#allocation2 + $0x4] sm:$0xf]
      %v1711 = vld [vmem:[#allocation2 + $0x8] sm:$0x1]
      %v1712 = vld [vmem:[#allocation2 + $0xc] sm:$0xf]
      %v1713 = vld [vmem:[#allocation2 + $0x10] sm:$0xf]
      %v1714 = vld [vmem:[#allocation2 + $0x14] sm:$0x1]
      %v1715 = vld [vmem:[#allocation2 + $0x18] sm:$0xf]
      %v1716 = vld [vmem:[#allocation2 + $0x1c] sm:$0xf]
      %v1717 = vld [vmem:[#allocation2 + $0x20] sm:$0x1]
      %v1718 = vld [vmem:[#allocation2 + $0x24] sm:$0xf]
      %v1719 = vld [vmem:[#allocation2 + $0x28] sm:$0xf]
      %v1720 = vld [vmem:[#allocation2 + $0x2c] sm:$0x1]
      %v1721 = vld [vmem:[#allocation2 + $0x30] sm:$0xf]
      %v1722 = vld [vmem:[#allocation2 + $0x34] sm:$0xf]
      %v1723 = vld [vmem:[#allocation2 + $0x38] sm:$0x1]
      %v1724 = vld [vmem:[#allocation2 + $0x3c] sm:$0xf]
      %v1725 = vld [vmem:[#allocation2 + $0x40] sm:$0xf]
      %v1726 = vld [vmem:[#allocation2 + $0x44] sm:$0x1]
      %v1727 = vld [vmem:[#allocation2 + $0x48] sm:$0xf]
      %v1728 = vld [vmem:[#allocation2 + $0x4c] sm:$0xf]
      %v1729 = vld [vmem:[#allocation2 + $0x50] sm:$0x1]
      %v1730 = vld [vmem:[#allocation2 + $0x54] sm:$0xf]
      %v1731 = vld [vmem:[#allocation2 + $0x58] sm:$0xf]
      %v1732 = vld [vmem:[#allocation2 + $0x5c] sm:$0x1]
      %v1733 = vld [vmem:[#allocation2 + $0x60] sm:$0xf]
      %v1734 = vld [vmem:[#allocation2 + $0x64] sm:$0xf]
      %v1735 = vld [vmem:[#allocation2 + $0x68] sm:$0x1]
      %v1736 = vld [vmem:[#allocation2 + $0x6c] sm:$0xf]
      %v1737 = vld [vmem:[#allocation2 + $0x70] sm:$0xf]
      %v1738 = vld [vmem:[#allocation2 + $0x74] sm:$0x1]
      %v1739 = vld [vmem:[#allocation2 + $0x78] sm:$0xf]
      %v1740 = vld [vmem:[#allocation2 + $0x7c] sm:$0xf]
      %v1741 = vld [vmem:[#allocation2 + $0x80] sm:$0x1]
      %v1742 = vld [vmem:[#allocation2 + $0x84] sm:$0xf]
      %v1743 = vld [vmem:[#allocation2 + $0x88] sm:$0xf]
      %v1744 = vld [vmem:[#allocation2 + $0x8c] sm:$0x1]
      %v1745 = vld [vmem:[#allocation2 + $0x90] sm:$0xf]
      %v1746 = vld [vmem:[#allocation2 + $0x94] sm:$0xf]
      %v1747 = vld [vmem:[#allocation2 + $0x98] sm:$0x1]
      %v1748 = vld [vmem:[#allocation2 + $0x9c] sm:$0xf]
      %v1749 = vld [vmem:[#allocation2 + $0xa0] sm:$0xf]
      %v1750 = vld [vmem:[#allocation2 + $0xa4] sm:$0x1]
      %v1751 = vld [vmem:[#allocation2 + $0xa8] sm:$0xf]
      %v1752 = vld [vmem:[#allocation2 + $0xac] sm:$0xf]
      %v1753 = vld [vmem:[#allocation2 + $0xb0] sm:$0x1]
      %v1754 = vld [vmem:[#allocation2 + $0xb4] sm:$0xf]
      %v1755 = vld [vmem:[#allocation2 + $0xb8] sm:$0xf]
      %v1756 = vld [vmem:[#allocation2 + $0xbc] sm:$0x1]
      %v1757 = vld [vmem:[#allocation2 + $0xc0] sm:$0xf]
      %v1758 = vld [vmem:[#allocation2 + $0xc4] sm:$0xf]
      %v1759 = vld [vmem:[#allocation2 + $0xc8] sm:$0x1]
      %v1760 = vld [vmem:[#allocation2 + $0xcc] sm:$0xf]
      %v1761 = vld [vmem:[#allocation2 + $0xd0] sm:$0xf]
      %v1762 = vld [vmem:[#allocation2 + $0xd4] sm:$0x1]
      %vm1763 = vsmask.f32 3328
      %vm1764 = vsmask.f32 7440
      %vm1765 = vmor %vm1763, %vm1764
      %v1767 = vshrl.u32 %v1709, 16
      %v1769 = vrot.slane %v1767, 4
      %v1770 = vshll.u32 %v1709, 16
      %v1772 = vrot.slane %v1770, 5
      %v1773 = vor.u32 %v1769, %v1772
      %v1774 = vrot.slane %v1773, 4
      %v1776 = vshll.u32 %v1710, 16
      %v1778 = vrot.slane %v1776, 5
      %v1779 = vsel %vm1765, %v1774, %v1778
      %v1780 = vshrl.u32 %v1710, 16
      %v1782 = vrot.slane %v1780, 4
      %v1783 = vor.u32 %v1782, %v1778
      %v1784 = vrot.slane %v1783, 4
      %v1786 = vshll.u32 %v1711, 16
      %v1788 = vrot.slane %v1786, 5
      %v1789 = vsel %vm1765, %v1784, %v1788
      %v1791 = vshrl.u32 %v1712, 16
      %v1793 = vrot.slane %v1791, 4
      %v1794 = vshll.u32 %v1712, 16
      %v1796 = vrot.slane %v1794, 5
      %v1797 = vor.u32 %v1793, %v1796
      %v1798 = vrot.slane %v1797, 4
      %v1800 = vshll.u32 %v1713, 16
      %v1802 = vrot.slane %v1800, 5
      %v1803 = vsel %vm1765, %v1798, %v1802
      %v1804 = vshrl.u32 %v1713, 16
      %v1806 = vrot.slane %v1804, 4
      %v1807 = vor.u32 %v1806, %v1802
      %v1808 = vrot.slane %v1807, 4
      %v1810 = vshll.u32 %v1714, 16
      %v1812 = vrot.slane %v1810, 5
      %v1813 = vsel %vm1765, %v1808, %v1812
      %v1815 = vshrl.u32 %v1715, 16
      %v1817 = vrot.slane %v1815, 4
      %v1818 = vshll.u32 %v1715, 16
      %v1820 = vrot.slane %v1818, 5
      %v1821 = vor.u32 %v1817, %v1820
      %v1822 = vrot.slane %v1821, 4
      %v1824 = vshll.u32 %v1716, 16
      %v1826 = vrot.slane %v1824, 5
      %v1827 = vsel %vm1765, %v1822, %v1826
      %v1828 = vshrl.u32 %v1716, 16
      %v1830 = vrot.slane %v1828, 4
      %v1831 = vor.u32 %v1830, %v1826
      %v1832 = vrot.slane %v1831, 4
      %v1834 = vshll.u32 %v1717, 16
      %v1836 = vrot.slane %v1834, 5
      %v1837 = vsel %vm1765, %v1832, %v1836
      %v1839 = vshrl.u32 %v1718, 16
      %v1841 = vrot.slane %v1839, 4
      %v1842 = vshll.u32 %v1718, 16
      %v1844 = vrot.slane %v1842, 5
      %v1845 = vor.u32 %v1841, %v1844
      %v1846 = vrot.slane %v1845, 4
      %v1848 = vshll.u32 %v1719, 16
      %v1850 = vrot.slane %v1848, 5
      %v1851 = vsel %vm1765, %v1846, %v1850
      %v1852 = vshrl.u32 %v1719, 16
      %v1854 = vrot.slane %v1852, 4
      %v1855 = vor.u32 %v1854, %v1850
      %v1856 = vrot.slane %v1855, 4
      %v1858 = vshll.u32 %v1720, 16
      %v1860 = vrot.slane %v1858, 5
      %v1861 = vsel %vm1765, %v1856, %v1860
      %v1863 = vshrl.u32 %v1721, 16
      %v1865 = vrot.slane %v1863, 4
      %v1866 = vshll.u32 %v1721, 16
      %v1868 = vrot.slane %v1866, 5
      %v1869 = vor.u32 %v1865, %v1868
      %v1870 = vrot.slane %v1869, 4
      %v1872 = vshll.u32 %v1722, 16
      %v1874 = vrot.slane %v1872, 5
      %v1875 = vsel %vm1765, %v1870, %v1874
      %v1876 = vshrl.u32 %v1722, 16
      %v1878 = vrot.slane %v1876, 4
      %v1879 = vor.u32 %v1878, %v1874
      %v1880 = vrot.slane %v1879, 4
      %v1882 = vshll.u32 %v1723, 16
      %v1884 = vrot.slane %v1882, 5
      %v1885 = vsel %vm1765, %v1880, %v1884
      %v1887 = vshrl.u32 %v1724, 16
      %v1889 = vrot.slane %v1887, 4
      %v1890 = vshll.u32 %v1724, 16
      %v1892 = vrot.slane %v1890, 5
      %v1893 = vor.u32 %v1889, %v1892
      %v1894 = vrot.slane %v1893, 4
      %v1896 = vshll.u32 %v1725, 16
      %v1898 = vrot.slane %v1896, 5
      %v1899 = vsel %vm1765, %v1894, %v1898
      %v1900 = vshrl.u32 %v1725, 16
      %v1902 = vrot.slane %v1900, 4
      %v1903 = vor.u32 %v1902, %v1898
      %v1904 = vrot.slane %v1903, 4
      %v1906 = vshll.u32 %v1726, 16
      %v1908 = vrot.slane %v1906, 5
      %v1909 = vsel %vm1765, %v1904, %v1908
      %v1911 = vshrl.u32 %v1727, 16
      %v1913 = vrot.slane %v1911, 4
      %v1914 = vshll.u32 %v1727, 16
      %v1916 = vrot.slane %v1914, 5
      %v1917 = vor.u32 %v1913, %v1916
      %v1918 = vrot.slane %v1917, 4
      %v1920 = vshll.u32 %v1728, 16
      %v1922 = vrot.slane %v1920, 5
      %v1923 = vsel %vm1765, %v1918, %v1922
      %v1924 = vshrl.u32 %v1728, 16
      %v1926 = vrot.slane %v1924, 4
      %v1927 = vor.u32 %v1926, %v1922
      %v1928 = vrot.slane %v1927, 4
      %v1930 = vshll.u32 %v1729, 16
      %v1932 = vrot.slane %v1930, 5
      %v1933 = vsel %vm1765, %v1928, %v1932
      %v1935 = vshrl.u32 %v1730, 16
      %v1937 = vrot.slane %v1935, 4
      %v1938 = vshll.u32 %v1730, 16
      %v1940 = vrot.slane %v1938, 5
      %v1941 = vor.u32 %v1937, %v1940
      %v1942 = vrot.slane %v1941, 4
      %v1944 = vshll.u32 %v1731, 16
      %v1946 = vrot.slane %v1944, 5
      %v1947 = vsel %vm1765, %v1942, %v1946
      %v1948 = vshrl.u32 %v1731, 16
      %v1950 = vrot.slane %v1948, 4
      %v1951 = vor.u32 %v1950, %v1946
      %v1952 = vrot.slane %v1951, 4
      %v1954 = vshll.u32 %v1732, 16
      %v1956 = vrot.slane %v1954, 5
      %v1957 = vsel %vm1765, %v1952, %v1956
      %v1959 = vshrl.u32 %v1733, 16
      %v1961 = vrot.slane %v1959, 4
      %v1962 = vshll.u32 %v1733, 16
      %v1964 = vrot.slane %v1962, 5
      %v1965 = vor.u32 %v1961, %v1964
      %v1966 = vrot.slane %v1965, 4
      %v1968 = vshll.u32 %v1734, 16
      %v1970 = vrot.slane %v1968, 5
      %v1971 = vsel %vm1765, %v1966, %v1970
      %v1972 = vshrl.u32 %v1734, 16
      %v1974 = vrot.slane %v1972, 4
      %v1975 = vor.u32 %v1974, %v1970
      %v1976 = vrot.slane %v1975, 4
      %v1978 = vshll.u32 %v1735, 16
      %v1980 = vrot.slane %v1978, 5
      %v1981 = vsel %vm1765, %v1976, %v1980
      %v1983 = vshrl.u32 %v1736, 16
      %v1985 = vrot.slane %v1983, 4
      %v1986 = vshll.u32 %v1736, 16
      %v1988 = vrot.slane %v1986, 5
      %v1989 = vor.u32 %v1985, %v1988
      %v1990 = vrot.slane %v1989, 4
      %v1992 = vshll.u32 %v1737, 16
      %v1994 = vrot.slane %v1992, 5
      %v1995 = vsel %vm1765, %v1990, %v1994
      %v1996 = vshrl.u32 %v1737, 16
      %v1998 = vrot.slane %v1996, 4
      %v1999 = vor.u32 %v1998, %v1994
      %v2000 = vrot.slane %v1999, 4
      %v2002 = vshll.u32 %v1738, 16
      %v2004 = vrot.slane %v2002, 5
      %v2005 = vsel %vm1765, %v2000, %v2004
      %v2007 = vshrl.u32 %v1739, 16
      %v2009 = vrot.slane %v2007, 4
      %v2010 = vshll.u32 %v1739, 16
      %v2012 = vrot.slane %v2010, 5
      %v2013 = vor.u32 %v2009, %v2012
      %v2014 = vrot.slane %v2013, 4
      %v2016 = vshll.u32 %v1740, 16
      %v2018 = vrot.slane %v2016, 5
      %v2019 = vsel %vm1765, %v2014, %v2018
      %v2020 = vshrl.u32 %v1740, 16
      %v2022 = vrot.slane %v2020, 4
      %v2023 = vor.u32 %v2022, %v2018
      %v2024 = vrot.slane %v2023, 4
      %v2026 = vshll.u32 %v1741, 16
      %v2028 = vrot.slane %v2026, 5
      %v2029 = vsel %vm1765, %v2024, %v2028
      %v2031 = vshrl.u32 %v1742, 16
      %v2033 = vrot.slane %v2031, 4
      %v2034 = vshll.u32 %v1742, 16
      %v2036 = vrot.slane %v2034, 5
      %v2037 = vor.u32 %v2033, %v2036
      %v2038 = vrot.slane %v2037, 4
      %v2040 = vshll.u32 %v1743, 16
      %v2042 = vrot.slane %v2040, 5
      %v2043 = vsel %vm1765, %v2038, %v2042
      %v2044 = vshrl.u32 %v1743, 16
      %v2046 = vrot.slane %v2044, 4
      %v2047 = vor.u32 %v2046, %v2042
      %v2048 = vrot.slane %v2047, 4
      %v2050 = vshll.u32 %v1744, 16
      %v2052 = vrot.slane %v2050, 5
      %v2053 = vsel %vm1765, %v2048, %v2052
      %v2055 = vshrl.u32 %v1745, 16
      %v2057 = vrot.slane %v2055, 4
      %v2058 = vshll.u32 %v1745, 16
      %v2060 = vrot.slane %v2058, 5
      %v2061 = vor.u32 %v2057, %v2060
      %v2062 = vrot.slane %v2061, 4
      %v2064 = vshll.u32 %v1746, 16
      %v2066 = vrot.slane %v2064, 5
      %v2067 = vsel %vm1765, %v2062, %v2066
      %v2068 = vshrl.u32 %v1746, 16
      %v2070 = vrot.slane %v2068, 4
      %v2071 = vor.u32 %v2070, %v2066
      %v2072 = vrot.slane %v2071, 4
      %v2074 = vshll.u32 %v1747, 16
      %v2076 = vrot.slane %v2074, 5
      %v2077 = vsel %vm1765, %v2072, %v2076
      %v2079 = vshrl.u32 %v1748, 16
      %v2081 = vrot.slane %v2079, 4
      %v2082 = vshll.u32 %v1748, 16
      %v2084 = vrot.slane %v2082, 5
      %v2085 = vor.u32 %v2081, %v2084
      %v2086 = vrot.slane %v2085, 4
      %v2088 = vshll.u32 %v1749, 16
      %v2090 = vrot.slane %v2088, 5
      %v2091 = vsel %vm1765, %v2086, %v2090
      %v2092 = vshrl.u32 %v1749, 16
      %v2094 = vrot.slane %v2092, 4
      %v2095 = vor.u32 %v2094, %v2090
      %v2096 = vrot.slane %v2095, 4
      %v2098 = vshll.u32 %v1750, 16
      %v2100 = vrot.slane %v2098, 5
      %v2101 = vsel %vm1765, %v2096, %v2100
      %v2103 = vshrl.u32 %v1751, 16
      %v2105 = vrot.slane %v2103, 4
      %v2106 = vshll.u32 %v1751, 16
      %v2108 = vrot.slane %v2106, 5
      %v2109 = vor.u32 %v2105, %v2108
      %v2110 = vrot.slane %v2109, 4
      %v2112 = vshll.u32 %v1752, 16
      %v2114 = vrot.slane %v2112, 5
      %v2115 = vsel %vm1765, %v2110, %v2114
      %v2116 = vshrl.u32 %v1752, 16
      %v2118 = vrot.slane %v2116, 4
      %v2119 = vor.u32 %v2118, %v2114
      %v2120 = vrot.slane %v2119, 4
      %v2122 = vshll.u32 %v1753, 16
      %v2124 = vrot.slane %v2122, 5
      %v2125 = vsel %vm1765, %v2120, %v2124
      %v2127 = vshrl.u32 %v1754, 16
      %v2129 = vrot.slane %v2127, 4
      %v2130 = vshll.u32 %v1754, 16
      %v2132 = vrot.slane %v2130, 5
      %v2133 = vor.u32 %v2129, %v2132
      %v2134 = vrot.slane %v2133, 4
      %v2136 = vshll.u32 %v1755, 16
      %v2138 = vrot.slane %v2136, 5
      %v2139 = vsel %vm1765, %v2134, %v2138
      %v2140 = vshrl.u32 %v1755, 16
      %v2142 = vrot.slane %v2140, 4
      %v2143 = vor.u32 %v2142, %v2138
      %v2144 = vrot.slane %v2143, 4
      %v2146 = vshll.u32 %v1756, 16
      %v2148 = vrot.slane %v2146, 5
      %v2149 = vsel %vm1765, %v2144, %v2148
      %vm2198 = vcmask 1042432
      %vm2199 = vcmask 1046532
      %vm2200 = vmor %vm2198, %vm2199
      %v2201 = vrot.slane %v1709, 5
      %v2202 = vrot.slane %v2201, 4
      %v2203 = vrot.slane %v1710, 5
      %v2204 = vsel %vm2200, %v2202, %v2203
      %v2205 = vrot.slane %v2203, 4
      %v2206 = vrot.slane %v1711, 5
      %v2207 = vsel %vm2200, %v2205, %v2206
      %v2208 = vrot.slane %v1712, 5
      %v2209 = vrot.slane %v2208, 4
      %v2210 = vrot.slane %v1713, 5
      %v2211 = vsel %vm2200, %v2209, %v2210
      %v2212 = vrot.slane %v2210, 4
      %v2213 = vrot.slane %v1714, 5
      %v2214 = vsel %vm2200, %v2212, %v2213
      %v2215 = vrot.slane %v1715, 5
      %v2216 = vrot.slane %v2215, 4
      %v2217 = vrot.slane %v1716, 5
      %v2218 = vsel %vm2200, %v2216, %v2217
      %v2219 = vrot.slane %v2217, 4
      %v2220 = vrot.slane %v1717, 5
      %v2221 = vsel %vm2200, %v2219, %v2220
      %v2222 = vrot.slane %v1718, 5
      %v2223 = vrot.slane %v2222, 4
      %v2224 = vrot.slane %v1719, 5
      %v2225 = vsel %vm2200, %v2223, %v2224
      %v2226 = vrot.slane %v2224, 4
      %v2227 = vrot.slane %v1720, 5
      %v2228 = vsel %vm2200, %v2226, %v2227
      %v2229 = vrot.slane %v1721, 5
      %v2230 = vrot.slane %v2229, 4
      %v2231 = vrot.slane %v1722, 5
      %v2232 = vsel %vm2200, %v2230, %v2231
      %v2233 = vrot.slane %v2231, 4
      %v2234 = vrot.slane %v1723, 5
      %v2235 = vsel %vm2200, %v2233, %v2234
      %v2236 = vrot.slane %v1724, 5
      %v2237 = vrot.slane %v2236, 4
      %v2238 = vrot.slane %v1725, 5
      %v2239 = vsel %vm2200, %v2237, %v2238
      %v2240 = vrot.slane %v2238, 4
      %v2241 = vrot.slane %v1726, 5
      %v2242 = vsel %vm2200, %v2240, %v2241
      %v2243 = vrot.slane %v1727, 5
      %v2244 = vrot.slane %v2243, 4
      %v2245 = vrot.slane %v1728, 5
      %v2246 = vsel %vm2200, %v2244, %v2245
      %v2247 = vrot.slane %v2245, 4
      %v2248 = vrot.slane %v1729, 5
      %v2249 = vsel %vm2200, %v2247, %v2248
      %v2250 = vrot.slane %v1730, 5
      %v2251 = vrot.slane %v2250, 4
      %v2252 = vrot.slane %v1731, 5
      %v2253 = vsel %vm2200, %v2251, %v2252
      %v2254 = vrot.slane %v2252, 4
      %v2255 = vrot.slane %v1732, 5
      %v2256 = vsel %vm2200, %v2254, %v2255
      %v2257 = vrot.slane %v1733, 5
      %v2258 = vrot.slane %v2257, 4
      %v2259 = vrot.slane %v1734, 5
      %v2260 = vsel %vm2200, %v2258, %v2259
      %v2261 = vrot.slane %v2259, 4
      %v2262 = vrot.slane %v1735, 5
      %v2263 = vsel %vm2200, %v2261, %v2262
      %v2264 = vrot.slane %v1736, 5
      %v2265 = vrot.slane %v2264, 4
      %v2266 = vrot.slane %v1737, 5
      %v2267 = vsel %vm2200, %v2265, %v2266
      %v2268 = vrot.slane %v2266, 4
      %v2269 = vrot.slane %v1738, 5
      %v2270 = vsel %vm2200, %v2268, %v2269
      %v2271 = vrot.slane %v1739, 5
      %v2272 = vrot.slane %v2271, 4
      %v2273 = vrot.slane %v1740, 5
      %v2274 = vsel %vm2200, %v2272, %v2273
      %v2275 = vrot.slane %v2273, 4
      %v2276 = vrot.slane %v1741, 5
      %v2277 = vsel %vm2200, %v2275, %v2276
      %v2278 = vrot.slane %v1742, 5
      %v2279 = vrot.slane %v2278, 4
      %v2280 = vrot.slane %v1743, 5
      %v2281 = vsel %vm2200, %v2279, %v2280
      %v2282 = vrot.slane %v2280, 4
      %v2283 = vrot.slane %v1744, 5
      %v2284 = vsel %vm2200, %v2282, %v2283
      %v2285 = vrot.slane %v1745, 5
      %v2286 = vrot.slane %v2285, 4
      %v2287 = vrot.slane %v1746, 5
      %v2288 = vsel %vm2200, %v2286, %v2287
      %v2289 = vrot.slane %v2287, 4
      %v2290 = vrot.slane %v1747, 5
      %v2291 = vsel %vm2200, %v2289, %v2290
      %v2292 = vrot.slane %v1748, 5
      %v2293 = vrot.slane %v2292, 4
      %v2294 = vrot.slane %v1749, 5
      %v2295 = vsel %vm2200, %v2293, %v2294
      %v2296 = vrot.slane %v2294, 4
      %v2297 = vrot.slane %v1750, 5
      %v2298 = vsel %vm2200, %v2296, %v2297
      %v2299 = vrot.slane %v1751, 5
      %v2300 = vrot.slane %v2299, 4
      %v2301 = vrot.slane %v1752, 5
      %v2302 = vsel %vm2200, %v2300, %v2301
      %v2303 = vrot.slane %v2301, 4
      %v2304 = vrot.slane %v1753, 5
      %v2305 = vsel %vm2200, %v2303, %v2304
      %v2306 = vrot.slane %v1754, 5
      %v2307 = vrot.slane %v2306, 4
      %v2308 = vrot.slane %v1755, 5
      %v2309 = vsel %vm2200, %v2307, %v2308
      %v2310 = vrot.slane %v2308, 4
      %v2311 = vrot.slane %v1756, 5
      %v2312 = vsel %vm2200, %v2310, %v2311
      %v2314 = vshrl.u32 %v1757, 16
      %v2316 = vrot.slane %v2314, 4
      %v2317 = vshll.u32 %v1757, 16
      %v2319 = vrot.slane %v2317, 5
      %v2320 = vor.u32 %v2316, %v2319
      %v2321 = vrot.slane %v2320, 4
      %v2323 = vshll.u32 %v1758, 16
      %v2325 = vrot.slane %v2323, 5
      %v2326 = vsel %vm1765, %v2321, %v2325
      %v2327 = vshrl.u32 %v1758, 16
      %v2329 = vrot.slane %v2327, 4
      %v2330 = vor.u32 %v2329, %v2325
      %v2331 = vrot.slane %v2330, 4
      %v2333 = vshll.u32 %v1759, 16
      %v2335 = vrot.slane %v2333, 5
      %v2336 = vsel %vm1765, %v2331, %v2335
      %v2340 = vrot.slane %v1757, 5
      %v2341 = vrot.slane %v2340, 4
      %v2342 = vrot.slane %v1758, 5
      %v2343 = vsel %vm2200, %v2341, %v2342
      %v2344 = vrot.slane %v2342, 4
      %v2345 = vrot.slane %v1759, 5
      %v2346 = vsel %vm2200, %v2344, %v2345
      %v2348 = vshrl.u32 %v1760, 16
      %v2350 = vrot.slane %v2348, 4
      %v2351 = vshll.u32 %v1760, 16
      %v2353 = vrot.slane %v2351, 5
      %v2354 = vor.u32 %v2350, %v2353
      %v2355 = vrot.slane %v2354, 4
      %v2357 = vshll.u32 %v1761, 16
      %v2359 = vrot.slane %v2357, 5
      %v2360 = vsel %vm1765, %v2355, %v2359
      %v2361 = vshrl.u32 %v1761, 16
      %v2363 = vrot.slane %v2361, 4
      %v2364 = vor.u32 %v2363, %v2359
      %v2365 = vrot.slane %v2364, 4
      %v2367 = vshll.u32 %v1762, 16
      %v2369 = vrot.slane %v2367, 5
      %v2370 = vsel %vm1765, %v2365, %v2369
      %v2374 = vrot.slane %v1760, 5
      %v2375 = vrot.slane %v2374, 4
      %v2376 = vrot.slane %v1761, 5
      %v2377 = vsel %vm2200, %v2375, %v2376
      %v2378 = vrot.slane %v2376, 4
      %v2379 = vrot.slane %v1762, 5
      %v2380 = vsel %vm2200, %v2378, %v2379
      %v2381 = vunpack.c.l.b16 %v1709
      %v2382 = vunpack.c.l.b16 %v1710
      %v2383 = vunpack.c.l.b16 %v1712
      %v2384 = vunpack.c.l.b16 %v1713
      %v2385 = vunpack.c.l.b16 %v1715
      %v2386 = vunpack.c.l.b16 %v1716
      %v2387 = vunpack.c.l.b16 %v1718
      %v2388 = vunpack.c.l.b16 %v1719
      %v2389 = vunpack.c.l.b16 %v1721
      %v2390 = vunpack.c.l.b16 %v1722
      %v2391 = vunpack.c.l.b16 %v1724
      %v2392 = vunpack.c.l.b16 %v1725
      %v2393 = vunpack.c.l.b16 %v1727
      %v2394 = vunpack.c.l.b16 %v1728
      %v2395 = vunpack.c.l.b16 %v1730
      %v2396 = vunpack.c.l.b16 %v1731
      %v2397 = vunpack.c.l.b16 %v1733
      %v2398 = vunpack.c.l.b16 %v1734
      %v2399 = vunpack.c.l.b16 %v1736
      %v2400 = vunpack.c.l.b16 %v1737
      %v2401 = vunpack.c.l.b16 %v1739
      %v2402 = vunpack.c.l.b16 %v1740
      %v2403 = vunpack.c.l.b16 %v1742
      %v2404 = vunpack.c.l.b16 %v1743
      %v2405 = vunpack.c.l.b16 %v1745
      %v2406 = vunpack.c.l.b16 %v1746
      %v2407 = vunpack.c.l.b16 %v1748
      %v2408 = vunpack.c.l.b16 %v1749
      %v2409 = vunpack.c.l.b16 %v1751
      %v2410 = vunpack.c.l.b16 %v1752
      %v2411 = vunpack.c.l.b16 %v1754
      %v2412 = vunpack.c.l.b16 %v1755
      %v2413 = vpack.c.b16 %v2382, %v2381
      %v2414 = vpack.c.b16 %v2384, %v2383
      %v2415 = vpack.c.b16 %v2386, %v2385
      %v2416 = vpack.c.b16 %v2388, %v2387
      %v2417 = vpack.c.b16 %v2390, %v2389
      %v2418 = vpack.c.b16 %v2392, %v2391
      %v2419 = vpack.c.b16 %v2394, %v2393
      %v2420 = vpack.c.b16 %v2396, %v2395
      %v2421 = vpack.c.b16 %v2398, %v2397
      %v2422 = vpack.c.b16 %v2400, %v2399
      %v2423 = vpack.c.b16 %v2402, %v2401
      %v2424 = vpack.c.b16 %v2404, %v2403
      %v2425 = vpack.c.b16 %v2406, %v2405
      %v2426 = vpack.c.b16 %v2408, %v2407
      %v2427 = vpack.c.b16 %v2410, %v2409
      %v2428 = vpack.c.b16 %v2412, %v2411
      %v2429 = vunpack.c.l.b16 %v1779
      %v2430 = vunpack.c.l.b16 %v1789
      %v2431 = vunpack.c.l.b16 %v1803
      %v2432 = vunpack.c.l.b16 %v1813
      %v2433 = vunpack.c.l.b16 %v1827
      %v2434 = vunpack.c.l.b16 %v1837
      %v2435 = vunpack.c.l.b16 %v1851
      %v2436 = vunpack.c.l.b16 %v1861
      %v2437 = vunpack.c.l.b16 %v1875
      %v2438 = vunpack.c.l.b16 %v1885
      %v2439 = vunpack.c.l.b16 %v1899
      %v2440 = vunpack.c.l.b16 %v1909
      %v2441 = vunpack.c.l.b16 %v1923
      %v2442 = vunpack.c.l.b16 %v1933
      %v2443 = vunpack.c.l.b16 %v1947
      %v2444 = vunpack.c.l.b16 %v1957
      %v2445 = vunpack.c.l.b16 %v1971
      %v2446 = vunpack.c.l.b16 %v1981
      %v2447 = vunpack.c.l.b16 %v1995
      %v2448 = vunpack.c.l.b16 %v2005
      %v2449 = vunpack.c.l.b16 %v2019
      %v2450 = vunpack.c.l.b16 %v2029
      %v2451 = vunpack.c.l.b16 %v2043
      %v2452 = vunpack.c.l.b16 %v2053
      %v2453 = vunpack.c.l.b16 %v2067
      %v2454 = vunpack.c.l.b16 %v2077
      %v2455 = vunpack.c.l.b16 %v2091
      %v2456 = vunpack.c.l.b16 %v2101
      %v2457 = vunpack.c.l.b16 %v2115
      %v2458 = vunpack.c.l.b16 %v2125
      %v2459 = vunpack.c.l.b16 %v2139
      %v2460 = vunpack.c.l.b16 %v2149
      %v2461 = vpack.c.b16 %v2430, %v2429
      %v2462 = vpack.c.b16 %v2432, %v2431
      %v2463 = vpack.c.b16 %v2434, %v2433
      %v2464 = vpack.c.b16 %v2436, %v2435
      %v2465 = vpack.c.b16 %v2438, %v2437
      %v2466 = vpack.c.b16 %v2440, %v2439
      %v2467 = vpack.c.b16 %v2442, %v2441
      %v2468 = vpack.c.b16 %v2444, %v2443
      %v2469 = vpack.c.b16 %v2446, %v2445
      %v2470 = vpack.c.b16 %v2448, %v2447
      %v2471 = vpack.c.b16 %v2450, %v2449
      %v2472 = vpack.c.b16 %v2452, %v2451
      %v2473 = vpack.c.b16 %v2454, %v2453
      %v2474 = vpack.c.b16 %v2456, %v2455
      %v2475 = vpack.c.b16 %v2458, %v2457
      %v2476 = vpack.c.b16 %v2460, %v2459
      %2477 = vrot.lane.b32.xlu0 %v2461, 32
      %v2478 = vpop.permute.xlu0 %2477
      %2479 = vrot.lane.b32.xlu0 %v2462, 32
      %v2480 = vpop.permute.xlu0 %2479
      %2481 = vrot.lane.b32.xlu0 %v2463, 32
      %v2482 = vpop.permute.xlu0 %2481
      %2483 = vrot.lane.b32.xlu0 %v2464, 32
      %v2484 = vpop.permute.xlu0 %2483
      %2485 = vrot.lane.b32.xlu0 %v2465, 32
      %v2486 = vpop.permute.xlu0 %2485
      %2487 = vrot.lane.b32.xlu0 %v2466, 32
      %v2488 = vpop.permute.xlu0 %2487
      %2489 = vrot.lane.b32.xlu0 %v2467, 32
      %v2490 = vpop.permute.xlu0 %2489
      %2491 = vrot.lane.b32.xlu0 %v2468, 32
      %v2492 = vpop.permute.xlu0 %2491
      %2493 = vrot.lane.b32.xlu0 %v2469, 32
      %v2494 = vpop.permute.xlu0 %2493
      %2495 = vrot.lane.b32.xlu0 %v2470, 32
      %v2496 = vpop.permute.xlu0 %2495
      %2497 = vrot.lane.b32.xlu0 %v2471, 32
      %v2498 = vpop.permute.xlu0 %2497
      %2499 = vrot.lane.b32.xlu0 %v2472, 32
      %v2500 = vpop.permute.xlu0 %2499
      %2501 = vrot.lane.b32.xlu0 %v2473, 32
      %v2502 = vpop.permute.xlu0 %2501
      %2503 = vrot.lane.b32.xlu0 %v2474, 32
      %v2504 = vpop.permute.xlu0 %2503
      %2505 = vrot.lane.b32.xlu0 %v2475, 32
      %v2506 = vpop.permute.xlu0 %2505
      %2507 = vrot.lane.b32.xlu0 %v2476, 32
      %v2508 = vpop.permute.xlu0 %2507
      %v2509 = vunpack.c.l.b16 %v2204
      %v2510 = vunpack.c.l.b16 %v2207
      %v2511 = vunpack.c.l.b16 %v2211
      %v2512 = vunpack.c.l.b16 %v2214
      %v2513 = vunpack.c.l.b16 %v2218
      %v2514 = vunpack.c.l.b16 %v2221
      %v2515 = vunpack.c.l.b16 %v2225
      %v2516 = vunpack.c.l.b16 %v2228
      %v2517 = vunpack.c.l.b16 %v2232
      %v2518 = vunpack.c.l.b16 %v2235
      %v2519 = vunpack.c.l.b16 %v2239
      %v2520 = vunpack.c.l.b16 %v2242
      %v2521 = vunpack.c.l.b16 %v2246
      %v2522 = vunpack.c.l.b16 %v2249
      %v2523 = vunpack.c.l.b16 %v2253
      %v2524 = vunpack.c.l.b16 %v2256
      %v2525 = vunpack.c.l.b16 %v2260
      %v2526 = vunpack.c.l.b16 %v2263
      %v2527 = vunpack.c.l.b16 %v2267
      %v2528 = vunpack.c.l.b16 %v2270
      %v2529 = vunpack.c.l.b16 %v2274
      %v2530 = vunpack.c.l.b16 %v2277
      %v2531 = vunpack.c.l.b16 %v2281
      %v2532 = vunpack.c.l.b16 %v2284
      %v2533 = vunpack.c.l.b16 %v2288
      %v2534 = vunpack.c.l.b16 %v2291
      %v2535 = vunpack.c.l.b16 %v2295
      %v2536 = vunpack.c.l.b16 %v2298
      %v2537 = vunpack.c.l.b16 %v2302
      %v2538 = vunpack.c.l.b16 %v2305
      %v2539 = vunpack.c.l.b16 %v2309
      %v2540 = vunpack.c.l.b16 %v2312
      %v2541 = vpack.c.b16 %v2510, %v2509
      %v2542 = vpack.c.b16 %v2512, %v2511
      %v2543 = vpack.c.b16 %v2514, %v2513
      %v2544 = vpack.c.b16 %v2516, %v2515
      %v2545 = vpack.c.b16 %v2518, %v2517
      %v2546 = vpack.c.b16 %v2520, %v2519
      %v2547 = vpack.c.b16 %v2522, %v2521
      %v2548 = vpack.c.b16 %v2524, %v2523
      %v2549 = vpack.c.b16 %v2526, %v2525
      %v2550 = vpack.c.b16 %v2528, %v2527
      %v2551 = vpack.c.b16 %v2530, %v2529
      %v2552 = vpack.c.b16 %v2532, %v2531
      %v2553 = vpack.c.b16 %v2534, %v2533
      %v2554 = vpack.c.b16 %v2536, %v2535
      %v2555 = vpack.c.b16 %v2538, %v2537
      %v2556 = vpack.c.b16 %v2540, %v2539
      %2557 = vrot.lane.b32.xlu0 %v2541, 64
      %v2558 = vpop.permute.xlu0 %2557
      %2559 = vrot.lane.b32.xlu0 %v2542, 64
      %v2560 = vpop.permute.xlu0 %2559
      %2561 = vrot.lane.b32.xlu0 %v2543, 64
      %v2562 = vpop.permute.xlu0 %2561
      %2563 = vrot.lane.b32.xlu0 %v2544, 64
      %v2564 = vpop.permute.xlu0 %2563
      %2565 = vrot.lane.b32.xlu0 %v2545, 64
      %v2566 = vpop.permute.xlu0 %2565
      %2567 = vrot.lane.b32.xlu0 %v2546, 64
      %v2568 = vpop.permute.xlu0 %2567
      %2569 = vrot.lane.b32.xlu0 %v2547, 64
      %v2570 = vpop.permute.xlu0 %2569
      %2571 = vrot.lane.b32.xlu0 %v2548, 64
      %v2572 = vpop.permute.xlu0 %2571
      %2573 = vrot.lane.b32.xlu0 %v2549, 64
      %v2574 = vpop.permute.xlu0 %2573
      %2575 = vrot.lane.b32.xlu0 %v2550, 64
      %v2576 = vpop.permute.xlu0 %2575
      %2577 = vrot.lane.b32.xlu0 %v2551, 64
      %v2578 = vpop.permute.xlu0 %2577
      %2579 = vrot.lane.b32.xlu0 %v2552, 64
      %v2580 = vpop.permute.xlu0 %2579
      %2581 = vrot.lane.b32.xlu0 %v2553, 64
      %v2582 = vpop.permute.xlu0 %2581
      %2583 = vrot.lane.b32.xlu0 %v2554, 64
      %v2584 = vpop.permute.xlu0 %2583
      %2585 = vrot.lane.b32.xlu0 %v2555, 64
      %v2586 = vpop.permute.xlu0 %2585
      %2587 = vrot.lane.b32.xlu0 %v2556, 64
      %v2588 = vpop.permute.xlu0 %2587
      %v2589 = vunpack.c.l.b16 %v1757
      %v2590 = vunpack.c.l.b16 %v1758
      %v2591 = vpack.c.b16 %v2590, %v2589
      %2592 = vrot.lane.b32.xlu0 %v2414, 96
      %v2593 = vpop.permute.xlu0 %2592
      %2594 = vrot.lane.b32.xlu0 %v2415, 96
      %v2595 = vpop.permute.xlu0 %2594
      %2596 = vrot.lane.b32.xlu0 %v2416, 96
      %v2597 = vpop.permute.xlu0 %2596
      %2598 = vrot.lane.b32.xlu0 %v2417, 96
      %v2599 = vpop.permute.xlu0 %2598
      %2600 = vrot.lane.b32.xlu0 %v2418, 96
      %v2601 = vpop.permute.xlu0 %2600
      %2602 = vrot.lane.b32.xlu0 %v2419, 96
      %v2603 = vpop.permute.xlu0 %2602
      %2604 = vrot.lane.b32.xlu0 %v2420, 96
      %v2605 = vpop.permute.xlu0 %2604
      %2606 = vrot.lane.b32.xlu0 %v2421, 96
      %v2607 = vpop.permute.xlu0 %2606
      %2608 = vrot.lane.b32.xlu0 %v2422, 96
      %v2609 = vpop.permute.xlu0 %2608
      %2610 = vrot.lane.b32.xlu0 %v2423, 96
      %v2611 = vpop.permute.xlu0 %2610
      %2612 = vrot.lane.b32.xlu0 %v2424, 96
      %v2613 = vpop.permute.xlu0 %2612
      %2614 = vrot.lane.b32.xlu0 %v2425, 96
      %v2615 = vpop.permute.xlu0 %2614
      %2616 = vrot.lane.b32.xlu0 %v2426, 96
      %v2617 = vpop.permute.xlu0 %2616
      %2618 = vrot.lane.b32.xlu0 %v2427, 96
      %v2619 = vpop.permute.xlu0 %2618
      %2620 = vrot.lane.b32.xlu0 %v2428, 96
      %v2621 = vpop.permute.xlu0 %2620
      %2622 = vrot.lane.b32.xlu0 %v2591, 96
      %v2623 = vpop.permute.xlu0 %2622
      %v2624 = vunpack.c.l.b16 %v2326
      %v2625 = vunpack.c.l.b16 %v2336
      %v2626 = vpack.c.b16 %v2625, %v2624
      %v2627 = vunpack.c.l.b16 %v2343
      %v2628 = vunpack.c.l.b16 %v2346
      %v2629 = vpack.c.b16 %v2628, %v2627
      %2630 = vrot.lane.b32.xlu0 %v2542, 32
      %v2631 = vpop.permute.xlu0 %2630
      %2632 = vrot.lane.b32.xlu0 %v2543, 32
      %v2633 = vpop.permute.xlu0 %2632
      %2634 = vrot.lane.b32.xlu0 %v2544, 32
      %v2635 = vpop.permute.xlu0 %2634
      %2636 = vrot.lane.b32.xlu0 %v2545, 32
      %v2637 = vpop.permute.xlu0 %2636
      %2638 = vrot.lane.b32.xlu0 %v2546, 32
      %v2639 = vpop.permute.xlu0 %2638
      %2640 = vrot.lane.b32.xlu0 %v2547, 32
      %v2641 = vpop.permute.xlu0 %2640
      %2642 = vrot.lane.b32.xlu0 %v2548, 32
      %v2643 = vpop.permute.xlu0 %2642
      %2644 = vrot.lane.b32.xlu0 %v2549, 32
      %v2645 = vpop.permute.xlu0 %2644
      %2646 = vrot.lane.b32.xlu0 %v2550, 32
      %v2647 = vpop.permute.xlu0 %2646
      %2648 = vrot.lane.b32.xlu0 %v2551, 32
      %v2649 = vpop.permute.xlu0 %2648
      %2650 = vrot.lane.b32.xlu0 %v2552, 32
      %v2651 = vpop.permute.xlu0 %2650
      %2652 = vrot.lane.b32.xlu0 %v2553, 32
      %v2653 = vpop.permute.xlu0 %2652
      %2654 = vrot.lane.b32.xlu0 %v2554, 32
      %v2655 = vpop.permute.xlu0 %2654
      %2656 = vrot.lane.b32.xlu0 %v2555, 32
      %v2657 = vpop.permute.xlu0 %2656
      %2658 = vrot.lane.b32.xlu0 %v2556, 32
      %v2659 = vpop.permute.xlu0 %2658
      %2660 = vrot.lane.b32.xlu0 %v2629, 32
      %v2661 = vpop.permute.xlu0 %2660
      %v2662 = vunpack.c.l.b16 %v1760
      %v2663 = vunpack.c.l.b16 %v1761
      %v2664 = vpack.c.b16 %v2663, %v2662
      %2665 = vrot.lane.b32.xlu0 %v2415, 64
      %v2666 = vpop.permute.xlu0 %2665
      %2667 = vrot.lane.b32.xlu0 %v2416, 64
      %v2668 = vpop.permute.xlu0 %2667
      %2669 = vrot.lane.b32.xlu0 %v2417, 64
      %v2670 = vpop.permute.xlu0 %2669
      %2671 = vrot.lane.b32.xlu0 %v2418, 64
      %v2672 = vpop.permute.xlu0 %2671
      %2673 = vrot.lane.b32.xlu0 %v2419, 64
      %v2674 = vpop.permute.xlu0 %2673
      %2675 = vrot.lane.b32.xlu0 %v2420, 64
      %v2676 = vpop.permute.xlu0 %2675
      %2677 = vrot.lane.b32.xlu0 %v2421, 64
      %v2678 = vpop.permute.xlu0 %2677
      %2679 = vrot.lane.b32.xlu0 %v2422, 64
      %v2680 = vpop.permute.xlu0 %2679
      %2681 = vrot.lane.b32.xlu0 %v2423, 64
      %v2682 = vpop.permute.xlu0 %2681
      %2683 = vrot.lane.b32.xlu0 %v2424, 64
      %v2684 = vpop.permute.xlu0 %2683
      %2685 = vrot.lane.b32.xlu0 %v2425, 64
      %v2686 = vpop.permute.xlu0 %2685
      %2687 = vrot.lane.b32.xlu0 %v2426, 64
      %v2688 = vpop.permute.xlu0 %2687
      %2689 = vrot.lane.b32.xlu0 %v2427, 64
      %v2690 = vpop.permute.xlu0 %2689
      %2691 = vrot.lane.b32.xlu0 %v2428, 64
      %v2692 = vpop.permute.xlu0 %2691
      %2693 = vrot.lane.b32.xlu0 %v2591, 64
      %v2694 = vpop.permute.xlu0 %2693
      %2695 = vrot.lane.b32.xlu0 %v2664, 64
      %v2696 = vpop.permute.xlu0 %2695
      %v2697 = vunpack.c.l.b16 %v2360
      %v2698 = vunpack.c.l.b16 %v2370
      %v2699 = vpack.c.b16 %v2698, %v2697
      %2700 = vrot.lane.b32.xlu0 %v2463, 96
      %v2701 = vpop.permute.xlu0 %2700
      %2702 = vrot.lane.b32.xlu0 %v2464, 96
      %v2703 = vpop.permute.xlu0 %2702
      %2704 = vrot.lane.b32.xlu0 %v2465, 96
      %v2705 = vpop.permute.xlu0 %2704
      %2706 = vrot.lane.b32.xlu0 %v2466, 96
      %v2707 = vpop.permute.xlu0 %2706
      %2708 = vrot.lane.b32.xlu0 %v2467, 96
      %v2709 = vpop.permute.xlu0 %2708
      %2710 = vrot.lane.b32.xlu0 %v2468, 96
      %v2711 = vpop.permute.xlu0 %2710
      %2712 = vrot.lane.b32.xlu0 %v2469, 96
      %v2713 = vpop.permute.xlu0 %2712
      %2714 = vrot.lane.b32.xlu0 %v2470, 96
      %v2715 = vpop.permute.xlu0 %2714
      %2716 = vrot.lane.b32.xlu0 %v2471, 96
      %v2717 = vpop.permute.xlu0 %2716
      %2718 = vrot.lane.b32.xlu0 %v2472, 96
      %v2719 = vpop.permute.xlu0 %2718
      %2720 = vrot.lane.b32.xlu0 %v2473, 96
      %v2721 = vpop.permute.xlu0 %2720
      %2722 = vrot.lane.b32.xlu0 %v2474, 96
      %v2723 = vpop.permute.xlu0 %2722
      %2724 = vrot.lane.b32.xlu0 %v2475, 96
      %v2725 = vpop.permute.xlu0 %2724
      %2726 = vrot.lane.b32.xlu0 %v2476, 96
      %v2727 = vpop.permute.xlu0 %2726
      %2728 = vrot.lane.b32.xlu0 %v2626, 96
      %v2729 = vpop.permute.xlu0 %2728
      %2730 = vrot.lane.b32.xlu0 %v2699, 96
      %v2731 = vpop.permute.xlu0 %2730
      %v2732 = vunpack.c.l.b16 %v2377
      %v2733 = vunpack.c.l.b16 %v2380
      %v2734 = vpack.c.b16 %v2733, %v2732
      %vm2735 = vcmask 261120
      %v2738 = vsel %vm2735, %v2413, %v2478
      %v2741 = vsel %vm2735, %v2414, %v2480
      %v2744 = vsel %vm2735, %v2415, %v2482
      %v2747 = vsel %vm2735, %v2416, %v2484
      %v2750 = vsel %vm2735, %v2417, %v2486
      %v2753 = vsel %vm2735, %v2418, %v2488
      %v2756 = vsel %vm2735, %v2419, %v2490
      %v2759 = vsel %vm2735, %v2420, %v2492
      %v2762 = vsel %vm2735, %v2421, %v2494
      %v2765 = vsel %vm2735, %v2422, %v2496
      %v2768 = vsel %vm2735, %v2423, %v2498
      %v2771 = vsel %vm2735, %v2424, %v2500
      %v2774 = vsel %vm2735, %v2425, %v2502
      %v2777 = vsel %vm2735, %v2426, %v2504
      %v2780 = vsel %vm2735, %v2427, %v2506
      %v2783 = vsel %vm2735, %v2428, %v2508
      %vm2784 = vcmask 523264
      %v2786 = vsel %vm2784, %v2738, %v2558
      %v2788 = vsel %vm2784, %v2741, %v2560
      %v2790 = vsel %vm2784, %v2744, %v2562
      %v2792 = vsel %vm2784, %v2747, %v2564
      %v2794 = vsel %vm2784, %v2750, %v2566
      %v2796 = vsel %vm2784, %v2753, %v2568
      %v2798 = vsel %vm2784, %v2756, %v2570
      %v2800 = vsel %vm2784, %v2759, %v2572
      %v2802 = vsel %vm2784, %v2762, %v2574
      %v2804 = vsel %vm2784, %v2765, %v2576
      %v2806 = vsel %vm2784, %v2768, %v2578
      %v2808 = vsel %vm2784, %v2771, %v2580
      %v2810 = vsel %vm2784, %v2774, %v2582
      %v2812 = vsel %vm2784, %v2777, %v2584
      %v2814 = vsel %vm2784, %v2780, %v2586
      %v2816 = vsel %vm2784, %v2783, %v2588
      %vm2817 = vcmask 785408
      %v2819 = vsel %vm2817, %v2786, %v2593
      %v2822 = vsel %vm2817, %v2788, %v2595
      %v2825 = vsel %vm2817, %v2790, %v2597
      %v2828 = vsel %vm2817, %v2792, %v2599
      %v2831 = vsel %vm2817, %v2794, %v2601
      %v2834 = vsel %vm2817, %v2796, %v2603
      %v2837 = vsel %vm2817, %v2798, %v2605
      %v2840 = vsel %vm2817, %v2800, %v2607
      %v2843 = vsel %vm2817, %v2802, %v2609
      %v2846 = vsel %vm2817, %v2804, %v2611
      %v2849 = vsel %vm2817, %v2806, %v2613
      %v2852 = vsel %vm2817, %v2808, %v2615
      %v2855 = vsel %vm2817, %v2810, %v2617
      %v2858 = vsel %vm2817, %v2812, %v2619
      %v2861 = vsel %vm2817, %v2814, %v2621
      %v2864 = vsel %vm2817, %v2816, %v2623
      %v2868 = vsel %vm2735, %v2462, %v2631
      %v2871 = vsel %vm2735, %v2463, %v2633
      %v2874 = vsel %vm2735, %v2464, %v2635
      %v2877 = vsel %vm2735, %v2465, %v2637
      %v2880 = vsel %vm2735, %v2466, %v2639
      %v2883 = vsel %vm2735, %v2467, %v2641
      %v2886 = vsel %vm2735, %v2468, %v2643
      %v2889 = vsel %vm2735, %v2469, %v2645
      %v2892 = vsel %vm2735, %v2470, %v2647
      %v2895 = vsel %vm2735, %v2471, %v2649
      %v2898 = vsel %vm2735, %v2472, %v2651
      %v2901 = vsel %vm2735, %v2473, %v2653
      %v2904 = vsel %vm2735, %v2474, %v2655
      %v2907 = vsel %vm2735, %v2475, %v2657
      %v2910 = vsel %vm2735, %v2476, %v2659
      %v2913 = vsel %vm2735, %v2626, %v2661
      %v2915 = vsel %vm2784, %v2868, %v2666
      %v2917 = vsel %vm2784, %v2871, %v2668
      %v2919 = vsel %vm2784, %v2874, %v2670
      %v2921 = vsel %vm2784, %v2877, %v2672
      %v2923 = vsel %vm2784, %v2880, %v2674
      %v2925 = vsel %vm2784, %v2883, %v2676
      %v2927 = vsel %vm2784, %v2886, %v2678
      %v2929 = vsel %vm2784, %v2889, %v2680
      %v2931 = vsel %vm2784, %v2892, %v2682
      %v2933 = vsel %vm2784, %v2895, %v2684
      %v2935 = vsel %vm2784, %v2898, %v2686
      %v2937 = vsel %vm2784, %v2901, %v2688
      %v2939 = vsel %vm2784, %v2904, %v2690
      %v2941 = vsel %vm2784, %v2907, %v2692
      %v2943 = vsel %vm2784, %v2910, %v2694
      %v2945 = vsel %vm2784, %v2913, %v2696
      %v2947 = vsel %vm2817, %v2915, %v2701
      %v2950 = vsel %vm2817, %v2917, %v2703
      %v2953 = vsel %vm2817, %v2919, %v2705
      %v2956 = vsel %vm2817, %v2921, %v2707
      %v2959 = vsel %vm2817, %v2923, %v2709
      %v2962 = vsel %vm2817, %v2925, %v2711
      %v2965 = vsel %vm2817, %v2927, %v2713
      %v2968 = vsel %vm2817, %v2929, %v2715
      %v2971 = vsel %vm2817, %v2931, %v2717
      %v2974 = vsel %vm2817, %v2933, %v2719
      %v2977 = vsel %vm2817, %v2935, %v2721
      %v2980 = vsel %vm2817, %v2937, %v2723
      %v2983 = vsel %vm2817, %v2939, %v2725
      %v2986 = vsel %vm2817, %v2941, %v2727
      %v2989 = vsel %vm2817, %v2943, %v2729
      %v2992 = vsel %vm2817, %v2945, %v2731
      %v2994 = vld [vmem:[%s8] sm:$0xf]
      %v2995 = vld [vmem:[%s8 + $0x4] sm:$0xf]
      %v2996 = vld [vmem:[%s8 + $0x8] sm:$0xf]
      %v2997 = vld [vmem:[%s8 + $0xc] sm:$0xf]
      %v2998 = vld [vmem:[%s8 + $0x10] sm:$0xf]
      %v2999 = vld [vmem:[%s8 + $0x14] sm:$0xf]
      %v3000 = vld [vmem:[%s8 + $0x18] sm:$0xf]
      %v3001 = vld [vmem:[%s8 + $0x1c] sm:$0xf]
      %v3002 = vld [vmem:[%s8 + $0x20] sm:$0xf]
      %v3003 = vld [vmem:[%s8 + $0x24] sm:$0xf]
      %v3004 = vld [vmem:[%s8 + $0x28] sm:$0xf]
      %v3005 = vld [vmem:[%s8 + $0x2c] sm:$0xf]
      %v3006 = vld [vmem:[%s8 + $0x30] sm:$0xf]
      %v3007 = vld [vmem:[%s8 + $0x34] sm:$0xf]
      %v3008 = vld [vmem:[%s8 + $0x38] sm:$0xf]
      %v3009 = vld [vmem:[%s8 + $0x3c] sm:$0xf]
      %v3010 = vld [vmem:[%s8 + $0x40] sm:$0xf]
      %v3011 = vld [vmem:[%s8 + $0x44] sm:$0xf]
      %v3012 = vld [vmem:[%s8 + $0x48] sm:$0xf]
      %v3013 = vld [vmem:[%s8 + $0x4c] sm:$0xf]
      %v3014 = vld [vmem:[%s8 + $0x50] sm:$0xf]
      %v3015 = vld [vmem:[%s8 + $0x54] sm:$0xf]
      %v3016 = vld [vmem:[%s8 + $0x58] sm:$0xf]
      %v3017 = vld [vmem:[%s8 + $0x5c] sm:$0xf]
      %v3018 = vld [vmem:[%s8 + $0x60] sm:$0xf]
      %v3019 = vld [vmem:[%s8 + $0x64] sm:$0xf]
      %v3020 = vld [vmem:[%s8 + $0x68] sm:$0xf]
      %v3021 = vld [vmem:[%s8 + $0x6c] sm:$0xf]
      %v3022 = vld [vmem:[%s8 + $0x70] sm:$0xf]
      %v3023 = vld [vmem:[%s8 + $0x74] sm:$0xf]
      %v3024 = vld [vmem:[%s8 + $0x78] sm:$0xf]
      %v3025 = vld [vmem:[%s8 + $0x7c] sm:$0xf]
      %v3026 = vld [vmem:[%s8 + $0x80] sm:$0xf]
      %v3027 = vld [vmem:[%s8 + $0x84] sm:$0xf]
      %v3028 = vld [vmem:[%s8 + $0x88] sm:$0xf]
      %v3029 = vld [vmem:[%s8 + $0x8c] sm:$0xf]
      %v3066 = vunpack.c.l.b16 %v2994
      %v3067 = vunpack.c.l.b16 %v2995
      %v3068 = vunpack.c.l.b16 %v2996
      %v3069 = vunpack.c.l.b16 %v2997
      %v3070 = vunpack.c.l.b16 %v2998
      %v3071 = vunpack.c.l.b16 %v2999
      %v3072 = vunpack.c.l.b16 %v3000
      %v3073 = vunpack.c.l.b16 %v3001
      %v3074 = vunpack.c.l.b16 %v3002
      %v3075 = vunpack.c.l.b16 %v3003
      %v3076 = vunpack.c.l.b16 %v3004
      %v3077 = vunpack.c.l.b16 %v3005
      %v3078 = vunpack.c.l.b16 %v3006
      %v3079 = vunpack.c.l.b16 %v3007
      %v3080 = vunpack.c.l.b16 %v3008
      %v3081 = vunpack.c.l.b16 %v3009
      %v3082 = vunpack.c.l.b16 %v3010
      %v3083 = vunpack.c.l.b16 %v3011
      %v3084 = vunpack.c.l.b16 %v3012
      %v3085 = vunpack.c.l.b16 %v3013
      %v3086 = vunpack.c.l.b16 %v3014
      %v3087 = vunpack.c.l.b16 %v3015
      %v3088 = vunpack.c.l.b16 %v3016
      %v3089 = vunpack.c.l.b16 %v3017
      %v3090 = vunpack.c.l.b16 %v3018
      %v3091 = vunpack.c.l.b16 %v3019
      %v3092 = vunpack.c.l.b16 %v3020
      %v3093 = vunpack.c.l.b16 %v3021
      %v3094 = vunpack.c.l.b16 %v3022
      %v3095 = vunpack.c.l.b16 %v3023
      %v3096 = vunpack.c.l.b16 %v3024
      %v3097 = vunpack.c.l.b16 %v3025
      %v3098 = vunpack.c.l.b16 %v3026
      %v3099 = vunpack.c.l.b16 %v3027
      %v3100 = vunpack.c.l.b16 %v3028
      %v3101 = vunpack.c.l.b16 %v3029
      %v3102 = vpack.c.b16 %v3067, %v3066
      %v3103 = vpack.c.b16 %v3069, %v3068
      %v3104 = vpack.c.b16 %v3071, %v3070
      %v3105 = vpack.c.b16 %v3073, %v3072
      %v3106 = vpack.c.b16 %v3075, %v3074
      %v3107 = vpack.c.b16 %v3077, %v3076
      %v3108 = vpack.c.b16 %v3079, %v3078
      %v3109 = vpack.c.b16 %v3081, %v3080
      %v3110 = vpack.c.b16 %v3083, %v3082
      %v3111 = vpack.c.b16 %v3085, %v3084
      %v3112 = vpack.c.b16 %v3087, %v3086
      %v3113 = vpack.c.b16 %v3089, %v3088
      %v3114 = vpack.c.b16 %v3091, %v3090
      %v3115 = vpack.c.b16 %v3093, %v3092
      %v3116 = vpack.c.b16 %v3095, %v3094
      %v3117 = vpack.c.b16 %v3097, %v3096
      %v3118 = vpack.c.b16 %v3099, %v3098
      %v3119 = vpack.c.b16 %v3101, %v3100
      %v3139 = vsel %vm2735, %v2543, 0
      %v3142 = vsel %vm2735, %v2544, 0
      %v3145 = vsel %vm2735, %v2545, 0
      %v3148 = vsel %vm2735, %v2546, 0
      %v3151 = vsel %vm2735, %v2547, 0
      %v3154 = vsel %vm2735, %v2548, 0
      %v3157 = vsel %vm2735, %v2549, 0
      %v3160 = vsel %vm2735, %v2550, 0
      %v3163 = vsel %vm2735, %v2551, 0
      %v3166 = vsel %vm2735, %v2552, 0
      %v3169 = vsel %vm2735, %v2553, 0
      %v3172 = vsel %vm2735, %v2554, 0
      %v3175 = vsel %vm2735, %v2555, 0
      %v3178 = vsel %vm2735, %v2556, 0
      %v3181 = vsel %vm2735, %v2629, 0
      %v3184 = vsel %vm2735, %v2734, 0
      %3186 = vmatpush.bf16.msra.mxu0 %v3109
      %3187 = vmatpush.bf16.msra.mxu0 %v3108
      %3188 = vmatpush.bf16.msra.mxu0 %v3107
      %3189 = vmatpush.bf16.msra.mxu0 %v3106
      %3190 = vmatpush.bf16.msra.mxu0 %v3105
      %3191 = vmatpush.bf16.msra.mxu0 %v3104
      %3192 = vmatpush.bf16.msra.mxu0 %v3103
      %3193 = vmatpush.bf16.msra.mxu0 %v3102
      %3194 = vmatmul.bf16.gmra.mxu0 %v2819
      %v3195 = vpop.f32.mrf.mxu0
      %v3196 = vadd.f32 0.0, %v3195
      %v3197 = vpop.f32.mrf.mxu0
      %v3198 = vadd.f32 0.0, %v3197
      %3199 = vmatmul.bf16.gmra.mxu0 %v2822
      %v3200 = vpop.f32.mrf.mxu0
      %v3201 = vadd.f32 0.0, %v3200
      %v3202 = vpop.f32.mrf.mxu0
      %v3203 = vadd.f32 0.0, %v3202
      %3204 = vmatmul.bf16.gmra.mxu0 %v2825
      %v3205 = vpop.f32.mrf.mxu0
      %v3206 = vadd.f32 0.0, %v3205
      %v3207 = vpop.f32.mrf.mxu0
      %v3208 = vadd.f32 0.0, %v3207
      %3209 = vmatmul.bf16.gmra.mxu0 %v2828
      %v3210 = vpop.f32.mrf.mxu0
      %v3211 = vadd.f32 0.0, %v3210
      %v3212 = vpop.f32.mrf.mxu0
      %v3213 = vadd.f32 0.0, %v3212
      %3214 = vmatmul.bf16.gmra.mxu0 %v2831
      %v3215 = vpop.f32.mrf.mxu0
      %v3216 = vadd.f32 0.0, %v3215
      %v3217 = vpop.f32.mrf.mxu0
      %v3218 = vadd.f32 0.0, %v3217
      %3219 = vmatmul.bf16.gmra.mxu0 %v2834
      %v3220 = vpop.f32.mrf.mxu0
      %v3221 = vadd.f32 0.0, %v3220
      %v3222 = vpop.f32.mrf.mxu0
      %v3223 = vadd.f32 0.0, %v3222
      %3224 = vmatmul.bf16.gmra.mxu0 %v2837
      %v3225 = vpop.f32.mrf.mxu0
      %v3226 = vadd.f32 0.0, %v3225
      %v3227 = vpop.f32.mrf.mxu0
      %v3228 = vadd.f32 0.0, %v3227
      %3229 = vmatmul.bf16.gmra.mxu0 %v2840
      %v3230 = vpop.f32.mrf.mxu0
      %v3231 = vadd.f32 0.0, %v3230
      %v3232 = vpop.f32.mrf.mxu0
      %v3233 = vadd.f32 0.0, %v3232
      %3234 = vmatmul.bf16.gmra.mxu0 %v2843
      %v3235 = vpop.f32.mrf.mxu0
      %v3236 = vadd.f32 0.0, %v3235
      %v3237 = vpop.f32.mrf.mxu0
      %v3238 = vadd.f32 0.0, %v3237
      %3239 = vmatmul.bf16.gmra.mxu0 %v2846
      %v3240 = vpop.f32.mrf.mxu0
      %v3241 = vadd.f32 0.0, %v3240
      %v3242 = vpop.f32.mrf.mxu0
      %v3243 = vadd.f32 0.0, %v3242
      %3244 = vmatmul.bf16.gmra.mxu0 %v2849
      %v3245 = vpop.f32.mrf.mxu0
      %v3246 = vadd.f32 0.0, %v3245
      %v3247 = vpop.f32.mrf.mxu0
      %v3248 = vadd.f32 0.0, %v3247
      %3249 = vmatmul.bf16.gmra.mxu0 %v2852
      %v3250 = vpop.f32.mrf.mxu0
      %v3251 = vadd.f32 0.0, %v3250
      %v3252 = vpop.f32.mrf.mxu0
      %v3253 = vadd.f32 0.0, %v3252
      %3254 = vmatmul.bf16.gmra.mxu0 %v2855
      %v3255 = vpop.f32.mrf.mxu0
      %v3256 = vadd.f32 0.0, %v3255
      %v3257 = vpop.f32.mrf.mxu0
      %v3258 = vadd.f32 0.0, %v3257
      %3259 = vmatmul.bf16.gmra.mxu0 %v2858
      %v3260 = vpop.f32.mrf.mxu0
      %v3261 = vadd.f32 0.0, %v3260
      %v3262 = vpop.f32.mrf.mxu0
      %v3263 = vadd.f32 0.0, %v3262
      %3264 = vmatmul.bf16.gmra.mxu0 %v2861
      %v3265 = vpop.f32.mrf.mxu0
      %v3266 = vadd.f32 0.0, %v3265
      %v3267 = vpop.f32.mrf.mxu0
      %v3268 = vadd.f32 0.0, %v3267
      %3269 = vmatmul.bf16.gmra.mxu0 %v2864
      %v3270 = vpop.f32.mrf.mxu0
      %v3271 = vadd.f32 0.0, %v3270
      %v3272 = vpop.f32.mrf.mxu0
      %v3273 = vadd.f32 0.0, %v3272
      %3274 = vdwg.mxu0
      %3275 = vmatpush.bf16.msra.mxu0 %v3117
      %3276 = vmatpush.bf16.msra.mxu0 %v3116
      %3277 = vmatpush.bf16.msra.mxu0 %v3115
      %3278 = vmatpush.bf16.msra.mxu0 %v3114
      %3279 = vmatpush.bf16.msra.mxu0 %v3113
      %3280 = vmatpush.bf16.msra.mxu0 %v3112
      %3281 = vmatpush.bf16.msra.mxu0 %v3111
      %3282 = vmatpush.bf16.msra.mxu0 %v3110
      %3283 = vmatmul.bf16.gmra.mxu0 %v2947
      %v3284 = vpop.f32.mrf.mxu0
      %v3285 = vadd.f32 %v3196, %v3284
      %v3286 = vpop.f32.mrf.mxu0
      %v3287 = vadd.f32 %v3198, %v3286
      %3288 = vmatmul.bf16.gmra.mxu0 %v2950
      %v3289 = vpop.f32.mrf.mxu0
      %v3290 = vadd.f32 %v3201, %v3289
      %v3291 = vpop.f32.mrf.mxu0
      %v3292 = vadd.f32 %v3203, %v3291
      %3293 = vmatmul.bf16.gmra.mxu0 %v2953
      %v3294 = vpop.f32.mrf.mxu0
      %v3295 = vadd.f32 %v3206, %v3294
      %v3296 = vpop.f32.mrf.mxu0
      %v3297 = vadd.f32 %v3208, %v3296
      %3298 = vmatmul.bf16.gmra.mxu0 %v2956
      %v3299 = vpop.f32.mrf.mxu0
      %v3300 = vadd.f32 %v3211, %v3299
      %v3301 = vpop.f32.mrf.mxu0
      %v3302 = vadd.f32 %v3213, %v3301
      %3303 = vmatmul.bf16.gmra.mxu0 %v2959
      %v3304 = vpop.f32.mrf.mxu0
      %v3305 = vadd.f32 %v3216, %v3304
      %v3306 = vpop.f32.mrf.mxu0
      %v3307 = vadd.f32 %v3218, %v3306
      %3308 = vmatmul.bf16.gmra.mxu0 %v2962
      %v3309 = vpop.f32.mrf.mxu0
      %v3310 = vadd.f32 %v3221, %v3309
      %v3311 = vpop.f32.mrf.mxu0
      %v3312 = vadd.f32 %v3223, %v3311
      %3313 = vmatmul.bf16.gmra.mxu0 %v2965
      %v3314 = vpop.f32.mrf.mxu0
      %v3315 = vadd.f32 %v3226, %v3314
      %v3316 = vpop.f32.mrf.mxu0
      %v3317 = vadd.f32 %v3228, %v3316
      %3318 = vmatmul.bf16.gmra.mxu0 %v2968
      %v3319 = vpop.f32.mrf.mxu0
      %v3320 = vadd.f32 %v3231, %v3319
      %v3321 = vpop.f32.mrf.mxu0
      %v3322 = vadd.f32 %v3233, %v3321
      %3323 = vmatmul.bf16.gmra.mxu0 %v2971
      %v3324 = vpop.f32.mrf.mxu0
      %v3325 = vadd.f32 %v3236, %v3324
      %v3326 = vpop.f32.mrf.mxu0
      %v3327 = vadd.f32 %v3238, %v3326
      %3328 = vmatmul.bf16.gmra.mxu0 %v2974
      %v3329 = vpop.f32.mrf.mxu0
      %v3330 = vadd.f32 %v3241, %v3329
      %v3331 = vpop.f32.mrf.mxu0
      %v3332 = vadd.f32 %v3243, %v3331
      %3333 = vmatmul.bf16.gmra.mxu0 %v2977
      %v3334 = vpop.f32.mrf.mxu0
      %v3335 = vadd.f32 %v3246, %v3334
      %v3336 = vpop.f32.mrf.mxu0
      %v3337 = vadd.f32 %v3248, %v3336
      %3338 = vmatmul.bf16.gmra.mxu0 %v2980
      %v3339 = vpop.f32.mrf.mxu0
      %v3340 = vadd.f32 %v3251, %v3339
      %v3341 = vpop.f32.mrf.mxu0
      %v3342 = vadd.f32 %v3253, %v3341
      %3343 = vmatmul.bf16.gmra.mxu0 %v2983
      %v3344 = vpop.f32.mrf.mxu0
      %v3345 = vadd.f32 %v3256, %v3344
      %v3346 = vpop.f32.mrf.mxu0
      %v3347 = vadd.f32 %v3258, %v3346
      %3348 = vmatmul.bf16.gmra.mxu0 %v2986
      %v3349 = vpop.f32.mrf.mxu0
      %v3350 = vadd.f32 %v3261, %v3349
      %v3351 = vpop.f32.mrf.mxu0
      %v3352 = vadd.f32 %v3263, %v3351
      %3353 = vmatmul.bf16.gmra.mxu0 %v2989
      %v3354 = vpop.f32.mrf.mxu0
      %v3355 = vadd.f32 %v3266, %v3354
      %v3356 = vpop.f32.mrf.mxu0
      %v3357 = vadd.f32 %v3268, %v3356
      %3358 = vmatmul.bf16.gmra.mxu0 %v2992
      %v3359 = vpop.f32.mrf.mxu0
      %v3360 = vadd.f32 %v3271, %v3359
      %v3361 = vpop.f32.mrf.mxu0
      %v3362 = vadd.f32 %v3273, %v3361
      %3363 = vdwg.mxu0
      %3364 = vmatpush.bf16.msra.mxu0 0
      %3365 = vmatpush.bf16.msra.mxu0 0
      %3366 = vmatpush.bf16.msra.mxu0 0
      %3367 = vmatpush.bf16.msra.mxu0 0
      %3368 = vmatpush.bf16.msra.mxu0 0
      %3369 = vmatpush.bf16.msra.mxu0 0
      %3370 = vmatpush.bf16.msra.mxu0 %v3119
      %3371 = vmatpush.bf16.msra.mxu0 %v3118
      %3372 = vmatmul.bf16.gmra.mxu0 %v3139
      %v3373 = vpop.f32.mrf.mxu0
      %v3374 = vadd.f32 %v3285, %v3373
      %v3375 = vpop.f32.mrf.mxu0
      %v3376 = vadd.f32 %v3287, %v3375
      %3377 = vmatmul.bf16.gmra.mxu0 %v3142
      %v3378 = vpop.f32.mrf.mxu0
      %v3379 = vadd.f32 %v3290, %v3378
      %v3380 = vpop.f32.mrf.mxu0
      %v3381 = vadd.f32 %v3292, %v3380
      %3382 = vmatmul.bf16.gmra.mxu0 %v3145
      %v3383 = vpop.f32.mrf.mxu0
      %v3384 = vadd.f32 %v3295, %v3383
      %v3385 = vpop.f32.mrf.mxu0
      %v3386 = vadd.f32 %v3297, %v3385
      %3387 = vmatmul.bf16.gmra.mxu0 %v3148
      %v3388 = vpop.f32.mrf.mxu0
      %v3389 = vadd.f32 %v3300, %v3388
      %v3390 = vpop.f32.mrf.mxu0
      %v3391 = vadd.f32 %v3302, %v3390
      %3392 = vmatmul.bf16.gmra.mxu0 %v3151
      %v3393 = vpop.f32.mrf.mxu0
      %v3394 = vadd.f32 %v3305, %v3393
      %v3395 = vpop.f32.mrf.mxu0
      %v3396 = vadd.f32 %v3307, %v3395
      %3397 = vmatmul.bf16.gmra.mxu0 %v3154
      %v3398 = vpop.f32.mrf.mxu0
      %v3399 = vadd.f32 %v3310, %v3398
      %v3400 = vpop.f32.mrf.mxu0
      %v3401 = vadd.f32 %v3312, %v3400
      %3402 = vmatmul.bf16.gmra.mxu0 %v3157
      %v3403 = vpop.f32.mrf.mxu0
      %v3404 = vadd.f32 %v3315, %v3403
      %v3405 = vpop.f32.mrf.mxu0
      %v3406 = vadd.f32 %v3317, %v3405
      %3407 = vmatmul.bf16.gmra.mxu0 %v3160
      %v3408 = vpop.f32.mrf.mxu0
      %v3409 = vadd.f32 %v3320, %v3408
      %v3410 = vpop.f32.mrf.mxu0
      %v3411 = vadd.f32 %v3322, %v3410
      %3412 = vmatmul.bf16.gmra.mxu0 %v3163
      %v3413 = vpop.f32.mrf.mxu0
      %v3414 = vadd.f32 %v3325, %v3413
      %v3415 = vpop.f32.mrf.mxu0
      %v3416 = vadd.f32 %v3327, %v3415
      %3417 = vmatmul.bf16.gmra.mxu0 %v3166
      %v3418 = vpop.f32.mrf.mxu0
      %v3419 = vadd.f32 %v3330, %v3418
      %v3420 = vpop.f32.mrf.mxu0
      %v3421 = vadd.f32 %v3332, %v3420
      %3422 = vmatmul.bf16.gmra.mxu0 %v3169
      %v3423 = vpop.f32.mrf.mxu0
      %v3424 = vadd.f32 %v3335, %v3423
      %v3425 = vpop.f32.mrf.mxu0
      %v3426 = vadd.f32 %v3337, %v3425
      %3427 = vmatmul.bf16.gmra.mxu0 %v3172
      %v3428 = vpop.f32.mrf.mxu0
      %v3429 = vadd.f32 %v3340, %v3428
      %v3430 = vpop.f32.mrf.mxu0
      %v3431 = vadd.f32 %v3342, %v3430
      %3432 = vmatmul.bf16.gmra.mxu0 %v3175
      %v3433 = vpop.f32.mrf.mxu0
      %v3434 = vadd.f32 %v3345, %v3433
      %v3435 = vpop.f32.mrf.mxu0
      %v3436 = vadd.f32 %v3347, %v3435
      %3437 = vmatmul.bf16.gmra.mxu0 %v3178
      %v3438 = vpop.f32.mrf.mxu0
      %v3439 = vadd.f32 %v3350, %v3438
      %v3440 = vpop.f32.mrf.mxu0
      %v3441 = vadd.f32 %v3352, %v3440
      %3442 = vmatmul.bf16.gmra.mxu0 %v3181
      %v3443 = vpop.f32.mrf.mxu0
      %v3444 = vadd.f32 %v3355, %v3443
      %v3445 = vpop.f32.mrf.mxu0
      %v3446 = vadd.f32 %v3357, %v3445
      %3447 = vmatmul.bf16.gmra.mxu0 %v3184
      %v3448 = vpop.f32.mrf.mxu0
      %v3449 = vadd.f32 %v3360, %v3448
      %v3450 = vpop.f32.mrf.mxu0
      %v3451 = vadd.f32 %v3362, %v3450
      %3452 = vdwg.mxu0
      %v3453 = vld [vmem:[%s9] sm:$0x1]
      %v3455 = vperm.slane %v3453, 0
      %v3457 = vmul.f32 %v862, %v3455
      %v3458 = vmul.f32 %v864, %v3455
      %v3459 = vmul.f32 %v867, %v3455
      %v3460 = vmul.f32 %v869, %v3455
      %v3461 = vmul.f32 %v872, %v3455
      %v3462 = vmul.f32 %v874, %v3455
      %v3463 = vmul.f32 %v877, %v3455
      %v3464 = vmul.f32 %v879, %v3455
      %v3465 = vmul.f32 %v882, %v3455
      %v3466 = vmul.f32 %v884, %v3455
      %v3467 = vmul.f32 %v887, %v3455
      %v3468 = vmul.f32 %v889, %v3455
      %v3469 = vmul.f32 %v892, %v3455
      %v3470 = vmul.f32 %v894, %v3455
      %v3471 = vmul.f32 %v897, %v3455
      %v3472 = vmul.f32 %v899, %v3455
      %v3473 = vmul.f32 %v902, %v3455
      %v3474 = vmul.f32 %v904, %v3455
      %v3475 = vmul.f32 %v907, %v3455
      %v3476 = vmul.f32 %v909, %v3455
      %v3477 = vmul.f32 %v912, %v3455
      %v3478 = vmul.f32 %v914, %v3455
      %v3479 = vmul.f32 %v917, %v3455
      %v3480 = vmul.f32 %v919, %v3455
      %v3481 = vmul.f32 %v922, %v3455
      %v3482 = vmul.f32 %v924, %v3455
      %v3483 = vmul.f32 %v927, %v3455
      %v3484 = vmul.f32 %v929, %v3455
      %v3485 = vmul.f32 %v932, %v3455
      %v3486 = vmul.f32 %v934, %v3455
      %v3487 = vmul.f32 %v937, %v3455
      %v3488 = vmul.f32 %v939, %v3455
      %v3489 = vld [vmem:[%s10] sm:$0x1]
      %v3491 = vperm.slane %v3489, 0
      %v3493 = vadd.f32 %v3457, %v3491
      %v3494 = vadd.f32 %v3458, %v3491
      %v3495 = vadd.f32 %v3459, %v3491
      %v3496 = vadd.f32 %v3460, %v3491
      %v3497 = vadd.f32 %v3461, %v3491
      %v3498 = vadd.f32 %v3462, %v3491
      %v3499 = vadd.f32 %v3463, %v3491
      %v3500 = vadd.f32 %v3464, %v3491
      %v3501 = vadd.f32 %v3465, %v3491
      %v3502 = vadd.f32 %v3466, %v3491
      %v3503 = vadd.f32 %v3467, %v3491
      %v3504 = vadd.f32 %v3468, %v3491
      %v3505 = vadd.f32 %v3469, %v3491
      %v3506 = vadd.f32 %v3470, %v3491
      %v3507 = vadd.f32 %v3471, %v3491
      %v3508 = vadd.f32 %v3472, %v3491
      %v3509 = vadd.f32 %v3473, %v3491
      %v3510 = vadd.f32 %v3474, %v3491
      %v3511 = vadd.f32 %v3475, %v3491
      %v3512 = vadd.f32 %v3476, %v3491
      %v3513 = vadd.f32 %v3477, %v3491
      %v3514 = vadd.f32 %v3478, %v3491
      %v3515 = vadd.f32 %v3479, %v3491
      %v3516 = vadd.f32 %v3480, %v3491
      %v3517 = vadd.f32 %v3481, %v3491
      %v3518 = vadd.f32 %v3482, %v3491
      %v3519 = vadd.f32 %v3483, %v3491
      %v3520 = vadd.f32 %v3484, %v3491
      %v3521 = vadd.f32 %v3485, %v3491
      %v3522 = vadd.f32 %v3486, %v3491
      %v3523 = vadd.f32 %v3487, %v3491
      %v3524 = vadd.f32 %v3488, %v3491
      %v3525 = vmax.f32 %v3493, 0.0
      %v3526 = vmax.f32 %v3494, 0.0
      %v3527 = vmax.f32 %v3495, 0.0
      %v3528 = vmax.f32 %v3496, 0.0
      %v3529 = vmax.f32 %v3497, 0.0
      %v3530 = vmax.f32 %v3498, 0.0
      %v3531 = vmax.f32 %v3499, 0.0
      %v3532 = vmax.f32 %v3500, 0.0
      %v3533 = vmax.f32 %v3501, 0.0
      %v3534 = vmax.f32 %v3502, 0.0
      %v3535 = vmax.f32 %v3503, 0.0
      %v3536 = vmax.f32 %v3504, 0.0
      %v3537 = vmax.f32 %v3505, 0.0
      %v3538 = vmax.f32 %v3506, 0.0
      %v3539 = vmax.f32 %v3507, 0.0
      %v3540 = vmax.f32 %v3508, 0.0
      %v3541 = vmax.f32 %v3509, 0.0
      %v3542 = vmax.f32 %v3510, 0.0
      %v3543 = vmax.f32 %v3511, 0.0
      %v3544 = vmax.f32 %v3512, 0.0
      %v3545 = vmax.f32 %v3513, 0.0
      %v3546 = vmax.f32 %v3514, 0.0
      %v3547 = vmax.f32 %v3515, 0.0
      %v3548 = vmax.f32 %v3516, 0.0
      %v3549 = vmax.f32 %v3517, 0.0
      %v3550 = vmax.f32 %v3518, 0.0
      %v3551 = vmax.f32 %v3519, 0.0
      %v3552 = vmax.f32 %v3520, 0.0
      %v3553 = vmax.f32 %v3521, 0.0
      %v3554 = vmax.f32 %v3522, 0.0
      %v3555 = vmax.f32 %v3523, 0.0
      %v3556 = vmax.f32 %v3524, 0.0
      %v3557 = vld [vmem:[%s11] sm:$0x1]
      %v3559 = vperm.slane %v3557, 0
      %v3561 = vmul.f32 %v3374, %v3559
      %v3562 = vmul.f32 %v3376, %v3559
      %v3563 = vmul.f32 %v3379, %v3559
      %v3564 = vmul.f32 %v3381, %v3559
      %v3565 = vmul.f32 %v3384, %v3559
      %v3566 = vmul.f32 %v3386, %v3559
      %v3567 = vmul.f32 %v3389, %v3559
      %v3568 = vmul.f32 %v3391, %v3559
      %v3569 = vmul.f32 %v3394, %v3559
      %v3570 = vmul.f32 %v3396, %v3559
      %v3571 = vmul.f32 %v3399, %v3559
      %v3572 = vmul.f32 %v3401, %v3559
      %v3573 = vmul.f32 %v3404, %v3559
      %v3574 = vmul.f32 %v3406, %v3559
      %v3575 = vmul.f32 %v3409, %v3559
      %v3576 = vmul.f32 %v3411, %v3559
      %v3577 = vmul.f32 %v3414, %v3559
      %v3578 = vmul.f32 %v3416, %v3559
      %v3579 = vmul.f32 %v3419, %v3559
      %v3580 = vmul.f32 %v3421, %v3559
      %v3581 = vmul.f32 %v3424, %v3559
      %v3582 = vmul.f32 %v3426, %v3559
      %v3583 = vmul.f32 %v3429, %v3559
      %v3584 = vmul.f32 %v3431, %v3559
      %v3585 = vmul.f32 %v3434, %v3559
      %v3586 = vmul.f32 %v3436, %v3559
      %v3587 = vmul.f32 %v3439, %v3559
      %v3588 = vmul.f32 %v3441, %v3559
      %v3589 = vmul.f32 %v3444, %v3559
      %v3590 = vmul.f32 %v3446, %v3559
      %v3591 = vmul.f32 %v3449, %v3559
      %v3592 = vmul.f32 %v3451, %v3559
      %v3593 = vld [vmem:[%s12] sm:$0x1]
      %v3595 = vperm.slane %v3593, 0
      %v3597 = vadd.f32 %v3561, %v3595
      %v3598 = vadd.f32 %v3562, %v3595
      %v3599 = vadd.f32 %v3563, %v3595
      %v3600 = vadd.f32 %v3564, %v3595
      %v3601 = vadd.f32 %v3565, %v3595
      %v3602 = vadd.f32 %v3566, %v3595
      %v3603 = vadd.f32 %v3567, %v3595
      %v3604 = vadd.f32 %v3568, %v3595
      %v3605 = vadd.f32 %v3569, %v3595
      %v3606 = vadd.f32 %v3570, %v3595
      %v3607 = vadd.f32 %v3571, %v3595
      %v3608 = vadd.f32 %v3572, %v3595
      %v3609 = vadd.f32 %v3573, %v3595
      %v3610 = vadd.f32 %v3574, %v3595
      %v3611 = vadd.f32 %v3575, %v3595
      %v3612 = vadd.f32 %v3576, %v3595
      %v3613 = vadd.f32 %v3577, %v3595
      %v3614 = vadd.f32 %v3578, %v3595
      %v3615 = vadd.f32 %v3579, %v3595
      %v3616 = vadd.f32 %v3580, %v3595
      %v3617 = vadd.f32 %v3581, %v3595
      %v3618 = vadd.f32 %v3582, %v3595
      %v3619 = vadd.f32 %v3583, %v3595
      %v3620 = vadd.f32 %v3584, %v3595
      %v3621 = vadd.f32 %v3585, %v3595
      %v3622 = vadd.f32 %v3586, %v3595
      %v3623 = vadd.f32 %v3587, %v3595
      %v3624 = vadd.f32 %v3588, %v3595
      %v3625 = vadd.f32 %v3589, %v3595
      %v3626 = vadd.f32 %v3590, %v3595
      %v3627 = vadd.f32 %v3591, %v3595
      %v3628 = vadd.f32 %v3592, %v3595
      %v3629 = vmax.f32 %v3597, 0.0
      %v3630 = vmax.f32 %v3598, 0.0
      %v3631 = vmax.f32 %v3599, 0.0
      %v3632 = vmax.f32 %v3600, 0.0
      %v3633 = vmax.f32 %v3601, 0.0
      %v3634 = vmax.f32 %v3602, 0.0
      %v3635 = vmax.f32 %v3603, 0.0
      %v3636 = vmax.f32 %v3604, 0.0
      %v3637 = vmax.f32 %v3605, 0.0
      %v3638 = vmax.f32 %v3606, 0.0
      %v3639 = vmax.f32 %v3607, 0.0
      %v3640 = vmax.f32 %v3608, 0.0
      %v3641 = vmax.f32 %v3609, 0.0
      %v3642 = vmax.f32 %v3610, 0.0
      %v3643 = vmax.f32 %v3611, 0.0
      %v3644 = vmax.f32 %v3612, 0.0
      %v3645 = vmax.f32 %v3613, 0.0
      %v3646 = vmax.f32 %v3614, 0.0
      %v3647 = vmax.f32 %v3615, 0.0
      %v3648 = vmax.f32 %v3616, 0.0
      %v3649 = vmax.f32 %v3617, 0.0
      %v3650 = vmax.f32 %v3618, 0.0
      %v3651 = vmax.f32 %v3619, 0.0
      %v3652 = vmax.f32 %v3620, 0.0
      %v3653 = vmax.f32 %v3621, 0.0
      %v3654 = vmax.f32 %v3622, 0.0
      %v3655 = vmax.f32 %v3623, 0.0
      %v3656 = vmax.f32 %v3624, 0.0
      %v3657 = vmax.f32 %v3625, 0.0
      %v3658 = vmax.f32 %v3626, 0.0
      %v3659 = vmax.f32 %v3627, 0.0
      %v3660 = vmax.f32 %v3628, 0.0
      %v3661 = vpack.c.bf16 %v3526, %v3525
      %v3662 = vpack.c.bf16 %v3528, %v3527
      %v3663 = vpack.c.bf16 %v3530, %v3529
      %v3664 = vpack.c.bf16 %v3532, %v3531
      %v3665 = vpack.c.bf16 %v3534, %v3533
      %v3666 = vpack.c.bf16 %v3536, %v3535
      %v3667 = vpack.c.bf16 %v3538, %v3537
      %v3668 = vpack.c.bf16 %v3540, %v3539
      %v3669 = vpack.c.bf16 %v3542, %v3541
      %v3670 = vpack.c.bf16 %v3544, %v3543
      %v3671 = vpack.c.bf16 %v3546, %v3545
      %v3672 = vpack.c.bf16 %v3548, %v3547
      %v3673 = vpack.c.bf16 %v3550, %v3549
      %v3674 = vpack.c.bf16 %v3552, %v3551
      %v3675 = vpack.c.bf16 %v3554, %v3553
      %v3676 = vpack.c.bf16 %v3556, %v3555
      %v3677 = vld [vmem:[%s13] sm:$0xf]
      %v3678 = vpack.c.bf16 %v3630, %v3629
      %v3679 = vpack.c.bf16 %v3632, %v3631
      %v3680 = vpack.c.bf16 %v3634, %v3633
      %v3681 = vpack.c.bf16 %v3636, %v3635
      %v3682 = vpack.c.bf16 %v3638, %v3637
      %v3683 = vpack.c.bf16 %v3640, %v3639
      %v3684 = vpack.c.bf16 %v3642, %v3641
      %v3685 = vpack.c.bf16 %v3644, %v3643
      %v3686 = vpack.c.bf16 %v3646, %v3645
      %v3687 = vpack.c.bf16 %v3648, %v3647
      %v3688 = vpack.c.bf16 %v3650, %v3649
      %v3689 = vpack.c.bf16 %v3652, %v3651
      %v3690 = vpack.c.bf16 %v3654, %v3653
      %v3691 = vpack.c.bf16 %v3656, %v3655
      %v3692 = vpack.c.bf16 %v3658, %v3657
      %v3693 = vpack.c.bf16 %v3660, %v3659
      %v3694 = vld [vmem:[%s14] sm:$0xf]
      %v3695 = vld [vmem:[%s14 + $0x4] sm:$0xf]
      %v3696 = vld [vmem:[%s14 + $0x8] sm:$0xf]
      %v3697 = vld [vmem:[%s14 + $0xc] sm:$0xf]
      %v3702 = vunpack.c.l.b16 %v3694
      %v3703 = vunpack.c.l.b16 %v3695
      %v3704 = vunpack.c.l.b16 %v3696
      %v3705 = vunpack.c.l.b16 %v3697
      %v3706 = vpack.c.b16 %v3703, %v3702
      %v3707 = vpack.c.b16 %v3705, %v3704
      %v3711 = vsel %vm2735, %v3678, 0
      %v3714 = vsel %vm2735, %v3679, 0
      %v3717 = vsel %vm2735, %v3680, 0
      %v3720 = vsel %vm2735, %v3681, 0
      %v3723 = vsel %vm2735, %v3682, 0
      %v3726 = vsel %vm2735, %v3683, 0
      %v3729 = vsel %vm2735, %v3684, 0
      %v3732 = vsel %vm2735, %v3685, 0
      %v3735 = vsel %vm2735, %v3686, 0
      %v3738 = vsel %vm2735, %v3687, 0
      %v3741 = vsel %vm2735, %v3688, 0
      %v3744 = vsel %vm2735, %v3689, 0
      %v3747 = vsel %vm2735, %v3690, 0
      %v3750 = vsel %vm2735, %v3691, 0
      %v3753 = vsel %vm2735, %v3692, 0
      %v3756 = vsel %vm2735, %v3693, 0
      %3758 = vmatpush.bf16.msra.mxu0 0
      %3759 = vmatpush.bf16.msra.mxu0 0
      %3760 = vmatpush.bf16.msra.mxu0 0
      %3761 = vmatpush.bf16.msra.mxu0 0
      %3762 = vmatpush.bf16.msra.mxu0 0
      %3763 = vmatpush.bf16.msra.mxu0 0
      %3764 = vmatpush.bf16.msra.mxu0 %v3707
      %3765 = vmatpush.bf16.msra.mxu0 %v3706
      %3766 = vmatmul.bf16.gmra.mxu0 %v3711
      %v3767 = vpop.f32.mrf.mxu0
      %v3768 = vadd.f32 0.0, %v3767
      %v3769 = vpop.f32.mrf.mxu0
      %v3770 = vadd.f32 0.0, %v3769
      %3771 = vmatmul.bf16.gmra.mxu0 %v3714
      %v3772 = vpop.f32.mrf.mxu0
      %v3773 = vadd.f32 0.0, %v3772
      %v3774 = vpop.f32.mrf.mxu0
      %v3775 = vadd.f32 0.0, %v3774
      %3776 = vmatmul.bf16.gmra.mxu0 %v3717
      %v3777 = vpop.f32.mrf.mxu0
      %v3778 = vadd.f32 0.0, %v3777
      %v3779 = vpop.f32.mrf.mxu0
      %v3780 = vadd.f32 0.0, %v3779
      %3781 = vmatmul.bf16.gmra.mxu0 %v3720
      %v3782 = vpop.f32.mrf.mxu0
      %v3783 = vadd.f32 0.0, %v3782
      %v3784 = vpop.f32.mrf.mxu0
      %v3785 = vadd.f32 0.0, %v3784
      %3786 = vmatmul.bf16.gmra.mxu0 %v3723
      %v3787 = vpop.f32.mrf.mxu0
      %v3788 = vadd.f32 0.0, %v3787
      %v3789 = vpop.f32.mrf.mxu0
      %v3790 = vadd.f32 0.0, %v3789
      %3791 = vmatmul.bf16.gmra.mxu0 %v3726
      %v3792 = vpop.f32.mrf.mxu0
      %v3793 = vadd.f32 0.0, %v3792
      %v3794 = vpop.f32.mrf.mxu0
      %v3795 = vadd.f32 0.0, %v3794
      %3796 = vmatmul.bf16.gmra.mxu0 %v3729
      %v3797 = vpop.f32.mrf.mxu0
      %v3798 = vadd.f32 0.0, %v3797
      %v3799 = vpop.f32.mrf.mxu0
      %v3800 = vadd.f32 0.0, %v3799
      %3801 = vmatmul.bf16.gmra.mxu0 %v3732
      %v3802 = vpop.f32.mrf.mxu0
      %v3803 = vadd.f32 0.0, %v3802
      %v3804 = vpop.f32.mrf.mxu0
      %v3805 = vadd.f32 0.0, %v3804
      %3806 = vmatmul.bf16.gmra.mxu0 %v3735
      %v3807 = vpop.f32.mrf.mxu0
      %v3808 = vadd.f32 0.0, %v3807
      %v3809 = vpop.f32.mrf.mxu0
      %v3810 = vadd.f32 0.0, %v3809
      %3811 = vmatmul.bf16.gmra.mxu0 %v3738
      %v3812 = vpop.f32.mrf.mxu0
      %v3813 = vadd.f32 0.0, %v3812
      %v3814 = vpop.f32.mrf.mxu0
      %v3815 = vadd.f32 0.0, %v3814
      %3816 = vmatmul.bf16.gmra.mxu0 %v3741
      %v3817 = vpop.f32.mrf.mxu0
      %v3818 = vadd.f32 0.0, %v3817
      %v3819 = vpop.f32.mrf.mxu0
      %v3820 = vadd.f32 0.0, %v3819
      %3821 = vmatmul.bf16.gmra.mxu0 %v3744
      %v3822 = vpop.f32.mrf.mxu0
      %v3823 = vadd.f32 0.0, %v3822
      %v3824 = vpop.f32.mrf.mxu0
      %v3825 = vadd.f32 0.0, %v3824
      %3826 = vmatmul.bf16.gmra.mxu0 %v3747
      %v3827 = vpop.f32.mrf.mxu0
      %v3828 = vadd.f32 0.0, %v3827
      %v3829 = vpop.f32.mrf.mxu0
      %v3830 = vadd.f32 0.0, %v3829
      %3831 = vmatmul.bf16.gmra.mxu0 %v3750
      %v3832 = vpop.f32.mrf.mxu0
      %v3833 = vadd.f32 0.0, %v3832
      %v3834 = vpop.f32.mrf.mxu0
      %v3835 = vadd.f32 0.0, %v3834
      %3836 = vmatmul.bf16.gmra.mxu0 %v3753
      %v3837 = vpop.f32.mrf.mxu0
      %v3838 = vadd.f32 0.0, %v3837
      %v3839 = vpop.f32.mrf.mxu0
      %v3840 = vadd.f32 0.0, %v3839
      %3841 = vmatmul.bf16.gmra.mxu0 %v3756
      %v3842 = vpop.f32.mrf.mxu0
      %v3843 = vadd.f32 0.0, %v3842
      %v3844 = vpop.f32.mrf.mxu0
      %v3845 = vadd.f32 0.0, %v3844
      %3846 = vdwg.mxu0
      %vm3847 = vcmask 64512
      %v3849 = vsel %vm3847, %v3661, 0
      %v3852 = vsel %vm3847, %v3662, 0
      %v3855 = vsel %vm3847, %v3663, 0
      %v3858 = vsel %vm3847, %v3664, 0
      %v3861 = vsel %vm3847, %v3665, 0
      %v3864 = vsel %vm3847, %v3666, 0
      %v3867 = vsel %vm3847, %v3667, 0
      %v3870 = vsel %vm3847, %v3668, 0
      %v3873 = vsel %vm3847, %v3669, 0
      %v3876 = vsel %vm3847, %v3670, 0
      %v3879 = vsel %vm3847, %v3671, 0
      %v3882 = vsel %vm3847, %v3672, 0
      %v3885 = vsel %vm3847, %v3673, 0
      %v3888 = vsel %vm3847, %v3674, 0
      %v3891 = vsel %vm3847, %v3675, 0
      %v3894 = vsel %vm3847, %v3676, 0
      %vm3896 = vcmask 1043456
      %v3898 = vsel %vm3896, %v3677, 0
      %3900 = vmatpush.bf16.msra.mxu0 0
      %3901 = vmatpush.bf16.msra.mxu0 0
      %3902 = vmatpush.bf16.msra.mxu0 0
      %3903 = vmatpush.bf16.msra.mxu0 0
      %3904 = vmatpush.bf16.msra.mxu0 0
      %3905 = vmatpush.bf16.msra.mxu0 0
      %3906 = vmatpush.bf16.msra.mxu0 0
      %3907 = vmatpush.bf16.msra.mxu0 %v3898
      %3908 = vmatmul.bf16.gmra.mxu0 %v3849
      %v3909 = vpop.f32.mrf.mxu0
      %v3910 = vadd.f32 %v3768, %v3909
      %v3911 = vpop.f32.mrf.mxu0
      %v3912 = vadd.f32 %v3770, %v3911
      %3913 = vmatmul.bf16.gmra.mxu0 %v3852
      %v3914 = vpop.f32.mrf.mxu0
      %v3915 = vadd.f32 %v3773, %v3914
      %v3916 = vpop.f32.mrf.mxu0
      %v3917 = vadd.f32 %v3775, %v3916
      %3918 = vmatmul.bf16.gmra.mxu0 %v3855
      %v3919 = vpop.f32.mrf.mxu0
      %v3920 = vadd.f32 %v3778, %v3919
      %v3921 = vpop.f32.mrf.mxu0
      %v3922 = vadd.f32 %v3780, %v3921
      %3923 = vmatmul.bf16.gmra.mxu0 %v3858
      %v3924 = vpop.f32.mrf.mxu0
      %v3925 = vadd.f32 %v3783, %v3924
      %v3926 = vpop.f32.mrf.mxu0
      %v3927 = vadd.f32 %v3785, %v3926
      %3928 = vmatmul.bf16.gmra.mxu0 %v3861
      %v3929 = vpop.f32.mrf.mxu0
      %v3930 = vadd.f32 %v3788, %v3929
      %v3931 = vpop.f32.mrf.mxu0
      %v3932 = vadd.f32 %v3790, %v3931
      %3933 = vmatmul.bf16.gmra.mxu0 %v3864
      %v3934 = vpop.f32.mrf.mxu0
      %v3935 = vadd.f32 %v3793, %v3934
      %v3936 = vpop.f32.mrf.mxu0
      %v3937 = vadd.f32 %v3795, %v3936
      %3938 = vmatmul.bf16.gmra.mxu0 %v3867
      %v3939 = vpop.f32.mrf.mxu0
      %v3940 = vadd.f32 %v3798, %v3939
      %v3941 = vpop.f32.mrf.mxu0
      %v3942 = vadd.f32 %v3800, %v3941
      %3943 = vmatmul.bf16.gmra.mxu0 %v3870
      %v3944 = vpop.f32.mrf.mxu0
      %v3945 = vadd.f32 %v3803, %v3944
      %v3946 = vpop.f32.mrf.mxu0
      %v3947 = vadd.f32 %v3805, %v3946
      %3948 = vmatmul.bf16.gmra.mxu0 %v3873
      %v3949 = vpop.f32.mrf.mxu0
      %v3950 = vadd.f32 %v3808, %v3949
      %v3951 = vpop.f32.mrf.mxu0
      %v3952 = vadd.f32 %v3810, %v3951
      %3953 = vmatmul.bf16.gmra.mxu0 %v3876
      %v3954 = vpop.f32.mrf.mxu0
      %v3955 = vadd.f32 %v3813, %v3954
      %v3956 = vpop.f32.mrf.mxu0
      %v3957 = vadd.f32 %v3815, %v3956
      %3958 = vmatmul.bf16.gmra.mxu0 %v3879
      %v3959 = vpop.f32.mrf.mxu0
      %v3960 = vadd.f32 %v3818, %v3959
      %v3961 = vpop.f32.mrf.mxu0
      %v3962 = vadd.f32 %v3820, %v3961
      %3963 = vmatmul.bf16.gmra.mxu0 %v3882
      %v3964 = vpop.f32.mrf.mxu0
      %v3965 = vadd.f32 %v3823, %v3964
      %v3966 = vpop.f32.mrf.mxu0
      %v3967 = vadd.f32 %v3825, %v3966
      %3968 = vmatmul.bf16.gmra.mxu0 %v3885
      %v3969 = vpop.f32.mrf.mxu0
      %v3970 = vadd.f32 %v3828, %v3969
      %v3971 = vpop.f32.mrf.mxu0
      %v3972 = vadd.f32 %v3830, %v3971
      %3973 = vmatmul.bf16.gmra.mxu0 %v3888
      %v3974 = vpop.f32.mrf.mxu0
      %v3975 = vadd.f32 %v3833, %v3974
      %v3976 = vpop.f32.mrf.mxu0
      %v3977 = vadd.f32 %v3835, %v3976
      %3978 = vmatmul.bf16.gmra.mxu0 %v3891
      %v3979 = vpop.f32.mrf.mxu0
      %v3980 = vadd.f32 %v3838, %v3979
      %v3981 = vpop.f32.mrf.mxu0
      %v3982 = vadd.f32 %v3840, %v3981
      %3983 = vmatmul.bf16.gmra.mxu0 %v3894
      %v3984 = vpop.f32.mrf.mxu0
      %v3985 = vadd.f32 %v3843, %v3984
      %v3986 = vpop.f32.mrf.mxu0
      %v3987 = vadd.f32 %v3845, %v3986
      %3988 = vdwg.mxu0
      %v3989 = vld [vmem:[%s15] sm:$0x1]
      %v3991 = vperm.slane %v3989, 0
      %v3993 = vmul.f32 %v643, %v3991
      %v3994 = vmul.f32 %v644, %v3991
      %v3995 = vmul.f32 %v645, %v3991
      %v3996 = vmul.f32 %v646, %v3991
      %v3997 = vmul.f32 %v647, %v3991
      %v3998 = vmul.f32 %v648, %v3991
      %v3999 = vmul.f32 %v649, %v3991
      %v4000 = vmul.f32 %v650, %v3991
      %v4001 = vmul.f32 %v651, %v3991
      %v4002 = vmul.f32 %v652, %v3991
      %v4003 = vmul.f32 %v653, %v3991
      %v4004 = vmul.f32 %v654, %v3991
      %v4005 = vmul.f32 %v655, %v3991
      %v4006 = vmul.f32 %v656, %v3991
      %v4007 = vmul.f32 %v657, %v3991
      %v4008 = vmul.f32 %v658, %v3991
      %v4009 = vmul.f32 %v659, %v3991
      %v4010 = vmul.f32 %v660, %v3991
      %v4011 = vmul.f32 %v661, %v3991
      %v4012 = vmul.f32 %v662, %v3991
      %v4013 = vmul.f32 %v663, %v3991
      %v4014 = vmul.f32 %v664, %v3991
      %v4015 = vmul.f32 %v665, %v3991
      %v4016 = vmul.f32 %v666, %v3991
      %v4017 = vmul.f32 %v667, %v3991
      %v4018 = vmul.f32 %v668, %v3991
      %v4019 = vmul.f32 %v669, %v3991
      %v4020 = vmul.f32 %v670, %v3991
      %v4021 = vmul.f32 %v671, %v3991
      %v4022 = vmul.f32 %v672, %v3991
      %v4023 = vmul.f32 %v673, %v3991
      %v4024 = vmul.f32 %v674, %v3991
      %v4025 = vld [vmem:[%s16] sm:$0x1]
      %v4027 = vperm.slane %v4025, 0
      %v4029 = vadd.f32 %v3993, %v4027
      %v4030 = vadd.f32 %v3994, %v4027
      %v4031 = vadd.f32 %v3995, %v4027
      %v4032 = vadd.f32 %v3996, %v4027
      %v4033 = vadd.f32 %v3997, %v4027
      %v4034 = vadd.f32 %v3998, %v4027
      %v4035 = vadd.f32 %v3999, %v4027
      %v4036 = vadd.f32 %v4000, %v4027
      %v4037 = vadd.f32 %v4001, %v4027
      %v4038 = vadd.f32 %v4002, %v4027
      %v4039 = vadd.f32 %v4003, %v4027
      %v4040 = vadd.f32 %v4004, %v4027
      %v4041 = vadd.f32 %v4005, %v4027
      %v4042 = vadd.f32 %v4006, %v4027
      %v4043 = vadd.f32 %v4007, %v4027
      %v4044 = vadd.f32 %v4008, %v4027
      %v4045 = vadd.f32 %v4009, %v4027
      %v4046 = vadd.f32 %v4010, %v4027
      %v4047 = vadd.f32 %v4011, %v4027
      %v4048 = vadd.f32 %v4012, %v4027
      %v4049 = vadd.f32 %v4013, %v4027
      %v4050 = vadd.f32 %v4014, %v4027
      %v4051 = vadd.f32 %v4015, %v4027
      %v4052 = vadd.f32 %v4016, %v4027
      %v4053 = vadd.f32 %v4017, %v4027
      %v4054 = vadd.f32 %v4018, %v4027
      %v4055 = vadd.f32 %v4019, %v4027
      %v4056 = vadd.f32 %v4020, %v4027
      %v4057 = vadd.f32 %v4021, %v4027
      %v4058 = vadd.f32 %v4022, %v4027
      %v4059 = vadd.f32 %v4023, %v4027
      %v4060 = vadd.f32 %v4024, %v4027
      %v4061 = vmax.f32 %v4029, 0.0
      %v4062 = vmax.f32 %v4030, 0.0
      %v4063 = vmax.f32 %v4031, 0.0
      %v4064 = vmax.f32 %v4032, 0.0
      %v4065 = vmax.f32 %v4033, 0.0
      %v4066 = vmax.f32 %v4034, 0.0
      %v4067 = vmax.f32 %v4035, 0.0
      %v4068 = vmax.f32 %v4036, 0.0
      %v4069 = vmax.f32 %v4037, 0.0
      %v4070 = vmax.f32 %v4038, 0.0
      %v4071 = vmax.f32 %v4039, 0.0
      %v4072 = vmax.f32 %v4040, 0.0
      %v4073 = vmax.f32 %v4041, 0.0
      %v4074 = vmax.f32 %v4042, 0.0
      %v4075 = vmax.f32 %v4043, 0.0
      %v4076 = vmax.f32 %v4044, 0.0
      %v4077 = vmax.f32 %v4045, 0.0
      %v4078 = vmax.f32 %v4046, 0.0
      %v4079 = vmax.f32 %v4047, 0.0
      %v4080 = vmax.f32 %v4048, 0.0
      %v4081 = vmax.f32 %v4049, 0.0
      %v4082 = vmax.f32 %v4050, 0.0
      %v4083 = vmax.f32 %v4051, 0.0
      %v4084 = vmax.f32 %v4052, 0.0
      %v4085 = vmax.f32 %v4053, 0.0
      %v4086 = vmax.f32 %v4054, 0.0
      %v4087 = vmax.f32 %v4055, 0.0
      %v4088 = vmax.f32 %v4056, 0.0
      %v4089 = vmax.f32 %v4057, 0.0
      %v4090 = vmax.f32 %v4058, 0.0
      %v4091 = vmax.f32 %v4059, 0.0
      %v4092 = vmax.f32 %v4060, 0.0
      %v4093 = vpack.c.bf16 %v4062, %v4061
      %v4094 = vpack.c.bf16 %v4064, %v4063
      %v4095 = vpack.c.bf16 %v4066, %v4065
      %v4096 = vpack.c.bf16 %v4068, %v4067
      %v4097 = vpack.c.bf16 %v4070, %v4069
      %v4098 = vpack.c.bf16 %v4072, %v4071
      %v4099 = vpack.c.bf16 %v4074, %v4073
      %v4100 = vpack.c.bf16 %v4076, %v4075
      %v4101 = vpack.c.bf16 %v4078, %v4077
      %v4102 = vpack.c.bf16 %v4080, %v4079
      %v4103 = vpack.c.bf16 %v4082, %v4081
      %v4104 = vpack.c.bf16 %v4084, %v4083
      %v4105 = vpack.c.bf16 %v4086, %v4085
      %v4106 = vpack.c.bf16 %v4088, %v4087
      %v4107 = vpack.c.bf16 %v4090, %v4089
      %v4108 = vpack.c.bf16 %v4092, %v4091
      %v4109 = vld [vmem:[%s17] sm:$0xf]
      %v4110 = vld [vmem:[%s17 + $0x4] sm:$0xf]
      %v4113 = vunpack.c.l.b16 %v4109
      %v4114 = vunpack.c.l.b16 %v4110
      %v4115 = vpack.c.b16 %v4114, %v4113
      %v4118 = vsel %vm803, %v4093, 0
      %v4121 = vsel %vm803, %v4094, 0
      %v4124 = vsel %vm803, %v4095, 0
      %v4127 = vsel %vm803, %v4096, 0
      %v4130 = vsel %vm803, %v4097, 0
      %v4133 = vsel %vm803, %v4098, 0
      %v4136 = vsel %vm803, %v4099, 0
      %v4139 = vsel %vm803, %v4100, 0
      %v4142 = vsel %vm803, %v4101, 0
      %v4145 = vsel %vm803, %v4102, 0
      %v4148 = vsel %vm803, %v4103, 0
      %v4151 = vsel %vm803, %v4104, 0
      %v4154 = vsel %vm803, %v4105, 0
      %v4157 = vsel %vm803, %v4106, 0
      %v4160 = vsel %vm803, %v4107, 0
      %v4163 = vsel %vm803, %v4108, 0
      %4165 = vmatpush.bf16.msra.mxu0 0
      %4166 = vmatpush.bf16.msra.mxu0 0
      %4167 = vmatpush.bf16.msra.mxu0 0
      %4168 = vmatpush.bf16.msra.mxu0 0
      %4169 = vmatpush.bf16.msra.mxu0 0
      %4170 = vmatpush.bf16.msra.mxu0 0
      %4171 = vmatpush.bf16.msra.mxu0 0
      %4172 = vmatpush.bf16.msra.mxu0 %v4115
      %4173 = vmatmul.bf16.gmra.mxu0 %v4118
      %v4174 = vpop.f32.mrf.mxu0
      %v4175 = vadd.f32 0.0, %v4174
      %v4176 = vpop.f32.mrf.mxu0
      %v4177 = vadd.f32 0.0, %v4176
      %4178 = vmatmul.bf16.gmra.mxu0 %v4121
      %v4179 = vpop.f32.mrf.mxu0
      %v4180 = vadd.f32 0.0, %v4179
      %v4181 = vpop.f32.mrf.mxu0
      %v4182 = vadd.f32 0.0, %v4181
      %4183 = vmatmul.bf16.gmra.mxu0 %v4124
      %v4184 = vpop.f32.mrf.mxu0
      %v4185 = vadd.f32 0.0, %v4184
      %v4186 = vpop.f32.mrf.mxu0
      %v4187 = vadd.f32 0.0, %v4186
      %4188 = vmatmul.bf16.gmra.mxu0 %v4127
      %v4189 = vpop.f32.mrf.mxu0
      %v4190 = vadd.f32 0.0, %v4189
      %v4191 = vpop.f32.mrf.mxu0
      %v4192 = vadd.f32 0.0, %v4191
      %4193 = vmatmul.bf16.gmra.mxu0 %v4130
      %v4194 = vpop.f32.mrf.mxu0
      %v4195 = vadd.f32 0.0, %v4194
      %v4196 = vpop.f32.mrf.mxu0
      %v4197 = vadd.f32 0.0, %v4196
      %4198 = vmatmul.bf16.gmra.mxu0 %v4133
      %v4199 = vpop.f32.mrf.mxu0
      %v4200 = vadd.f32 0.0, %v4199
      %v4201 = vpop.f32.mrf.mxu0
      %v4202 = vadd.f32 0.0, %v4201
      %4203 = vmatmul.bf16.gmra.mxu0 %v4136
      %v4204 = vpop.f32.mrf.mxu0
      %v4205 = vadd.f32 0.0, %v4204
      %v4206 = vpop.f32.mrf.mxu0
      %v4207 = vadd.f32 0.0, %v4206
      %4208 = vmatmul.bf16.gmra.mxu0 %v4139
      %v4209 = vpop.f32.mrf.mxu0
      %v4210 = vadd.f32 0.0, %v4209
      %v4211 = vpop.f32.mrf.mxu0
      %v4212 = vadd.f32 0.0, %v4211
      %4213 = vmatmul.bf16.gmra.mxu0 %v4142
      %v4214 = vpop.f32.mrf.mxu0
      %v4215 = vadd.f32 0.0, %v4214
      %v4216 = vpop.f32.mrf.mxu0
      %v4217 = vadd.f32 0.0, %v4216
      %4218 = vmatmul.bf16.gmra.mxu0 %v4145
      %v4219 = vpop.f32.mrf.mxu0
      %v4220 = vadd.f32 0.0, %v4219
      %v4221 = vpop.f32.mrf.mxu0
      %v4222 = vadd.f32 0.0, %v4221
      %4223 = vmatmul.bf16.gmra.mxu0 %v4148
      %v4224 = vpop.f32.mrf.mxu0
      %v4225 = vadd.f32 0.0, %v4224
      %v4226 = vpop.f32.mrf.mxu0
      %v4227 = vadd.f32 0.0, %v4226
      %4228 = vmatmul.bf16.gmra.mxu0 %v4151
      %v4229 = vpop.f32.mrf.mxu0
      %v4230 = vadd.f32 0.0, %v4229
      %v4231 = vpop.f32.mrf.mxu0
      %v4232 = vadd.f32 0.0, %v4231
      %4233 = vmatmul.bf16.gmra.mxu0 %v4154
      %v4234 = vpop.f32.mrf.mxu0
      %v4235 = vadd.f32 0.0, %v4234
      %v4236 = vpop.f32.mrf.mxu0
      %v4237 = vadd.f32 0.0, %v4236
      %4238 = vmatmul.bf16.gmra.mxu0 %v4157
      %v4239 = vpop.f32.mrf.mxu0
      %v4240 = vadd.f32 0.0, %v4239
      %v4241 = vpop.f32.mrf.mxu0
      %v4242 = vadd.f32 0.0, %v4241
      %4243 = vmatmul.bf16.gmra.mxu0 %v4160
      %v4244 = vpop.f32.mrf.mxu0
      %v4245 = vadd.f32 0.0, %v4244
      %v4246 = vpop.f32.mrf.mxu0
      %v4247 = vadd.f32 0.0, %v4246
      %4248 = vmatmul.bf16.gmra.mxu0 %v4163
      %v4249 = vpop.f32.mrf.mxu0
      %v4250 = vadd.f32 0.0, %v4249
      %v4251 = vpop.f32.mrf.mxu0
      %v4252 = vadd.f32 0.0, %v4251
      %4253 = vdwg.mxu0
      %v4254 = vadd.f32 %v3910, %v4175
      %v4255 = vadd.f32 %v3912, %v4177
      %v4256 = vadd.f32 %v3915, %v4180
      %v4257 = vadd.f32 %v3917, %v4182
      %v4258 = vadd.f32 %v3920, %v4185
      %v4259 = vadd.f32 %v3922, %v4187
      %v4260 = vadd.f32 %v3925, %v4190
      %v4261 = vadd.f32 %v3927, %v4192
      %v4262 = vadd.f32 %v3930, %v4195
      %v4263 = vadd.f32 %v3932, %v4197
      %v4264 = vadd.f32 %v3935, %v4200
      %v4265 = vadd.f32 %v3937, %v4202
      %v4266 = vadd.f32 %v3940, %v4205
      %v4267 = vadd.f32 %v3942, %v4207
      %v4268 = vadd.f32 %v3945, %v4210
      %v4269 = vadd.f32 %v3947, %v4212
      %v4270 = vadd.f32 %v3950, %v4215
      %v4271 = vadd.f32 %v3952, %v4217
      %v4272 = vadd.f32 %v3955, %v4220
      %v4273 = vadd.f32 %v3957, %v4222
      %v4274 = vadd.f32 %v3960, %v4225
      %v4275 = vadd.f32 %v3962, %v4227
      %v4276 = vadd.f32 %v3965, %v4230
      %v4277 = vadd.f32 %v3967, %v4232
      %v4278 = vadd.f32 %v3970, %v4235
      %v4279 = vadd.f32 %v3972, %v4237
      %v4280 = vadd.f32 %v3975, %v4240
      %v4281 = vadd.f32 %v3977, %v4242
      %v4282 = vadd.f32 %v3980, %v4245
      %v4283 = vadd.f32 %v3982, %v4247
      %v4284 = vadd.f32 %v3985, %v4250
      %v4285 = vadd.f32 %v3987, %v4252
      %4286 = vst.msk [vmem:[%s609] sm:$0xff] %vm803, %v4254
      %4287 = vst.msk [vmem:[%s609 + $0x8] sm:$0xff] %vm803, %v4255
      %4288 = vst.msk [vmem:[%s609 + $0x10] sm:$0xff] %vm803, %v4256
      %4289 = vst.msk [vmem:[%s609 + $0x18] sm:$0xff] %vm803, %v4257
      %4290 = vst.msk [vmem:[%s609 + $0x20] sm:$0xff] %vm803, %v4258
      %4291 = vst.msk [vmem:[%s609 + $0x28] sm:$0xff] %vm803, %v4259
      %4292 = vst.msk [vmem:[%s609 + $0x30] sm:$0xff] %vm803, %v4260
      %4293 = vst.msk [vmem:[%s609 + $0x38] sm:$0xff] %vm803, %v4261
      %4294 = vst.msk [vmem:[%s609 + $0x40] sm:$0xff] %vm803, %v4262
      %4295 = vst.msk [vmem:[%s609 + $0x48] sm:$0xff] %vm803, %v4263
      %4296 = vst.msk [vmem:[%s609 + $0x50] sm:$0xff] %vm803, %v4264
      %4297 = vst.msk [vmem:[%s609 + $0x58] sm:$0xff] %vm803, %v4265
      %4298 = vst.msk [vmem:[%s609 + $0x60] sm:$0xff] %vm803, %v4266
      %4299 = vst.msk [vmem:[%s609 + $0x68] sm:$0xff] %vm803, %v4267
      %4300 = vst.msk [vmem:[%s609 + $0x70] sm:$0xff] %vm803, %v4268
      %4301 = vst.msk [vmem:[%s609 + $0x78] sm:$0xff] %vm803, %v4269
      %4302 = vst.msk [vmem:[%s609 + $0x80] sm:$0xff] %vm803, %v4270
      %4303 = vst.msk [vmem:[%s609 + $0x88] sm:$0xff] %vm803, %v4271
      %4304 = vst.msk [vmem:[%s609 + $0x90] sm:$0xff] %vm803, %v4272
      %4305 = vst.msk [vmem:[%s609 + $0x98] sm:$0xff] %vm803, %v4273
      %4306 = vst.msk [vmem:[%s609 + $0xa0] sm:$0xff] %vm803, %v4274
      %4307 = vst.msk [vmem:[%s609 + $0xa8] sm:$0xff] %vm803, %v4275
      %4308 = vst.msk [vmem:[%s609 + $0xb0] sm:$0xff] %vm803, %v4276
      %4309 = vst.msk [vmem:[%s609 + $0xb8] sm:$0xff] %vm803, %v4277
      %4310 = vst.msk [vmem:[%s609 + $0xc0] sm:$0xff] %vm803, %v4278
      %4311 = vst.msk [vmem:[%s609 + $0xc8] sm:$0xff] %vm803, %v4279
      %4312 = vst.msk [vmem:[%s609 + $0xd0] sm:$0xff] %vm803, %v4280
      %4313 = vst.msk [vmem:[%s609 + $0xd8] sm:$0xff] %vm803, %v4281
      %4314 = vst.msk [vmem:[%s609 + $0xe0] sm:$0xff] %vm803, %v4282
      %4315 = vst.msk [vmem:[%s609 + $0xe8] sm:$0xff] %vm803, %v4283
      %4316 = vst.msk [vmem:[%s609 + $0xf0] sm:$0xff] %vm803, %v4284
      %4317 = vst.msk [vmem:[%s609 + $0xf8] sm:$0xff] %vm803, %v4285
      %p4318 = scmp.lt.s32.totalorder %s29, 1
      %s4319 = scalar_select %p4318, %s29, 1
      %s4320 = smul.addr %s4319, 32
      %s4321 = smul.addr %s4320, 8
      %s4322 = scalar_lea.vmem %s18, %s4321
      // Predicated region
      $region93: #{gcb_forward.1} parent=91 // pred_check
        %p4323 = pneg %p440
      $region94: #{gcb_forward.1} parent=91 // pred_check_branch
        %4325 = sbr.rel (%p4323) target = $region96
      $region95: #{gcb_forward.1} parent=91 // pred_region
        _
      $region96: #{gcb_forward.1} parent=91 // pred_fallthru
        _
    $region92: #{gcb_forward.1} parent=5 // pred_fallthru
      _
    %p4326 = scmp.le.s32.totalorder 2, %s24
    // Predicated region
    $region97: #{gcb_forward.1} parent=5 // pred_check
      %p4327 = pneg %p4326
    $region98: #{gcb_forward.1} parent=5 // pred_check_branch
      %4329 = sbr.rel (%p4327) target = $region100
    $region99: #{gcb_forward.1} parent=5 // pred_region
      %s4330 = ssub.s32 %s24, 2
      // Predicated region
      $region101: #{gcb_forward.1} parent=99 // pred_check
        %p4331 = pneg %p446
      $region102: #{gcb_forward.1} parent=99 // pred_check_branch
        %4333 = sbr.rel (%p4331) target = $region104
      $region103: #{gcb_forward.1} parent=99 // pred_region
        %p4334 = scmp.lt.s32.totalorder %s30, 1
        %s4335 = scalar_select %p4334, %s30, 1
        %s4336 = smul.addr %s4335, 32
        %s4337 = smul.addr %s4336, 8
        %s4338 = scalar_lea.vmem %s18, %s4337
      $region104: #{gcb_forward.1} parent=99 // pred_fallthru
        _
    $region100: #{gcb_forward.1} parent=5 // pred_fallthru
      _
  $region6: #{gcb_forward.1} parent=0 // loop_footer
    %s28 = sadd.s32 1, %s24
  $region7: #{gcb_forward.1} parent=0 // loop_footer_branch
    %23 = sbr.rel target = $region3
  $region8: #{gcb_forward.1} parent=0 // loop_exit
    _

</llo_original>
